<compile_context>
chip_gen: v7x
topology: tpu7x:2x2x1
jax: 0.10.0
libtpu: 0.0.40
codegen_flags: <defaults>
</compile_context>

<pallas_src>
import functools

import jax
import jax.numpy as jnp
from jax.experimental import pallas as pl
from jax.experimental.pallas import tpu as pltpu

KH = KW = 5
STRIDE = 2
PAD = 2
C_IN = 96
C_OUT = 56
EPS = 1e-5


def _fused_kernel(xs_ref, dw_ref, bias_ref, pw_ref, out_ref, *, nt, wp2, acc_rows):
    """One grid step processes `nt` images.

    xs_ref   : (4, nt, FLAT, 96)   parity-split, spatially-flattened padded input
    dw_ref   : (25, 96)            depthwise weights with BN scale folded in
    bias_ref : (1, 96)             folded BN bias
    pw_ref   : (96, 56)            1x1 conv weights (bf16)
    out_ref  : (nt*acc_rows, 56)   output in the padded-W frame (cropped by wrapper)
    """
    dw = dw_ref[...]          # (25, 96) f32
    bias = bias_ref[0]        # (96,)

    acc = jnp.zeros((nt, acc_rows, C_IN), jnp.float32)
    # Depthwise 5x5 stride-2 conv: tap (kh, kw) reads parity plane
    # p = (kh%2, kw%2), shifted by s = (kh//2)*Wp2 + (kw//2) rows along the
    # flattened spatial (sublane) axis -> one contiguous slice per tap.
    for kh in range(KH):
        for kw in range(KW):
            p = (kh % 2) * 2 + (kw % 2)
            s = (kh // 2) * wp2 + (kw // 2)
            win = xs_ref[p, :, s:s + acc_rows, :]              # (nt, acc_rows, 96)
            acc = acc + win * dw[kh * KW + kw][None, None, :]

    # Folded BN bias + ReLU (scale already folded into dw).
    y = jnp.maximum(acc + bias[None, None, :], 0.0)

    # 1x1 conv == one bf16 MXU matmul over all nt*acc_rows rows (f32 accumulate).
    y_bf = y.reshape(nt * acc_rows, C_IN).astype(jnp.bfloat16)
    out_ref[...] = jnp.dot(y_bf, pw_ref[...], preferred_element_type=jnp.float32)


def _pick_nt(n, acc_rows):
    """Largest divisor of n whose f32 accumulator stays under ~128 KiB."""
    budget_rows = max(acc_rows, (128 * 1024) // (C_IN * 4))
    nt = 1
    for cand in range(1, n + 1):
        if n % cand == 0 and cand * acc_rows <= budget_rows:
            nt = cand
    return nt


@jax.jit
def fused_forward(x_nchw, dw_w, gamma, beta, running_mean, running_var, pw_w):
    """x_nchw: (N, 96, H, W) float32 -> (N, 56, Ho, Wo) float32."""
    N, C, H, W = x_nchw.shape
    assert C == C_IN
    # Even H/W required by the stride-2 parity split (holds for the module's 56x56 input).
    assert H % 2 == 0 and W % 2 == 0, "even spatial dims required"

    Ho = (H + 2 * PAD - KH) // STRIDE + 1
    Wo = (W + 2 * PAD - KW) // STRIDE + 1
    Wp2 = (W + 2 * PAD) // 2
    Hp2 = (H + 2 * PAD) // 2 + 1          # one extra zero row-pair so every tap slice is in-bounds
    FLAT = Hp2 * Wp2
    ACC_ROWS = Ho * Wp2                   # accumulator rows (padded-W frame)

    nt = _pick_nt(N, ACC_ROWS)
    grid = N // nt

    # ---- layout plumbing (one XLA relayout pass; NCHW->NHWC is needed anyway) ----
    x_nhwc = jnp.transpose(x_nchw, (0, 2, 3, 1))
    xp = jnp.pad(x_nhwc, ((0, 0), (PAD, PAD + 2), (PAD, PAD), (0, 0)))
    xs = xp.reshape(N, Hp2, 2, Wp2, 2, C_IN)
    xs = jnp.transpose(xs, (2, 4, 0, 1, 3, 5)).reshape(4, N, FLAT, C_IN)

    # ---- fold BN (running stats, inference mode) into depthwise weights + bias ----
    inv_std = 1.0 / jnp.sqrt(running_var + EPS)
    scale = (gamma * inv_std).astype(jnp.float32)                               # (96,)
    bias = (beta - running_mean * gamma * inv_std).reshape(1, C_IN).astype(jnp.float32)
    dw = jnp.transpose(dw_w[:, 0, :, :], (1, 2, 0))                              # (5,5,96)
    dw = (dw * scale[None, None, :]).reshape(KH * KW, C_IN).astype(jnp.float32)  # (25,96)

    # Pointwise weight: torch (56, 96, 1, 1) -> (96, 56), bf16 for the MXU.
    pw = jnp.transpose(pw_w[:, :, 0, 0], (1, 0)).astype(jnp.bfloat16)

    kernel = functools.partial(_fused_kernel, nt=nt, wp2=Wp2, acc_rows=ACC_ROWS)

    out_flat = pl.pallas_call(
        kernel,
        out_shape=jax.ShapeDtypeStruct((N * ACC_ROWS, C_OUT), jnp.float32),
        grid_spec=pltpu.PrefetchScalarGridSpec(
            num_scalar_prefetch=0,
            grid=(grid,),
            in_specs=[
                pl.BlockSpec((4, nt, FLAT, C_IN), lambda n: (0, n, 0, 0)),
                pl.BlockSpec((KH * KW, C_IN), lambda n: (0, 0)),
                pl.BlockSpec((1, C_IN), lambda n: (0, 0)),
                pl.BlockSpec((C_IN, C_OUT), lambda n: (0, 0)),
            ],
            out_specs=pl.BlockSpec((nt * ACC_ROWS, C_OUT), lambda n: (n, 0)),
        ),
        compiler_params=pltpu.CompilerParams(
            dimension_semantics=("parallel",),
            vmem_limit_bytes=32 * 1024 * 1024,
        ),
    )(xs, dw, bias, pw)

    # Padded-W frame -> crop to Wo and go back to NCHW (single wrapper pass).
    out = out_flat.reshape(N, Ho, Wp2, C_OUT)[:, :, :Wo, :]
    return jnp.transpose(out, (0, 3, 1, 2))


def _reference(x_nchw, dw_w, gamma, beta, running_mean, running_var, pw_w):
    """Pure-JAX reference (lax conv) matching PyTorch inference semantics."""
    y = jax.lax.conv_general_dilated(
        x_nchw, dw_w, window_strides=(STRIDE, STRIDE),
        padding=((PAD, PAD), (PAD, PAD)),
        dimension_numbers=("NCHW", "OIHW", "NCHW"),
        feature_group_count=C_IN)
    inv_std = 1.0 / jnp.sqrt(running_var + EPS)
    y = (y - running_mean[None, :, None, None]) * (gamma * inv_std)[None, :, None, None] \
        + beta[None, :, None, None]
    y = jnp.maximum(y, 0.0)
    y = jax.lax.conv_general_dilated(
        y, pw_w, window_strides=(1, 1), padding=((0, 0), (0, 0)),
        dimension_numbers=("NCHW", "OIHW", "NCHW"))
    return y


if __name__ == "__main__":
    key = jax.random.PRNGKey(0)
    k_x, k_dw, k_pw, k_g, k_b, k_m, k_v = jax.random.split(key, 7)

    # Small spatial size; channel counts fixed by the module's weights.
    N, H, W = 8, 16, 16
    x = jax.random.normal(k_x, (N, C_IN, H, W), jnp.float32)

    # Deterministic synthetic parameters (shapes from the module __init__).
    dw_w = 0.1 * jax.random.normal(k_dw, (C_IN, 1, KH, KW), jnp.float32)    # conv2d13
    pw_w = 0.1 * jax.random.normal(k_pw, (C_OUT, C_IN, 1, 1), jnp.float32)  # conv2d14
    gamma = jax.random.uniform(k_g, (C_IN,), jnp.float32, 0.5, 1.5)         # bn weight
    beta = 0.1 * jax.random.normal(k_b, (C_IN,), jnp.float32)               # bn bias
    running_mean = 0.1 * jax.random.normal(k_m, (C_IN,), jnp.float32)
    running_var = jax.random.uniform(k_v, (C_IN,), jnp.float32, 0.5, 1.5)

    out = jax.block_until_ready(
        fused_forward(x, dw_w, gamma, beta, running_mean, running_var, pw_w))
    ref = jax.block_until_ready(
        _reference(x, dw_w, gamma, beta, running_mean, running_var, pw_w))

    Ho = (H + 2 * PAD - KH) // STRIDE + 1
    Wo = (W + 2 * PAD - KW) // STRIDE + 1
    assert out.shape == (N, C_OUT, Ho, Wo), out.shape
    max_diff = jnp.max(jnp.abs(out - ref))
    assert jnp.allclose(out, ref, atol=5e-2, rtol=5e-2), f"max abs diff {max_diff}"

    print("KERNEL_OK")
</pallas_src>

<mosaic_0001>
module attributes {stable_mosaic.version = 11 : i64} {
  func.func @_fused_kernel(%arg0: i32, %arg1: memref<4x4x110x96xf32, #tpu.memory_space<vmem>>, %arg2: memref<25x96xf32, #tpu.memory_space<vmem>>, %arg3: memref<1x96xf32, #tpu.memory_space<vmem>>, %arg4: memref<96x56xbf16, #tpu.memory_space<vmem>>, %arg5: memref<320x56xf32, #tpu.memory_space<vmem>>) attributes {dimension_semantics = [#tpu.dimension_semantics<parallel>], iteration_bounds = array<i64: 2>, scalar_prefetch = 0 : i64, scratch_operands = 0 : i64, tpu.core_type = #tpu.core_type<tc>, window_params = [{transform_indices = @transform_0, window_bounds = array<i64: 4, 4, 110, 96>}, {pipeline_mode = #tpu.pipeline_mode<synchronous>, transform_indices = @transform_1, window_bounds = array<i64: 25, 96>}, {pipeline_mode = #tpu.pipeline_mode<synchronous>, transform_indices = @transform_2, window_bounds = array<i64: 1, 96>}, {pipeline_mode = #tpu.pipeline_mode<synchronous>, transform_indices = @transform_3, window_bounds = array<i64: 96, 56>}, {transform_indices = @transform_4, window_bounds = array<i64: 320, 56>}]} {
    %c0 = arith.constant 0 : index
    %c0_0 = arith.constant 0 : index
    %0 = vector.load %arg2[%c0, %c0_0] : memref<25x96xf32, #tpu.memory_space<vmem>>, vector<25x96xf32>
    %c0_1 = arith.constant 0 : index
    %c0_2 = arith.constant 0 : index
    %1 = vector.load %arg3[%c0_1, %c0_2] : memref<1x96xf32, #tpu.memory_space<vmem>>, vector<1x96xf32>
    %2 = vector.shape_cast %1 : vector<1x96xf32> to vector<96xf32>
    %cst = arith.constant 0.000000e+00 : f32
    %3 = vector.broadcast %cst : f32 to vector<4x80x96xf32>
    %c0_3 = arith.constant 0 : index
    %c0_4 = arith.constant 0 : index
    %c0_5 = arith.constant 0 : index
    %c0_6 = arith.constant 0 : index
    %4 = vector.load %arg1[%c0_3, %c0_4, %c0_5, %c0_6] : memref<4x4x110x96xf32, #tpu.memory_space<vmem>>, vector<1x4x80x96xf32>
    %5 = vector.shape_cast %4 : vector<1x4x80x96xf32> to vector<4x80x96xf32>
    %6 = vector.extract_strided_slice %0 {offsets = [0, 0], sizes = [1, 96], strides = [1, 1]} : vector<25x96xf32> to vector<1x96xf32>
    %7 = vector.shape_cast %6 : vector<1x96xf32> to vector<96xf32>
    %8 = vector.shape_cast %7 : vector<96xf32> to vector<1x1x96xf32>
    %9 = vector.broadcast %8 : vector<1x1x96xf32> to vector<4x80x96xf32>
    %10 = arith.mulf %5, %9 : vector<4x80x96xf32>
    %11 = arith.addf %3, %10 : vector<4x80x96xf32>
    %c1 = arith.constant 1 : index
    %c0_7 = arith.constant 0 : index
    %c0_8 = arith.constant 0 : index
    %c0_9 = arith.constant 0 : index
    %12 = vector.load %arg1[%c1, %c0_7, %c0_8, %c0_9] : memref<4x4x110x96xf32, #tpu.memory_space<vmem>>, vector<1x4x80x96xf32>
    %13 = vector.shape_cast %12 : vector<1x4x80x96xf32> to vector<4x80x96xf32>
    %14 = vector.extract_strided_slice %0 {offsets = [1, 0], sizes = [1, 96], strides = [1, 1]} : vector<25x96xf32> to vector<1x96xf32>
    %15 = vector.shape_cast %14 : vector<1x96xf32> to vector<96xf32>
    %16 = vector.shape_cast %15 : vector<96xf32> to vector<1x1x96xf32>
    %17 = vector.broadcast %16 : vector<1x1x96xf32> to vector<4x80x96xf32>
    %18 = arith.mulf %13, %17 : vector<4x80x96xf32>
    %19 = arith.addf %11, %18 : vector<4x80x96xf32>
    %c0_10 = arith.constant 0 : index
    %c0_11 = arith.constant 0 : index
    %c1_12 = arith.constant 1 : index
    %c0_13 = arith.constant 0 : index
    %20 = vector.load %arg1[%c0_10, %c0_11, %c1_12, %c0_13] : memref<4x4x110x96xf32, #tpu.memory_space<vmem>>, vector<1x4x80x96xf32>
    %21 = vector.shape_cast %20 : vector<1x4x80x96xf32> to vector<4x80x96xf32>
    %22 = vector.extract_strided_slice %0 {offsets = [2, 0], sizes = [1, 96], strides = [1, 1]} : vector<25x96xf32> to vector<1x96xf32>
    %23 = vector.shape_cast %22 : vector<1x96xf32> to vector<96xf32>
    %24 = vector.shape_cast %23 : vector<96xf32> to vector<1x1x96xf32>
    %25 = vector.broadcast %24 : vector<1x1x96xf32> to vector<4x80x96xf32>
    %26 = arith.mulf %21, %25 : vector<4x80x96xf32>
    %27 = arith.addf %19, %26 : vector<4x80x96xf32>
    %c1_14 = arith.constant 1 : index
    %c0_15 = arith.constant 0 : index
    %c1_16 = arith.constant 1 : index
    %c0_17 = arith.constant 0 : index
    %28 = vector.load %arg1[%c1_14, %c0_15, %c1_16, %c0_17] : memref<4x4x110x96xf32, #tpu.memory_space<vmem>>, vector<1x4x80x96xf32>
    %29 = vector.shape_cast %28 : vector<1x4x80x96xf32> to vector<4x80x96xf32>
    %30 = vector.extract_strided_slice %0 {offsets = [3, 0], sizes = [1, 96], strides = [1, 1]} : vector<25x96xf32> to vector<1x96xf32>
    %31 = vector.shape_cast %30 : vector<1x96xf32> to vector<96xf32>
    %32 = vector.shape_cast %31 : vector<96xf32> to vector<1x1x96xf32>
    %33 = vector.broadcast %32 : vector<1x1x96xf32> to vector<4x80x96xf32>
    %34 = arith.mulf %29, %33 : vector<4x80x96xf32>
    %35 = arith.addf %27, %34 : vector<4x80x96xf32>
    %c0_18 = arith.constant 0 : index
    %c0_19 = arith.constant 0 : index
    %c2 = arith.constant 2 : index
    %c0_20 = arith.constant 0 : index
    %36 = vector.load %arg1[%c0_18, %c0_19, %c2, %c0_20] : memref<4x4x110x96xf32, #tpu.memory_space<vmem>>, vector<1x4x80x96xf32>
    %37 = vector.shape_cast %36 : vector<1x4x80x96xf32> to vector<4x80x96xf32>
    %38 = vector.extract_strided_slice %0 {offsets = [4, 0], sizes = [1, 96], strides = [1, 1]} : vector<25x96xf32> to vector<1x96xf32>
    %39 = vector.shape_cast %38 : vector<1x96xf32> to vector<96xf32>
    %40 = vector.shape_cast %39 : vector<96xf32> to vector<1x1x96xf32>
    %41 = vector.broadcast %40 : vector<1x1x96xf32> to vector<4x80x96xf32>
    %42 = arith.mulf %37, %41 : vector<4x80x96xf32>
    %43 = arith.addf %35, %42 : vector<4x80x96xf32>
    %c2_21 = arith.constant 2 : index
    %c0_22 = arith.constant 0 : index
    %c0_23 = arith.constant 0 : index
    %c0_24 = arith.constant 0 : index
    %44 = vector.load %arg1[%c2_21, %c0_22, %c0_23, %c0_24] : memref<4x4x110x96xf32, #tpu.memory_space<vmem>>, vector<1x4x80x96xf32>
    %45 = vector.shape_cast %44 : vector<1x4x80x96xf32> to vector<4x80x96xf32>
    %46 = vector.extract_strided_slice %0 {offsets = [5, 0], sizes = [1, 96], strides = [1, 1]} : vector<25x96xf32> to vector<1x96xf32>
    %47 = vector.shape_cast %46 : vector<1x96xf32> to vector<96xf32>
    %48 = vector.shape_cast %47 : vector<96xf32> to vector<1x1x96xf32>
    %49 = vector.broadcast %48 : vector<1x1x96xf32> to vector<4x80x96xf32>
    %50 = arith.mulf %45, %49 : vector<4x80x96xf32>
    %51 = arith.addf %43, %50 : vector<4x80x96xf32>
    %c3 = arith.constant 3 : index
    %c0_25 = arith.constant 0 : index
    %c0_26 = arith.constant 0 : index
    %c0_27 = arith.constant 0 : index
    %52 = vector.load %arg1[%c3, %c0_25, %c0_26, %c0_27] : memref<4x4x110x96xf32, #tpu.memory_space<vmem>>, vector<1x4x80x96xf32>
    %53 = vector.shape_cast %52 : vector<1x4x80x96xf32> to vector<4x80x96xf32>
    %54 = vector.extract_strided_slice %0 {offsets = [6, 0], sizes = [1, 96], strides = [1, 1]} : vector<25x96xf32> to vector<1x96xf32>
    %55 = vector.shape_cast %54 : vector<1x96xf32> to vector<96xf32>
    %56 = vector.shape_cast %55 : vector<96xf32> to vector<1x1x96xf32>
    %57 = vector.broadcast %56 : vector<1x1x96xf32> to vector<4x80x96xf32>
    %58 = arith.mulf %53, %57 : vector<4x80x96xf32>
    %59 = arith.addf %51, %58 : vector<4x80x96xf32>
    %c2_28 = arith.constant 2 : index
    %c0_29 = arith.constant 0 : index
    %c1_30 = arith.constant 1 : index
    %c0_31 = arith.constant 0 : index
    %60 = vector.load %arg1[%c2_28, %c0_29, %c1_30, %c0_31] : memref<4x4x110x96xf32, #tpu.memory_space<vmem>>, vector<1x4x80x96xf32>
    %61 = vector.shape_cast %60 : vector<1x4x80x96xf32> to vector<4x80x96xf32>
    %62 = vector.extract_strided_slice %0 {offsets = [7, 0], sizes = [1, 96], strides = [1, 1]} : vector<25x96xf32> to vector<1x96xf32>
    %63 = vector.shape_cast %62 : vector<1x96xf32> to vector<96xf32>
    %64 = vector.shape_cast %63 : vector<96xf32> to vector<1x1x96xf32>
    %65 = vector.broadcast %64 : vector<1x1x96xf32> to vector<4x80x96xf32>
    %66 = arith.mulf %61, %65 : vector<4x80x96xf32>
    %67 = arith.addf %59, %66 : vector<4x80x96xf32>
    %c3_32 = arith.constant 3 : index
    %c0_33 = arith.constant 0 : index
    %c1_34 = arith.constant 1 : index
    %c0_35 = arith.constant 0 : index
    %68 = vector.load %arg1[%c3_32, %c0_33, %c1_34, %c0_35] : memref<4x4x110x96xf32, #tpu.memory_space<vmem>>, vector<1x4x80x96xf32>
    %69 = vector.shape_cast %68 : vector<1x4x80x96xf32> to vector<4x80x96xf32>
    %70 = vector.extract_strided_slice %0 {offsets = [8, 0], sizes = [1, 96], strides = [1, 1]} : vector<25x96xf32> to vector<1x96xf32>
    %71 = vector.shape_cast %70 : vector<1x96xf32> to vector<96xf32>
    %72 = vector.shape_cast %71 : vector<96xf32> to vector<1x1x96xf32>
    %73 = vector.broadcast %72 : vector<1x1x96xf32> to vector<4x80x96xf32>
    %74 = arith.mulf %69, %73 : vector<4x80x96xf32>
    %75 = arith.addf %67, %74 : vector<4x80x96xf32>
    %c2_36 = arith.constant 2 : index
    %c0_37 = arith.constant 0 : index
    %c2_38 = arith.constant 2 : index
    %c0_39 = arith.constant 0 : index
    %76 = vector.load %arg1[%c2_36, %c0_37, %c2_38, %c0_39] : memref<4x4x110x96xf32, #tpu.memory_space<vmem>>, vector<1x4x80x96xf32>
    %77 = vector.shape_cast %76 : vector<1x4x80x96xf32> to vector<4x80x96xf32>
    %78 = vector.extract_strided_slice %0 {offsets = [9, 0], sizes = [1, 96], strides = [1, 1]} : vector<25x96xf32> to vector<1x96xf32>
    %79 = vector.shape_cast %78 : vector<1x96xf32> to vector<96xf32>
    %80 = vector.shape_cast %79 : vector<96xf32> to vector<1x1x96xf32>
    %81 = vector.broadcast %80 : vector<1x1x96xf32> to vector<4x80x96xf32>
    %82 = arith.mulf %77, %81 : vector<4x80x96xf32>
    %83 = arith.addf %75, %82 : vector<4x80x96xf32>
    %c0_40 = arith.constant 0 : index
    %c0_41 = arith.constant 0 : index
    %c10 = arith.constant 10 : index
    %c0_42 = arith.constant 0 : index
    %84 = vector.load %arg1[%c0_40, %c0_41, %c10, %c0_42] : memref<4x4x110x96xf32, #tpu.memory_space<vmem>>, vector<1x4x80x96xf32>
    %85 = vector.shape_cast %84 : vector<1x4x80x96xf32> to vector<4x80x96xf32>
    %86 = vector.extract_strided_slice %0 {offsets = [10, 0], sizes = [1, 96], strides = [1, 1]} : vector<25x96xf32> to vector<1x96xf32>
    %87 = vector.shape_cast %86 : vector<1x96xf32> to vector<96xf32>
    %88 = vector.shape_cast %87 : vector<96xf32> to vector<1x1x96xf32>
    %89 = vector.broadcast %88 : vector<1x1x96xf32> to vector<4x80x96xf32>
    %90 = arith.mulf %85, %89 : vector<4x80x96xf32>
    %91 = arith.addf %83, %90 : vector<4x80x96xf32>
    %c1_43 = arith.constant 1 : index
    %c0_44 = arith.constant 0 : index
    %c10_45 = arith.constant 10 : index
    %c0_46 = arith.constant 0 : index
    %92 = vector.load %arg1[%c1_43, %c0_44, %c10_45, %c0_46] : memref<4x4x110x96xf32, #tpu.memory_space<vmem>>, vector<1x4x80x96xf32>
    %93 = vector.shape_cast %92 : vector<1x4x80x96xf32> to vector<4x80x96xf32>
    %94 = vector.extract_strided_slice %0 {offsets = [11, 0], sizes = [1, 96], strides = [1, 1]} : vector<25x96xf32> to vector<1x96xf32>
    %95 = vector.shape_cast %94 : vector<1x96xf32> to vector<96xf32>
    %96 = vector.shape_cast %95 : vector<96xf32> to vector<1x1x96xf32>
    %97 = vector.broadcast %96 : vector<1x1x96xf32> to vector<4x80x96xf32>
    %98 = arith.mulf %93, %97 : vector<4x80x96xf32>
    %99 = arith.addf %91, %98 : vector<4x80x96xf32>
    %c0_47 = arith.constant 0 : index
    %c0_48 = arith.constant 0 : index
    %c11 = arith.constant 11 : index
    %c0_49 = arith.constant 0 : index
    %100 = vector.load %arg1[%c0_47, %c0_48, %c11, %c0_49] : memref<4x4x110x96xf32, #tpu.memory_space<vmem>>, vector<1x4x80x96xf32>
    %101 = vector.shape_cast %100 : vector<1x4x80x96xf32> to vector<4x80x96xf32>
    %102 = vector.extract_strided_slice %0 {offsets = [12, 0], sizes = [1, 96], strides = [1, 1]} : vector<25x96xf32> to vector<1x96xf32>
    %103 = vector.shape_cast %102 : vector<1x96xf32> to vector<96xf32>
    %104 = vector.shape_cast %103 : vector<96xf32> to vector<1x1x96xf32>
    %105 = vector.broadcast %104 : vector<1x1x96xf32> to vector<4x80x96xf32>
    %106 = arith.mulf %101, %105 : vector<4x80x96xf32>
    %107 = arith.addf %99, %106 : vector<4x80x96xf32>
    %c1_50 = arith.constant 1 : index
    %c0_51 = arith.constant 0 : index
    %c11_52 = arith.constant 11 : index
    %c0_53 = arith.constant 0 : index
    %108 = vector.load %arg1[%c1_50, %c0_51, %c11_52, %c0_53] : memref<4x4x110x96xf32, #tpu.memory_space<vmem>>, vector<1x4x80x96xf32>
    %109 = vector.shape_cast %108 : vector<1x4x80x96xf32> to vector<4x80x96xf32>
    %110 = vector.extract_strided_slice %0 {offsets = [13, 0], sizes = [1, 96], strides = [1, 1]} : vector<25x96xf32> to vector<1x96xf32>
    %111 = vector.shape_cast %110 : vector<1x96xf32> to vector<96xf32>
    %112 = vector.shape_cast %111 : vector<96xf32> to vector<1x1x96xf32>
    %113 = vector.broadcast %112 : vector<1x1x96xf32> to vector<4x80x96xf32>
    %114 = arith.mulf %109, %113 : vector<4x80x96xf32>
    %115 = arith.addf %107, %114 : vector<4x80x96xf32>
    %c0_54 = arith.constant 0 : index
    %c0_55 = arith.constant 0 : index
    %c12 = arith.constant 12 : index
    %c0_56 = arith.constant 0 : index
    %116 = vector.load %arg1[%c0_54, %c0_55, %c12, %c0_56] : memref<4x4x110x96xf32, #tpu.memory_space<vmem>>, vector<1x4x80x96xf32>
    %117 = vector.shape_cast %116 : vector<1x4x80x96xf32> to vector<4x80x96xf32>
    %118 = vector.extract_strided_slice %0 {offsets = [14, 0], sizes = [1, 96], strides = [1, 1]} : vector<25x96xf32> to vector<1x96xf32>
    %119 = vector.shape_cast %118 : vector<1x96xf32> to vector<96xf32>
    %120 = vector.shape_cast %119 : vector<96xf32> to vector<1x1x96xf32>
    %121 = vector.broadcast %120 : vector<1x1x96xf32> to vector<4x80x96xf32>
    %122 = arith.mulf %117, %121 : vector<4x80x96xf32>
    %123 = arith.addf %115, %122 : vector<4x80x96xf32>
    %c2_57 = arith.constant 2 : index
    %c0_58 = arith.constant 0 : index
    %c10_59 = arith.constant 10 : index
    %c0_60 = arith.constant 0 : index
    %124 = vector.load %arg1[%c2_57, %c0_58, %c10_59, %c0_60] : memref<4x4x110x96xf32, #tpu.memory_space<vmem>>, vector<1x4x80x96xf32>
    %125 = vector.shape_cast %124 : vector<1x4x80x96xf32> to vector<4x80x96xf32>
    %126 = vector.extract_strided_slice %0 {offsets = [15, 0], sizes = [1, 96], strides = [1, 1]} : vector<25x96xf32> to vector<1x96xf32>
    %127 = vector.shape_cast %126 : vector<1x96xf32> to vector<96xf32>
    %128 = vector.shape_cast %127 : vector<96xf32> to vector<1x1x96xf32>
    %129 = vector.broadcast %128 : vector<1x1x96xf32> to vector<4x80x96xf32>
    %130 = arith.mulf %125, %129 : vector<4x80x96xf32>
    %131 = arith.addf %123, %130 : vector<4x80x96xf32>
    %c3_61 = arith.constant 3 : index
    %c0_62 = arith.constant 0 : index
    %c10_63 = arith.constant 10 : index
    %c0_64 = arith.constant 0 : index
    %132 = vector.load %arg1[%c3_61, %c0_62, %c10_63, %c0_64] : memref<4x4x110x96xf32, #tpu.memory_space<vmem>>, vector<1x4x80x96xf32>
    %133 = vector.shape_cast %132 : vector<1x4x80x96xf32> to vector<4x80x96xf32>
    %134 = vector.extract_strided_slice %0 {offsets = [16, 0], sizes = [1, 96], strides = [1, 1]} : vector<25x96xf32> to vector<1x96xf32>
    %135 = vector.shape_cast %134 : vector<1x96xf32> to vector<96xf32>
    %136 = vector.shape_cast %135 : vector<96xf32> to vector<1x1x96xf32>
    %137 = vector.broadcast %136 : vector<1x1x96xf32> to vector<4x80x96xf32>
    %138 = arith.mulf %133, %137 : vector<4x80x96xf32>
    %139 = arith.addf %131, %138 : vector<4x80x96xf32>
    %c2_65 = arith.constant 2 : index
    %c0_66 = arith.constant 0 : index
    %c11_67 = arith.constant 11 : index
    %c0_68 = arith.constant 0 : index
    %140 = vector.load %arg1[%c2_65, %c0_66, %c11_67, %c0_68] : memref<4x4x110x96xf32, #tpu.memory_space<vmem>>, vector<1x4x80x96xf32>
    %141 = vector.shape_cast %140 : vector<1x4x80x96xf32> to vector<4x80x96xf32>
    %142 = vector.extract_strided_slice %0 {offsets = [17, 0], sizes = [1, 96], strides = [1, 1]} : vector<25x96xf32> to vector<1x96xf32>
    %143 = vector.shape_cast %142 : vector<1x96xf32> to vector<96xf32>
    %144 = vector.shape_cast %143 : vector<96xf32> to vector<1x1x96xf32>
    %145 = vector.broadcast %144 : vector<1x1x96xf32> to vector<4x80x96xf32>
    %146 = arith.mulf %141, %145 : vector<4x80x96xf32>
    %147 = arith.addf %139, %146 : vector<4x80x96xf32>
    %c3_69 = arith.constant 3 : index
    %c0_70 = arith.constant 0 : index
    %c11_71 = arith.constant 11 : index
    %c0_72 = arith.constant 0 : index
    %148 = vector.load %arg1[%c3_69, %c0_70, %c11_71, %c0_72] : memref<4x4x110x96xf32, #tpu.memory_space<vmem>>, vector<1x4x80x96xf32>
    %149 = vector.shape_cast %148 : vector<1x4x80x96xf32> to vector<4x80x96xf32>
    %150 = vector.extract_strided_slice %0 {offsets = [18, 0], sizes = [1, 96], strides = [1, 1]} : vector<25x96xf32> to vector<1x96xf32>
    %151 = vector.shape_cast %150 : vector<1x96xf32> to vector<96xf32>
    %152 = vector.shape_cast %151 : vector<96xf32> to vector<1x1x96xf32>
    %153 = vector.broadcast %152 : vector<1x1x96xf32> to vector<4x80x96xf32>
    %154 = arith.mulf %149, %153 : vector<4x80x96xf32>
    %155 = arith.addf %147, %154 : vector<4x80x96xf32>
    %c2_73 = arith.constant 2 : index
    %c0_74 = arith.constant 0 : index
    %c12_75 = arith.constant 12 : index
    %c0_76 = arith.constant 0 : index
    %156 = vector.load %arg1[%c2_73, %c0_74, %c12_75, %c0_76] : memref<4x4x110x96xf32, #tpu.memory_space<vmem>>, vector<1x4x80x96xf32>
    %157 = vector.shape_cast %156 : vector<1x4x80x96xf32> to vector<4x80x96xf32>
    %158 = vector.extract_strided_slice %0 {offsets = [19, 0], sizes = [1, 96], strides = [1, 1]} : vector<25x96xf32> to vector<1x96xf32>
    %159 = vector.shape_cast %158 : vector<1x96xf32> to vector<96xf32>
    %160 = vector.shape_cast %159 : vector<96xf32> to vector<1x1x96xf32>
    %161 = vector.broadcast %160 : vector<1x1x96xf32> to vector<4x80x96xf32>
    %162 = arith.mulf %157, %161 : vector<4x80x96xf32>
    %163 = arith.addf %155, %162 : vector<4x80x96xf32>
    %c0_77 = arith.constant 0 : index
    %c0_78 = arith.constant 0 : index
    %c20 = arith.constant 20 : index
    %c0_79 = arith.constant 0 : index
    %164 = vector.load %arg1[%c0_77, %c0_78, %c20, %c0_79] : memref<4x4x110x96xf32, #tpu.memory_space<vmem>>, vector<1x4x80x96xf32>
    %165 = vector.shape_cast %164 : vector<1x4x80x96xf32> to vector<4x80x96xf32>
    %166 = vector.extract_strided_slice %0 {offsets = [20, 0], sizes = [1, 96], strides = [1, 1]} : vector<25x96xf32> to vector<1x96xf32>
    %167 = vector.shape_cast %166 : vector<1x96xf32> to vector<96xf32>
    %168 = vector.shape_cast %167 : vector<96xf32> to vector<1x1x96xf32>
    %169 = vector.broadcast %168 : vector<1x1x96xf32> to vector<4x80x96xf32>
    %170 = arith.mulf %165, %169 : vector<4x80x96xf32>
    %171 = arith.addf %163, %170 : vector<4x80x96xf32>
    %c1_80 = arith.constant 1 : index
    %c0_81 = arith.constant 0 : index
    %c20_82 = arith.constant 20 : index
    %c0_83 = arith.constant 0 : index
    %172 = vector.load %arg1[%c1_80, %c0_81, %c20_82, %c0_83] : memref<4x4x110x96xf32, #tpu.memory_space<vmem>>, vector<1x4x80x96xf32>
    %173 = vector.shape_cast %172 : vector<1x4x80x96xf32> to vector<4x80x96xf32>
    %174 = vector.extract_strided_slice %0 {offsets = [21, 0], sizes = [1, 96], strides = [1, 1]} : vector<25x96xf32> to vector<1x96xf32>
    %175 = vector.shape_cast %174 : vector<1x96xf32> to vector<96xf32>
    %176 = vector.shape_cast %175 : vector<96xf32> to vector<1x1x96xf32>
    %177 = vector.broadcast %176 : vector<1x1x96xf32> to vector<4x80x96xf32>
    %178 = arith.mulf %173, %177 : vector<4x80x96xf32>
    %179 = arith.addf %171, %178 : vector<4x80x96xf32>
    %c0_84 = arith.constant 0 : index
    %c0_85 = arith.constant 0 : index
    %c21 = arith.constant 21 : index
    %c0_86 = arith.constant 0 : index
    %180 = vector.load %arg1[%c0_84, %c0_85, %c21, %c0_86] : memref<4x4x110x96xf32, #tpu.memory_space<vmem>>, vector<1x4x80x96xf32>
    %181 = vector.shape_cast %180 : vector<1x4x80x96xf32> to vector<4x80x96xf32>
    %182 = vector.extract_strided_slice %0 {offsets = [22, 0], sizes = [1, 96], strides = [1, 1]} : vector<25x96xf32> to vector<1x96xf32>
    %183 = vector.shape_cast %182 : vector<1x96xf32> to vector<96xf32>
    %184 = vector.shape_cast %183 : vector<96xf32> to vector<1x1x96xf32>
    %185 = vector.broadcast %184 : vector<1x1x96xf32> to vector<4x80x96xf32>
    %186 = arith.mulf %181, %185 : vector<4x80x96xf32>
    %187 = arith.addf %179, %186 : vector<4x80x96xf32>
    %c1_87 = arith.constant 1 : index
    %c0_88 = arith.constant 0 : index
    %c21_89 = arith.constant 21 : index
    %c0_90 = arith.constant 0 : index
    %188 = vector.load %arg1[%c1_87, %c0_88, %c21_89, %c0_90] : memref<4x4x110x96xf32, #tpu.memory_space<vmem>>, vector<1x4x80x96xf32>
    %189 = vector.shape_cast %188 : vector<1x4x80x96xf32> to vector<4x80x96xf32>
    %190 = vector.extract_strided_slice %0 {offsets = [23, 0], sizes = [1, 96], strides = [1, 1]} : vector<25x96xf32> to vector<1x96xf32>
    %191 = vector.shape_cast %190 : vector<1x96xf32> to vector<96xf32>
    %192 = vector.shape_cast %191 : vector<96xf32> to vector<1x1x96xf32>
    %193 = vector.broadcast %192 : vector<1x1x96xf32> to vector<4x80x96xf32>
    %194 = arith.mulf %189, %193 : vector<4x80x96xf32>
    %195 = arith.addf %187, %194 : vector<4x80x96xf32>
    %c0_91 = arith.constant 0 : index
    %c0_92 = arith.constant 0 : index
    %c22 = arith.constant 22 : index
    %c0_93 = arith.constant 0 : index
    %196 = vector.load %arg1[%c0_91, %c0_92, %c22, %c0_93] : memref<4x4x110x96xf32, #tpu.memory_space<vmem>>, vector<1x4x80x96xf32>
    %197 = vector.shape_cast %196 : vector<1x4x80x96xf32> to vector<4x80x96xf32>
    %198 = vector.extract_strided_slice %0 {offsets = [24, 0], sizes = [1, 96], strides = [1, 1]} : vector<25x96xf32> to vector<1x96xf32>
    %199 = vector.shape_cast %198 : vector<1x96xf32> to vector<96xf32>
    %200 = vector.shape_cast %199 : vector<96xf32> to vector<1x1x96xf32>
    %201 = vector.broadcast %200 : vector<1x1x96xf32> to vector<4x80x96xf32>
    %202 = arith.mulf %197, %201 : vector<4x80x96xf32>
    %203 = arith.addf %195, %202 : vector<4x80x96xf32>
    %204 = vector.shape_cast %2 : vector<96xf32> to vector<1x1x96xf32>
    %205 = vector.broadcast %204 : vector<1x1x96xf32> to vector<4x80x96xf32>
    %206 = arith.addf %203, %205 : vector<4x80x96xf32>
    %cst_94 = arith.constant 0.000000e+00 : f32
    %207 = vector.broadcast %cst_94 : f32 to vector<4x80x96xf32>
    %208 = arith.maximumf %206, %207 : vector<4x80x96xf32>
    %209 = vector.shape_cast %208 : vector<4x80x96xf32> to vector<320x96xf32>
    %210 = arith.truncf %209 : vector<320x96xf32> to vector<320x96xbf16>
    %c0_95 = arith.constant 0 : index
    %c0_96 = arith.constant 0 : index
    %211 = vector.load %arg4[%c0_95, %c0_96] : memref<96x56xbf16, #tpu.memory_space<vmem>>, vector<96x56xbf16>
    %cst_97 = arith.constant dense<0.000000e+00> : vector<320x56xf32>
    %212 = tpu.matmul %210, %211, %cst_97 {dimension_numbers = #tpu.dot_dimension_numbers<[1], [0], [0], [1], [0, 0, 1, 1], [], []>} : vector<320x96xbf16>, vector<96x56xbf16>, vector<320x56xf32> -> vector<320x56xf32>
    %c0_98 = arith.constant 0 : index
    %c0_99 = arith.constant 0 : index
    %213 = vector.load %arg5[%c0_98, %c0_99] : memref<320x56xf32, #tpu.memory_space<vmem>>, vector<320x56xf32>
    tpu.vector_store %arg5[%c0_98, %c0_99], %212 {strides = array<i32>} : memref<320x56xf32, #tpu.memory_space<vmem>>, vector<320x56xf32>,
    return
  }
  func.func @transform_0(%arg0: i32) -> (i32, i32, i32, i32) {
    %c0_i32 = arith.constant 0 : i32
    %c0_i32_0 = arith.constant 0 : i32
    %c0_i32_1 = arith.constant 0 : i32
    %c0_i32_2 = arith.constant 0 : i32
    return %c0_i32, %arg0, %c0_i32_0, %c0_i32_1 : i32, i32, i32, i32
  }
  func.func @transform_1(%arg0: i32) -> (i32, i32) {
    %c0_i32 = arith.constant 0 : i32
    %c0_i32_0 = arith.constant 0 : i32
    %c0_i32_1 = arith.constant 0 : i32
    return %c0_i32, %c0_i32_0 : i32, i32
  }
  func.func @transform_2(%arg0: i32) -> (i32, i32) {
    %c0_i32 = arith.constant 0 : i32
    %c0_i32_0 = arith.constant 0 : i32
    %c0_i32_1 = arith.constant 0 : i32
    return %c0_i32, %c0_i32_0 : i32, i32
  }
  func.func @transform_3(%arg0: i32) -> (i32, i32) {
    %c0_i32 = arith.constant 0 : i32
    %c0_i32_0 = arith.constant 0 : i32
    %c0_i32_1 = arith.constant 0 : i32
    return %c0_i32, %c0_i32_0 : i32, i32
  }
  func.func @transform_4(%arg0: i32) -> (i32, i32) {
    %c0_i32 = arith.constant 0 : i32
    %c0_i32_0 = arith.constant 0 : i32
    return %arg0, %c0_i32 : i32, i32
  }
}

</mosaic_0001>

<llo_original>
// kernel: fused_forward.1
$region0: #{fused_forward.1}
  #allocation0 [shape = 'u32[]', space=smem, size = 0x4, offset = 0x4, fixed_abs, tag = 'smem constant byte address 0x4 - core index']
  #allocation1 [shape = 'u32[144,128]{1,0:T(1,128)}', space=vmem, size = 0x12000, scoped, tag = 'internal scratch']
  %s0 = inlined_call_operand.vmem [shape: f32[4,8,110,96], index: 0, kind: input, shape index: {}]
  %s1 = inlined_call_operand.vmem [shape: f32[25,96], index: 1, kind: input, shape index: {}]
  %s2 = inlined_call_operand.vmem [shape: f32[1,96], index: 2, kind: input, shape index: {}]
  %s3 = inlined_call_operand.vmem [shape: bf16[96,56], index: 3, kind: input, shape index: {}]
  %s4 = inlined_call_operand.vmem [shape: f32[640,56], index: 4, kind: output, shape index: {}]
  %s5 = sld [smem:[#allocation0]]
  $region87: #{fused_forward.1} parent=0
    _
  %s7 = ssub.s32 1, %s5
  %s8 = scalar_select 0, %s7, %s5
  $region1: #{fused_forward.1} parent=0
    #allocation2 [shape = 'u8[1835008]{0}', space=vmem, size = 0x1c0000, scoped, tag = 'input window, operand 0']
    loop: start=0, step=1, limit=4
    $region2: #{fused_forward.1} parent=1 // loop_pre_header
      _
    $region3: #{fused_forward.1} parent=1 // loop_header
      %s10 = sphi 0, %s14
      %p11 = scmp.ge.s32.totalorder %s10, 4
      %s20 = sphi 0, %s22
      %s23 = sphi 0, %s20
      %s24 = sphi 0, %s23
      %s40 = sphi 0, %s24
      %s44 = sphi 0, %s44
      %s46 = sphi 0, %s44
      %s47 = sphi 0, %s46
      %s61 = sphi 0, %s47
      %s65 = sphi 0, %s65
      %s67 = sphi 0, %s65
      %s68 = sphi 0, %s67
      %s82 = sphi 0, %s68
      %s86 = sphi 0, %s86
      %s88 = sphi 0, %s86
      %s89 = sphi 0, %s88
      %s103 = sphi 0, %s89
      %s109 = sphi 0, %s111
      %s112 = sphi 0, %s109
      %s113 = sphi 0, %s112
      %s129 = sphi 0, %s113
    $region4: #{fused_forward.1} parent=1 // loop_header_branch
      %13 = sbr.rel (%p11) target = $region8
    $region5: #{fused_forward.1} parent=1 // loop_body
      %s15 = ssub.s32 %s10, 1
      %s16 = ssub.s32 %s10, 2
      %s17 = sadd.s32 %s10, 1
      %s18 = ssub.s32 %s10, %s17
      %p19 = scmp.eq.s32.totalorder %s18, 0
      %s21 = sadd.s32 %s20, 1
      %s22 = scalar_select %p19, %s20, %s21
      %p25 = pneg %p19
      %p26 = scmp.eq.s32.totalorder %s10, 1
      %p27 = por %p25, %p26
      %p28 = scmp.ne.s32.totalorder %s20, %s23
      %p29 = scmp.eq.s32.totalorder %s10, 0
      %p30 = por %p28, %p29
      %p31 = scmp.ne.s32.totalorder %s20, %s23
      %p32 = scmp.eq.s32.totalorder %s15, 1
      %p33 = por %p31, %p32
      %p34 = scmp.ne.s32.totalorder %s23, %s24
      %p35 = scmp.eq.s32.totalorder %s15, 0
      %p36 = por %p34, %p35
      %p37 = scmp.ne.s32.totalorder %s23, %s24
      %p38 = scmp.eq.s32.totalorder %s16, 1
      %p39 = por %p37, %p38
      %p41 = scmp.ne.s32.totalorder %s24, %s40
      %p42 = scmp.eq.s32.totalorder %s16, 0
      %p43 = por %p41, %p42
      %s45 = sadd.s32 %s44, 1
      %p48 = scmp.eq.s32.totalorder %s10, 1
      %p49 = scmp.ne.s32.totalorder %s44, %s46
      %p50 = scmp.eq.s32.totalorder %s10, 0
      %p51 = por %p49, %p50
      %p52 = scmp.ne.s32.totalorder %s44, %s46
      %p53 = scmp.eq.s32.totalorder %s15, 1
      %p54 = por %p52, %p53
      %p55 = scmp.ne.s32.totalorder %s46, %s47
      %p56 = scmp.eq.s32.totalorder %s15, 0
      %p57 = por %p55, %p56
      %p58 = scmp.ne.s32.totalorder %s46, %s47
      %p59 = scmp.eq.s32.totalorder %s16, 1
      %p60 = por %p58, %p59
      %p62 = scmp.ne.s32.totalorder %s47, %s61
      %p63 = scmp.eq.s32.totalorder %s16, 0
      %p64 = por %p62, %p63
      %s66 = sadd.s32 %s65, 1
      %p69 = scmp.eq.s32.totalorder %s10, 1
      %p70 = scmp.ne.s32.totalorder %s65, %s67
      %p71 = scmp.eq.s32.totalorder %s10, 0
      %p72 = por %p70, %p71
      %p73 = scmp.ne.s32.totalorder %s65, %s67
      %p74 = scmp.eq.s32.totalorder %s15, 1
      %p75 = por %p73, %p74
      %p76 = scmp.ne.s32.totalorder %s67, %s68
      %p77 = scmp.eq.s32.totalorder %s15, 0
      %p78 = por %p76, %p77
      %p79 = scmp.ne.s32.totalorder %s67, %s68
      %p80 = scmp.eq.s32.totalorder %s16, 1
      %p81 = por %p79, %p80
      %p83 = scmp.ne.s32.totalorder %s68, %s82
      %p84 = scmp.eq.s32.totalorder %s16, 0
      %p85 = por %p83, %p84
      %s87 = sadd.s32 %s86, 1
      %p90 = scmp.eq.s32.totalorder %s10, 1
      %p91 = scmp.ne.s32.totalorder %s86, %s88
      %p92 = scmp.eq.s32.totalorder %s10, 0
      %p93 = por %p91, %p92
      %p94 = scmp.ne.s32.totalorder %s86, %s88
      %p95 = scmp.eq.s32.totalorder %s15, 1
      %p96 = por %p94, %p95
      %p97 = scmp.ne.s32.totalorder %s88, %s89
      %p98 = scmp.eq.s32.totalorder %s15, 0
      %p99 = por %p97, %p98
      %p100 = scmp.ne.s32.totalorder %s88, %s89
      %p101 = scmp.eq.s32.totalorder %s16, 1
      %p102 = por %p100, %p101
      %p104 = scmp.ne.s32.totalorder %s89, %s103
      %p105 = scmp.eq.s32.totalorder %s16, 0
      %p106 = por %p104, %p105
      %s107 = ssub.s32 %s10, %s17
      %p108 = scmp.eq.s32.totalorder %s107, 0
      %s110 = sadd.s32 %s109, 1
      %s111 = scalar_select %p108, %s109, %s110
      %p114 = pneg %p108
      %p115 = scmp.eq.s32.totalorder %s10, 1
      %p116 = por %p114, %p115
      %p117 = scmp.ne.s32.totalorder %s109, %s112
      %p118 = scmp.eq.s32.totalorder %s10, 0
      %p119 = por %p117, %p118
      %p120 = scmp.ne.s32.totalorder %s109, %s112
      %p121 = scmp.eq.s32.totalorder %s15, 1
      %p122 = por %p120, %p121
      %p123 = scmp.ne.s32.totalorder %s112, %s113
      %p124 = scmp.eq.s32.totalorder %s15, 0
      %p125 = por %p123, %p124
      %p126 = scmp.ne.s32.totalorder %s112, %s113
      %p127 = scmp.eq.s32.totalorder %s16, 1
      %p128 = por %p126, %p127
      %p130 = scmp.ne.s32.totalorder %s113, %s129
      %p131 = scmp.eq.s32.totalorder %s16, 0
      %p132 = por %p130, %p131
      %p133 = scmp.le.s32.totalorder 1, %s10
      %p134 = scmp.lt.s32.totalorder %s10, 3
      %p135 = pnand %p133, %p134
      %p136 = pneg %p135
      // Predicated region
      $region9: #{fused_forward.1} parent=5 // pred_check
        _
      $region10: #{fused_forward.1} parent=5 // pred_check_branch
        %138 = sbr.rel (%p135) target = $region12
      $region11: #{fused_forward.1} parent=5 // pred_region
        %s139 = ssub.s32 %s10, 1
        // Predicated region
        $region13: #{fused_forward.1} parent=11 // pred_check
          %p140 = pneg %p57
        $region14: #{fused_forward.1} parent=11 // pred_check_branch
          %142 = sbr.rel (%p140) target = $region16
        $region15: #{fused_forward.1} parent=11 // pred_region
          _
        $region16: #{fused_forward.1} parent=11 // pred_fallthru
          _
        // Predicated region
        $region17: #{fused_forward.1} parent=11 // pred_check
          %p143 = pneg %p78
        $region18: #{fused_forward.1} parent=11 // pred_check_branch
          %145 = sbr.rel (%p143) target = $region20
        $region19: #{fused_forward.1} parent=11 // pred_region
          _
        $region20: #{fused_forward.1} parent=11 // pred_fallthru
          _
        // Predicated region
        $region21: #{fused_forward.1} parent=11 // pred_check
          %p146 = pneg %p99
        $region22: #{fused_forward.1} parent=11 // pred_check_branch
          %148 = sbr.rel (%p146) target = $region24
        $region23: #{fused_forward.1} parent=11 // pred_region
          _
        $region24: #{fused_forward.1} parent=11 // pred_fallthru
          _
      $region12: #{fused_forward.1} parent=5 // pred_fallthru
        _
      %p149 = scmp.lt.s32.totalorder %s10, 2
      // Predicated region
      $region25: #{fused_forward.1} parent=5 // pred_check
        %p150 = pneg %p149
      $region26: #{fused_forward.1} parent=5 // pred_check_branch
        %152 = sbr.rel (%p150) target = $region28
      $region27: #{fused_forward.1} parent=5 // pred_region
        // Predicated region
        $region29: #{fused_forward.1} parent=27 // pred_check
          %p153 = pneg %p30
        $region30: #{fused_forward.1} parent=27 // pred_check_branch
          %155 = sbr.rel (%p153) target = $region32
        $region31: #{fused_forward.1} parent=27 // pred_region
          %s156 = sand.u32 %s20, 1
          %s157 = sand.u32 %s20, 1
          %s158 = smul.addr %s157, 1792
          %s159 = scalar_lea.vmem [#allocation2], %s158
          %s160 = smul.u32 4, %s10
          %s161 = smul.addr %s160, 14
          %s162 = smul.addr %s161, 8
          %s163 = scalar_lea.vmem %s0, %s162
          // Predicated region
          $region33: #{fused_forward.1} parent=31 // pred_check
            _
          $region34: #{fused_forward.1} parent=31 // pred_check_branch
            %165 = sbr.rel (0) target = $region36
          $region35: #{fused_forward.1} parent=31 // pred_region
            // Predicated region
            $region37: #{fused_forward.1} parent=35 // pred_check
              _
            $region38: #{fused_forward.1} parent=35 // pred_check_branch
              %167 = sbr.rel (0) target = $region40
            $region39: #{fused_forward.1} parent=35 // pred_region
              // Predicated region
              $region52: #{fused_forward.1} parent=39 // pred_check
                _
              $region53: #{fused_forward.1} parent=39 // pred_check_branch
                %628 = sbr.rel (0) target = $region55
              $region54: #{fused_forward.1} parent=39 // pred_region
                loop: start=0, step=1, limit=1
                $region56: #{fused_forward.1} parent=54 // loop_pre_header
                  _
                $region57: #{fused_forward.1} parent=54 // loop_header
                  %s630 = sphi 0, %s634
                  %p631 = scmp.ge.s32.totalorder %s630, 1
                  %s635 = sphi %s163, %s163
                  %s636 = sphi %s159, %s159
                $region58: #{fused_forward.1} parent=54 // loop_header_branch
                  %633 = sbr.rel (%p631) target = $region62
                $region59: #{fused_forward.1} parent=54 // loop_body
                  %v637 = vld [vmem:[%s635] sm:$0xff]
                  %638 = vst [vmem:[%s636] sm:$0xff] %v637
                  %v639 = vld [vmem:[%s635 + $0x8] sm:$0xff]
                  %640 = vst [vmem:[%s636 + $0x8] sm:$0xff] %v639
                  %v641 = vld [vmem:[%s635 + $0x10] sm:$0xff]
                  %642 = vst [vmem:[%s636 + $0x10] sm:$0xff] %v641
                  %v643 = vld [vmem:[%s635 + $0x18] sm:$0xff]
                  %644 = vst [vmem:[%s636 + $0x18] sm:$0xff] %v643
                  %v645 = vld [vmem:[%s635 + $0x20] sm:$0xff]
                  %646 = vst [vmem:[%s636 + $0x20] sm:$0xff] %v645
                  %v647 = vld [vmem:[%s635 + $0x28] sm:$0xff]
                  %648 = vst [vmem:[%s636 + $0x28] sm:$0xff] %v647
                  %v649 = vld [vmem:[%s635 + $0x30] sm:$0xff]
                  %650 = vst [vmem:[%s636 + $0x30] sm:$0xff] %v649
                  %v651 = vld [vmem:[%s635 + $0x38] sm:$0xff]
                  %652 = vst [vmem:[%s636 + $0x38] sm:$0xff] %v651
                  %v653 = vld [vmem:[%s635 + $0x40] sm:$0xff]
                  %654 = vst [vmem:[%s636 + $0x40] sm:$0xff] %v653
                  %v655 = vld [vmem:[%s635 + $0x48] sm:$0xff]
                  %656 = vst [vmem:[%s636 + $0x48] sm:$0xff] %v655
                  %v657 = vld [vmem:[%s635 + $0x50] sm:$0xff]
                  %658 = vst [vmem:[%s636 + $0x50] sm:$0xff] %v657
                  %v659 = vld [vmem:[%s635 + $0x58] sm:$0xff]
                  %660 = vst [vmem:[%s636 + $0x58] sm:$0xff] %v659
                  %v661 = vld [vmem:[%s635 + $0x60] sm:$0xff]
                  %662 = vst [vmem:[%s636 + $0x60] sm:$0xff] %v661
                  %v663 = vld [vmem:[%s635 + $0x68] sm:$0xff]
                  %664 = vst [vmem:[%s636 + $0x68] sm:$0xff] %v663
                  %v665 = vld [vmem:[%s635 + $0x70] sm:$0xff]
                  %666 = vst [vmem:[%s636 + $0x70] sm:$0xff] %v665
                  %v667 = vld [vmem:[%s635 + $0x78] sm:$0xff]
                  %668 = vst [vmem:[%s636 + $0x78] sm:$0xff] %v667
                  %v669 = vld [vmem:[%s635 + $0x80] sm:$0xff]
                  %670 = vst [vmem:[%s636 + $0x80] sm:$0xff] %v669
                  %v671 = vld [vmem:[%s635 + $0x88] sm:$0xff]
                  %672 = vst [vmem:[%s636 + $0x88] sm:$0xff] %v671
                  %v673 = vld [vmem:[%s635 + $0x90] sm:$0xff]
                  %674 = vst [vmem:[%s636 + $0x90] sm:$0xff] %v673
                  %v675 = vld [vmem:[%s635 + $0x98] sm:$0xff]
                  %676 = vst [vmem:[%s636 + $0x98] sm:$0xff] %v675
                  %v677 = vld [vmem:[%s635 + $0xa0] sm:$0xff]
                  %678 = vst [vmem:[%s636 + $0xa0] sm:$0xff] %v677
                  %v679 = vld [vmem:[%s635 + $0xa8] sm:$0xff]
                  %680 = vst [vmem:[%s636 + $0xa8] sm:$0xff] %v679
                  %v681 = vld [vmem:[%s635 + $0xb0] sm:$0xff]
                  %682 = vst [vmem:[%s636 + $0xb0] sm:$0xff] %v681
                  %v683 = vld [vmem:[%s635 + $0xb8] sm:$0xff]
                  %684 = vst [vmem:[%s636 + $0xb8] sm:$0xff] %v683
                  %v685 = vld [vmem:[%s635 + $0xc0] sm:$0xff]
                  %686 = vst [vmem:[%s636 + $0xc0] sm:$0xff] %v685
                  %v687 = vld [vmem:[%s635 + $0xc8] sm:$0xff]
                  %688 = vst [vmem:[%s636 + $0xc8] sm:$0xff] %v687
                  %v689 = vld [vmem:[%s635 + $0xd0] sm:$0xff]
                  %690 = vst [vmem:[%s636 + $0xd0] sm:$0xff] %v689
                  %v691 = vld [vmem:[%s635 + $0xd8] sm:$0xff]
                  %692 = vst [vmem:[%s636 + $0xd8] sm:$0xff] %v691
                  %v693 = vld [vmem:[%s635 + $0xe0] sm:$0xff]
                  %694 = vst [vmem:[%s636 + $0xe0] sm:$0xff] %v693
                  %v695 = vld [vmem:[%s635 + $0xe8] sm:$0xff]
                  %696 = vst [vmem:[%s636 + $0xe8] sm:$0xff] %v695
                  %v697 = vld [vmem:[%s635 + $0xf0] sm:$0xff]
                  %698 = vst [vmem:[%s636 + $0xf0] sm:$0xff] %v697
                  %v699 = vld [vmem:[%s635 + $0xf8] sm:$0xff]
                  %700 = vst [vmem:[%s636 + $0xf8] sm:$0xff] %v699
                  %v701 = vld [vmem:[%s635 + $0x100] sm:$0xff]
                  %702 = vst [vmem:[%s636 + $0x100] sm:$0xff] %v701
                  %v703 = vld [vmem:[%s635 + $0x108] sm:$0xff]
                  %704 = vst [vmem:[%s636 + $0x108] sm:$0xff] %v703
                  %v705 = vld [vmem:[%s635 + $0x110] sm:$0xff]
                  %706 = vst [vmem:[%s636 + $0x110] sm:$0xff] %v705
                  %v707 = vld [vmem:[%s635 + $0x118] sm:$0xff]
                  %708 = vst [vmem:[%s636 + $0x118] sm:$0xff] %v707
                  %v709 = vld [vmem:[%s635 + $0x120] sm:$0xff]
                  %710 = vst [vmem:[%s636 + $0x120] sm:$0xff] %v709
                  %v711 = vld [vmem:[%s635 + $0x128] sm:$0xff]
                  %712 = vst [vmem:[%s636 + $0x128] sm:$0xff] %v711
                  %v713 = vld [vmem:[%s635 + $0x130] sm:$0xff]
                  %714 = vst [vmem:[%s636 + $0x130] sm:$0xff] %v713
                  %v715 = vld [vmem:[%s635 + $0x138] sm:$0xff]
                  %716 = vst [vmem:[%s636 + $0x138] sm:$0xff] %v715
                  %v717 = vld [vmem:[%s635 + $0x140] sm:$0xff]
                  %718 = vst [vmem:[%s636 + $0x140] sm:$0xff] %v717
                  %v719 = vld [vmem:[%s635 + $0x148] sm:$0xff]
                  %720 = vst [vmem:[%s636 + $0x148] sm:$0xff] %v719
                  %v721 = vld [vmem:[%s635 + $0x150] sm:$0xff]
                  %722 = vst [vmem:[%s636 + $0x150] sm:$0xff] %v721
                  %v723 = vld [vmem:[%s635 + $0x158] sm:$0xff]
                  %724 = vst [vmem:[%s636 + $0x158] sm:$0xff] %v723
                  %v725 = vld [vmem:[%s635 + $0x160] sm:$0xff]
                  %726 = vst [vmem:[%s636 + $0x160] sm:$0xff] %v725
                  %v727 = vld [vmem:[%s635 + $0x168] sm:$0xff]
                  %728 = vst [vmem:[%s636 + $0x168] sm:$0xff] %v727
                  %v729 = vld [vmem:[%s635 + $0x170] sm:$0xff]
                  %730 = vst [vmem:[%s636 + $0x170] sm:$0xff] %v729
                  %v731 = vld [vmem:[%s635 + $0x178] sm:$0xff]
                  %732 = vst [vmem:[%s636 + $0x178] sm:$0xff] %v731
                  %v733 = vld [vmem:[%s635 + $0x180] sm:$0xff]
                  %734 = vst [vmem:[%s636 + $0x180] sm:$0xff] %v733
                  %v735 = vld [vmem:[%s635 + $0x188] sm:$0xff]
                  %736 = vst [vmem:[%s636 + $0x188] sm:$0xff] %v735
                  %v737 = vld [vmem:[%s635 + $0x190] sm:$0xff]
                  %738 = vst [vmem:[%s636 + $0x190] sm:$0xff] %v737
                  %v739 = vld [vmem:[%s635 + $0x198] sm:$0xff]
                  %740 = vst [vmem:[%s636 + $0x198] sm:$0xff] %v739
                  %v741 = vld [vmem:[%s635 + $0x1a0] sm:$0xff]
                  %742 = vst [vmem:[%s636 + $0x1a0] sm:$0xff] %v741
                  %v743 = vld [vmem:[%s635 + $0x1a8] sm:$0xff]
                  %744 = vst [vmem:[%s636 + $0x1a8] sm:$0xff] %v743
                  %v745 = vld [vmem:[%s635 + $0x1b0] sm:$0xff]
                  %746 = vst [vmem:[%s636 + $0x1b0] sm:$0xff] %v745
                  %v747 = vld [vmem:[%s635 + $0x1b8] sm:$0xff]
                  %748 = vst [vmem:[%s636 + $0x1b8] sm:$0xff] %v747
                  %v749 = vld [vmem:[%s635 + $0x380] sm:$0xff]
                  %750 = vst [vmem:[%s636 + $0x1c0] sm:$0xff] %v749
                  %v751 = vld [vmem:[%s635 + $0x388] sm:$0xff]
                  %752 = vst [vmem:[%s636 + $0x1c8] sm:$0xff] %v751
                  %v753 = vld [vmem:[%s635 + $0x390] sm:$0xff]
                  %754 = vst [vmem:[%s636 + $0x1d0] sm:$0xff] %v753
                  %v755 = vld [vmem:[%s635 + $0x398] sm:$0xff]
                  %756 = vst [vmem:[%s636 + $0x1d8] sm:$0xff] %v755
                  %v757 = vld [vmem:[%s635 + $0x3a0] sm:$0xff]
                  %758 = vst [vmem:[%s636 + $0x1e0] sm:$0xff] %v757
                  %v759 = vld [vmem:[%s635 + $0x3a8] sm:$0xff]
                  %760 = vst [vmem:[%s636 + $0x1e8] sm:$0xff] %v759
                  %v761 = vld [vmem:[%s635 + $0x3b0] sm:$0xff]
                  %762 = vst [vmem:[%s636 + $0x1f0] sm:$0xff] %v761
                  %v763 = vld [vmem:[%s635 + $0x3b8] sm:$0xff]
                  %764 = vst [vmem:[%s636 + $0x1f8] sm:$0xff] %v763
                  %v765 = vld [vmem:[%s635 + $0x3c0] sm:$0xff]
                  %766 = vst [vmem:[%s636 + $0x200] sm:$0xff] %v765
                  %v767 = vld [vmem:[%s635 + $0x3c8] sm:$0xff]
                  %768 = vst [vmem:[%s636 + $0x208] sm:$0xff] %v767
                  %v769 = vld [vmem:[%s635 + $0x3d0] sm:$0xff]
                  %770 = vst [vmem:[%s636 + $0x210] sm:$0xff] %v769
                  %v771 = vld [vmem:[%s635 + $0x3d8] sm:$0xff]
                  %772 = vst [vmem:[%s636 + $0x218] sm:$0xff] %v771
                  %v773 = vld [vmem:[%s635 + $0x3e0] sm:$0xff]
                  %774 = vst [vmem:[%s636 + $0x220] sm:$0xff] %v773
                  %v775 = vld [vmem:[%s635 + $0x3e8] sm:$0xff]
                  %776 = vst [vmem:[%s636 + $0x228] sm:$0xff] %v775
                  %v777 = vld [vmem:[%s635 + $0x3f0] sm:$0xff]
                  %778 = vst [vmem:[%s636 + $0x230] sm:$0xff] %v777
                  %v779 = vld [vmem:[%s635 + $0x3f8] sm:$0xff]
                  %780 = vst [vmem:[%s636 + $0x238] sm:$0xff] %v779
                  %v781 = vld [vmem:[%s635 + $0x400] sm:$0xff]
                  %782 = vst [vmem:[%s636 + $0x240] sm:$0xff] %v781
                  %v783 = vld [vmem:[%s635 + $0x408] sm:$0xff]
                  %784 = vst [vmem:[%s636 + $0x248] sm:$0xff] %v783
                  %v785 = vld [vmem:[%s635 + $0x410] sm:$0xff]
                  %786 = vst [vmem:[%s636 + $0x250] sm:$0xff] %v785
                  %v787 = vld [vmem:[%s635 + $0x418] sm:$0xff]
                  %788 = vst [vmem:[%s636 + $0x258] sm:$0xff] %v787
                  %v789 = vld [vmem:[%s635 + $0x420] sm:$0xff]
                  %790 = vst [vmem:[%s636 + $0x260] sm:$0xff] %v789
                  %v791 = vld [vmem:[%s635 + $0x428] sm:$0xff]
                  %792 = vst [vmem:[%s636 + $0x268] sm:$0xff] %v791
                  %v793 = vld [vmem:[%s635 + $0x430] sm:$0xff]
                  %794 = vst [vmem:[%s636 + $0x270] sm:$0xff] %v793
                  %v795 = vld [vmem:[%s635 + $0x438] sm:$0xff]
                  %796 = vst [vmem:[%s636 + $0x278] sm:$0xff] %v795
                  %v797 = vld [vmem:[%s635 + $0x440] sm:$0xff]
                  %798 = vst [vmem:[%s636 + $0x280] sm:$0xff] %v797
                  %v799 = vld [vmem:[%s635 + $0x448] sm:$0xff]
                  %800 = vst [vmem:[%s636 + $0x288] sm:$0xff] %v799
                  %v801 = vld [vmem:[%s635 + $0x450] sm:$0xff]
                  %802 = vst [vmem:[%s636 + $0x290] sm:$0xff] %v801
                  %v803 = vld [vmem:[%s635 + $0x458] sm:$0xff]
                  %804 = vst [vmem:[%s636 + $0x298] sm:$0xff] %v803
                  %v805 = vld [vmem:[%s635 + $0x460] sm:$0xff]
                  %806 = vst [vmem:[%s636 + $0x2a0] sm:$0xff] %v805
                  %v807 = vld [vmem:[%s635 + $0x468] sm:$0xff]
                  %808 = vst [vmem:[%s636 + $0x2a8] sm:$0xff] %v807
                  %v809 = vld [vmem:[%s635 + $0x470] sm:$0xff]
                  %810 = vst [vmem:[%s636 + $0x2b0] sm:$0xff] %v809
                  %v811 = vld [vmem:[%s635 + $0x478] sm:$0xff]
                  %812 = vst [vmem:[%s636 + $0x2b8] sm:$0xff] %v811
                  %v813 = vld [vmem:[%s635 + $0x480] sm:$0xff]
                  %814 = vst [vmem:[%s636 + $0x2c0] sm:$0xff] %v813
                  %v815 = vld [vmem:[%s635 + $0x488] sm:$0xff]
                  %816 = vst [vmem:[%s636 + $0x2c8] sm:$0xff] %v815
                  %v817 = vld [vmem:[%s635 + $0x490] sm:$0xff]
                  %818 = vst [vmem:[%s636 + $0x2d0] sm:$0xff] %v817
                  %v819 = vld [vmem:[%s635 + $0x498] sm:$0xff]
                  %820 = vst [vmem:[%s636 + $0x2d8] sm:$0xff] %v819
                  %v821 = vld [vmem:[%s635 + $0x4a0] sm:$0xff]
                  %822 = vst [vmem:[%s636 + $0x2e0] sm:$0xff] %v821
                  %v823 = vld [vmem:[%s635 + $0x4a8] sm:$0xff]
                  %824 = vst [vmem:[%s636 + $0x2e8] sm:$0xff] %v823
                  %v825 = vld [vmem:[%s635 + $0x4b0] sm:$0xff]
                  %826 = vst [vmem:[%s636 + $0x2f0] sm:$0xff] %v825
                  %v827 = vld [vmem:[%s635 + $0x4b8] sm:$0xff]
                  %828 = vst [vmem:[%s636 + $0x2f8] sm:$0xff] %v827
                  %v829 = vld [vmem:[%s635 + $0x4c0] sm:$0xff]
                  %830 = vst [vmem:[%s636 + $0x300] sm:$0xff] %v829
                  %v831 = vld [vmem:[%s635 + $0x4c8] sm:$0xff]
                  %832 = vst [vmem:[%s636 + $0x308] sm:$0xff] %v831
                  %v833 = vld [vmem:[%s635 + $0x4d0] sm:$0xff]
                  %834 = vst [vmem:[%s636 + $0x310] sm:$0xff] %v833
                  %v835 = vld [vmem:[%s635 + $0x4d8] sm:$0xff]
                  %836 = vst [vmem:[%s636 + $0x318] sm:$0xff] %v835
                  %v837 = vld [vmem:[%s635 + $0x4e0] sm:$0xff]
                  %838 = vst [vmem:[%s636 + $0x320] sm:$0xff] %v837
                  %v839 = vld [vmem:[%s635 + $0x4e8] sm:$0xff]
                  %840 = vst [vmem:[%s636 + $0x328] sm:$0xff] %v839
                  %v841 = vld [vmem:[%s635 + $0x4f0] sm:$0xff]
                  %842 = vst [vmem:[%s636 + $0x330] sm:$0xff] %v841
                  %v843 = vld [vmem:[%s635 + $0x4f8] sm:$0xff]
                  %844 = vst [vmem:[%s636 + $0x338] sm:$0xff] %v843
                  %v845 = vld [vmem:[%s635 + $0x500] sm:$0xff]
                  %846 = vst [vmem:[%s636 + $0x340] sm:$0xff] %v845
                  %v847 = vld [vmem:[%s635 + $0x508] sm:$0xff]
                  %848 = vst [vmem:[%s636 + $0x348] sm:$0xff] %v847
                  %v849 = vld [vmem:[%s635 + $0x510] sm:$0xff]
                  %850 = vst [vmem:[%s636 + $0x350] sm:$0xff] %v849
                  %v851 = vld [vmem:[%s635 + $0x518] sm:$0xff]
                  %852 = vst [vmem:[%s636 + $0x358] sm:$0xff] %v851
                  %v853 = vld [vmem:[%s635 + $0x520] sm:$0xff]
                  %854 = vst [vmem:[%s636 + $0x360] sm:$0xff] %v853
                  %v855 = vld [vmem:[%s635 + $0x528] sm:$0xff]
                  %856 = vst [vmem:[%s636 + $0x368] sm:$0xff] %v855
                  %v857 = vld [vmem:[%s635 + $0x530] sm:$0xff]
                  %858 = vst [vmem:[%s636 + $0x370] sm:$0xff] %v857
                  %v859 = vld [vmem:[%s635 + $0x538] sm:$0xff]
                  %860 = vst [vmem:[%s636 + $0x378] sm:$0xff] %v859
                  %v861 = vld [vmem:[%s635 + $0x700] sm:$0xff]
                  %862 = vst [vmem:[%s636 + $0x380] sm:$0xff] %v861
                  %v863 = vld [vmem:[%s635 + $0x708] sm:$0xff]
                  %864 = vst [vmem:[%s636 + $0x388] sm:$0xff] %v863
                  %v865 = vld [vmem:[%s635 + $0x710] sm:$0xff]
                  %866 = vst [vmem:[%s636 + $0x390] sm:$0xff] %v865
                  %v867 = vld [vmem:[%s635 + $0x718] sm:$0xff]
                  %868 = vst [vmem:[%s636 + $0x398] sm:$0xff] %v867
                  %v869 = vld [vmem:[%s635 + $0x720] sm:$0xff]
                  %870 = vst [vmem:[%s636 + $0x3a0] sm:$0xff] %v869
                  %v871 = vld [vmem:[%s635 + $0x728] sm:$0xff]
                  %872 = vst [vmem:[%s636 + $0x3a8] sm:$0xff] %v871
                  %v873 = vld [vmem:[%s635 + $0x730] sm:$0xff]
                  %874 = vst [vmem:[%s636 + $0x3b0] sm:$0xff] %v873
                  %v875 = vld [vmem:[%s635 + $0x738] sm:$0xff]
                  %876 = vst [vmem:[%s636 + $0x3b8] sm:$0xff] %v875
                  %v877 = vld [vmem:[%s635 + $0x740] sm:$0xff]
                  %878 = vst [vmem:[%s636 + $0x3c0] sm:$0xff] %v877
                  %v879 = vld [vmem:[%s635 + $0x748] sm:$0xff]
                  %880 = vst [vmem:[%s636 + $0x3c8] sm:$0xff] %v879
                  %v881 = vld [vmem:[%s635 + $0x750] sm:$0xff]
                  %882 = vst [vmem:[%s636 + $0x3d0] sm:$0xff] %v881
                  %v883 = vld [vmem:[%s635 + $0x758] sm:$0xff]
                  %884 = vst [vmem:[%s636 + $0x3d8] sm:$0xff] %v883
                  %v885 = vld [vmem:[%s635 + $0x760] sm:$0xff]
                  %886 = vst [vmem:[%s636 + $0x3e0] sm:$0xff] %v885
                  %v887 = vld [vmem:[%s635 + $0x768] sm:$0xff]
                  %888 = vst [vmem:[%s636 + $0x3e8] sm:$0xff] %v887
                  %v889 = vld [vmem:[%s635 + $0x770] sm:$0xff]
                  %890 = vst [vmem:[%s636 + $0x3f0] sm:$0xff] %v889
                  %v891 = vld [vmem:[%s635 + $0x778] sm:$0xff]
                  %892 = vst [vmem:[%s636 + $0x3f8] sm:$0xff] %v891
                  %v893 = vld [vmem:[%s635 + $0x780] sm:$0xff]
                  %894 = vst [vmem:[%s636 + $0x400] sm:$0xff] %v893
                  %v895 = vld [vmem:[%s635 + $0x788] sm:$0xff]
                  %896 = vst [vmem:[%s636 + $0x408] sm:$0xff] %v895
                  %v897 = vld [vmem:[%s635 + $0x790] sm:$0xff]
                  %898 = vst [vmem:[%s636 + $0x410] sm:$0xff] %v897
                  %v899 = vld [vmem:[%s635 + $0x798] sm:$0xff]
                  %900 = vst [vmem:[%s636 + $0x418] sm:$0xff] %v899
                  %v901 = vld [vmem:[%s635 + $0x7a0] sm:$0xff]
                  %902 = vst [vmem:[%s636 + $0x420] sm:$0xff] %v901
                  %v903 = vld [vmem:[%s635 + $0x7a8] sm:$0xff]
                  %904 = vst [vmem:[%s636 + $0x428] sm:$0xff] %v903
                  %v905 = vld [vmem:[%s635 + $0x7b0] sm:$0xff]
                  %906 = vst [vmem:[%s636 + $0x430] sm:$0xff] %v905
                  %v907 = vld [vmem:[%s635 + $0x7b8] sm:$0xff]
                  %908 = vst [vmem:[%s636 + $0x438] sm:$0xff] %v907
                  %v909 = vld [vmem:[%s635 + $0x7c0] sm:$0xff]
                  %910 = vst [vmem:[%s636 + $0x440] sm:$0xff] %v909
                  %v911 = vld [vmem:[%s635 + $0x7c8] sm:$0xff]
                  %912 = vst [vmem:[%s636 + $0x448] sm:$0xff] %v911
                  %v913 = vld [vmem:[%s635 + $0x7d0] sm:$0xff]
                  %914 = vst [vmem:[%s636 + $0x450] sm:$0xff] %v913
                  %v915 = vld [vmem:[%s635 + $0x7d8] sm:$0xff]
                  %916 = vst [vmem:[%s636 + $0x458] sm:$0xff] %v915
                  %v917 = vld [vmem:[%s635 + $0x7e0] sm:$0xff]
                  %918 = vst [vmem:[%s636 + $0x460] sm:$0xff] %v917
                  %v919 = vld [vmem:[%s635 + $0x7e8] sm:$0xff]
                  %920 = vst [vmem:[%s636 + $0x468] sm:$0xff] %v919
                  %v921 = vld [vmem:[%s635 + $0x7f0] sm:$0xff]
                  %922 = vst [vmem:[%s636 + $0x470] sm:$0xff] %v921
                  %v923 = vld [vmem:[%s635 + $0x7f8] sm:$0xff]
                  %924 = vst [vmem:[%s636 + $0x478] sm:$0xff] %v923
                  %v925 = vld [vmem:[%s635 + $0x800] sm:$0xff]
                  %926 = vst [vmem:[%s636 + $0x480] sm:$0xff] %v925
                  %v927 = vld [vmem:[%s635 + $0x808] sm:$0xff]
                  %928 = vst [vmem:[%s636 + $0x488] sm:$0xff] %v927
                  %v929 = vld [vmem:[%s635 + $0x810] sm:$0xff]
                  %930 = vst [vmem:[%s636 + $0x490] sm:$0xff] %v929
                  %v931 = vld [vmem:[%s635 + $0x818] sm:$0xff]
                  %932 = vst [vmem:[%s636 + $0x498] sm:$0xff] %v931
                  %v933 = vld [vmem:[%s635 + $0x820] sm:$0xff]
                  %934 = vst [vmem:[%s636 + $0x4a0] sm:$0xff] %v933
                  %v935 = vld [vmem:[%s635 + $0x828] sm:$0xff]
                  %936 = vst [vmem:[%s636 + $0x4a8] sm:$0xff] %v935
                  %v937 = vld [vmem:[%s635 + $0x830] sm:$0xff]
                  %938 = vst [vmem:[%s636 + $0x4b0] sm:$0xff] %v937
                  %v939 = vld [vmem:[%s635 + $0x838] sm:$0xff]
                  %940 = vst [vmem:[%s636 + $0x4b8] sm:$0xff] %v939
                  %v941 = vld [vmem:[%s635 + $0x840] sm:$0xff]
                  %942 = vst [vmem:[%s636 + $0x4c0] sm:$0xff] %v941
                  %v943 = vld [vmem:[%s635 + $0x848] sm:$0xff]
                  %944 = vst [vmem:[%s636 + $0x4c8] sm:$0xff] %v943
                  %v945 = vld [vmem:[%s635 + $0x850] sm:$0xff]
                  %946 = vst [vmem:[%s636 + $0x4d0] sm:$0xff] %v945
                  %v947 = vld [vmem:[%s635 + $0x858] sm:$0xff]
                  %948 = vst [vmem:[%s636 + $0x4d8] sm:$0xff] %v947
                  %v949 = vld [vmem:[%s635 + $0x860] sm:$0xff]
                  %950 = vst [vmem:[%s636 + $0x4e0] sm:$0xff] %v949
                  %v951 = vld [vmem:[%s635 + $0x868] sm:$0xff]
                  %952 = vst [vmem:[%s636 + $0x4e8] sm:$0xff] %v951
                  %v953 = vld [vmem:[%s635 + $0x870] sm:$0xff]
                  %954 = vst [vmem:[%s636 + $0x4f0] sm:$0xff] %v953
                  %v955 = vld [vmem:[%s635 + $0x878] sm:$0xff]
                  %956 = vst [vmem:[%s636 + $0x4f8] sm:$0xff] %v955
                  %v957 = vld [vmem:[%s635 + $0x880] sm:$0xff]
                  %958 = vst [vmem:[%s636 + $0x500] sm:$0xff] %v957
                  %v959 = vld [vmem:[%s635 + $0x888] sm:$0xff]
                  %960 = vst [vmem:[%s636 + $0x508] sm:$0xff] %v959
                  %v961 = vld [vmem:[%s635 + $0x890] sm:$0xff]
                  %962 = vst [vmem:[%s636 + $0x510] sm:$0xff] %v961
                  %v963 = vld [vmem:[%s635 + $0x898] sm:$0xff]
                  %964 = vst [vmem:[%s636 + $0x518] sm:$0xff] %v963
                  %v965 = vld [vmem:[%s635 + $0x8a0] sm:$0xff]
                  %966 = vst [vmem:[%s636 + $0x520] sm:$0xff] %v965
                  %v967 = vld [vmem:[%s635 + $0x8a8] sm:$0xff]
                  %968 = vst [vmem:[%s636 + $0x528] sm:$0xff] %v967
                  %v969 = vld [vmem:[%s635 + $0x8b0] sm:$0xff]
                  %970 = vst [vmem:[%s636 + $0x530] sm:$0xff] %v969
                  %v971 = vld [vmem:[%s635 + $0x8b8] sm:$0xff]
                  %972 = vst [vmem:[%s636 + $0x538] sm:$0xff] %v971
                  %v973 = vld [vmem:[%s635 + $0xa80] sm:$0xff]
                  %974 = vst [vmem:[%s636 + $0x540] sm:$0xff] %v973
                  %v975 = vld [vmem:[%s635 + $0xa88] sm:$0xff]
                  %976 = vst [vmem:[%s636 + $0x548] sm:$0xff] %v975
                  %v977 = vld [vmem:[%s635 + $0xa90] sm:$0xff]
                  %978 = vst [vmem:[%s636 + $0x550] sm:$0xff] %v977
                  %v979 = vld [vmem:[%s635 + $0xa98] sm:$0xff]
                  %980 = vst [vmem:[%s636 + $0x558] sm:$0xff] %v979
                  %v981 = vld [vmem:[%s635 + $0xaa0] sm:$0xff]
                  %982 = vst [vmem:[%s636 + $0x560] sm:$0xff] %v981
                  %v983 = vld [vmem:[%s635 + $0xaa8] sm:$0xff]
                  %984 = vst [vmem:[%s636 + $0x568] sm:$0xff] %v983
                  %v985 = vld [vmem:[%s635 + $0xab0] sm:$0xff]
                  %986 = vst [vmem:[%s636 + $0x570] sm:$0xff] %v985
                  %v987 = vld [vmem:[%s635 + $0xab8] sm:$0xff]
                  %988 = vst [vmem:[%s636 + $0x578] sm:$0xff] %v987
                  %v989 = vld [vmem:[%s635 + $0xac0] sm:$0xff]
                  %990 = vst [vmem:[%s636 + $0x580] sm:$0xff] %v989
                  %v991 = vld [vmem:[%s635 + $0xac8] sm:$0xff]
                  %992 = vst [vmem:[%s636 + $0x588] sm:$0xff] %v991
                  %v993 = vld [vmem:[%s635 + $0xad0] sm:$0xff]
                  %994 = vst [vmem:[%s636 + $0x590] sm:$0xff] %v993
                  %v995 = vld [vmem:[%s635 + $0xad8] sm:$0xff]
                  %996 = vst [vmem:[%s636 + $0x598] sm:$0xff] %v995
                  %v997 = vld [vmem:[%s635 + $0xae0] sm:$0xff]
                  %998 = vst [vmem:[%s636 + $0x5a0] sm:$0xff] %v997
                  %v999 = vld [vmem:[%s635 + $0xae8] sm:$0xff]
                  %1000 = vst [vmem:[%s636 + $0x5a8] sm:$0xff] %v999
                  %v1001 = vld [vmem:[%s635 + $0xaf0] sm:$0xff]
                  %1002 = vst [vmem:[%s636 + $0x5b0] sm:$0xff] %v1001
                  %v1003 = vld [vmem:[%s635 + $0xaf8] sm:$0xff]
                  %1004 = vst [vmem:[%s636 + $0x5b8] sm:$0xff] %v1003
                  %v1005 = vld [vmem:[%s635 + $0xb00] sm:$0xff]
                  %1006 = vst [vmem:[%s636 + $0x5c0] sm:$0xff] %v1005
                  %v1007 = vld [vmem:[%s635 + $0xb08] sm:$0xff]
                  %1008 = vst [vmem:[%s636 + $0x5c8] sm:$0xff] %v1007
                  %v1009 = vld [vmem:[%s635 + $0xb10] sm:$0xff]
                  %1010 = vst [vmem:[%s636 + $0x5d0] sm:$0xff] %v1009
                  %v1011 = vld [vmem:[%s635 + $0xb18] sm:$0xff]
                  %1012 = vst [vmem:[%s636 + $0x5d8] sm:$0xff] %v1011
                  %v1013 = vld [vmem:[%s635 + $0xb20] sm:$0xff]
                  %1014 = vst [vmem:[%s636 + $0x5e0] sm:$0xff] %v1013
                  %v1015 = vld [vmem:[%s635 + $0xb28] sm:$0xff]
                  %1016 = vst [vmem:[%s636 + $0x5e8] sm:$0xff] %v1015
                  %v1017 = vld [vmem:[%s635 + $0xb30] sm:$0xff]
                  %1018 = vst [vmem:[%s636 + $0x5f0] sm:$0xff] %v1017
                  %v1019 = vld [vmem:[%s635 + $0xb38] sm:$0xff]
                  %1020 = vst [vmem:[%s636 + $0x5f8] sm:$0xff] %v1019
                  %v1021 = vld [vmem:[%s635 + $0xb40] sm:$0xff]
                  %1022 = vst [vmem:[%s636 + $0x600] sm:$0xff] %v1021
                  %v1023 = vld [vmem:[%s635 + $0xb48] sm:$0xff]
                  %1024 = vst [vmem:[%s636 + $0x608] sm:$0xff] %v1023
                  %v1025 = vld [vmem:[%s635 + $0xb50] sm:$0xff]
                  %1026 = vst [vmem:[%s636 + $0x610] sm:$0xff] %v1025
                  %v1027 = vld [vmem:[%s635 + $0xb58] sm:$0xff]
                  %1028 = vst [vmem:[%s636 + $0x618] sm:$0xff] %v1027
                  %v1029 = vld [vmem:[%s635 + $0xb60] sm:$0xff]
                  %1030 = vst [vmem:[%s636 + $0x620] sm:$0xff] %v1029
                  %v1031 = vld [vmem:[%s635 + $0xb68] sm:$0xff]
                  %1032 = vst [vmem:[%s636 + $0x628] sm:$0xff] %v1031
                  %v1033 = vld [vmem:[%s635 + $0xb70] sm:$0xff]
                  %1034 = vst [vmem:[%s636 + $0x630] sm:$0xff] %v1033
                  %v1035 = vld [vmem:[%s635 + $0xb78] sm:$0xff]
                  %1036 = vst [vmem:[%s636 + $0x638] sm:$0xff] %v1035
                  %v1037 = vld [vmem:[%s635 + $0xb80] sm:$0xff]
                  %1038 = vst [vmem:[%s636 + $0x640] sm:$0xff] %v1037
                  %v1039 = vld [vmem:[%s635 + $0xb88] sm:$0xff]
                  %1040 = vst [vmem:[%s636 + $0x648] sm:$0xff] %v1039
                  %v1041 = vld [vmem:[%s635 + $0xb90] sm:$0xff]
                  %1042 = vst [vmem:[%s636 + $0x650] sm:$0xff] %v1041
                  %v1043 = vld [vmem:[%s635 + $0xb98] sm:$0xff]
                  %1044 = vst [vmem:[%s636 + $0x658] sm:$0xff] %v1043
                  %v1045 = vld [vmem:[%s635 + $0xba0] sm:$0xff]
                  %1046 = vst [vmem:[%s636 + $0x660] sm:$0xff] %v1045
                  %v1047 = vld [vmem:[%s635 + $0xba8] sm:$0xff]
                  %1048 = vst [vmem:[%s636 + $0x668] sm:$0xff] %v1047
                  %v1049 = vld [vmem:[%s635 + $0xbb0] sm:$0xff]
                  %1050 = vst [vmem:[%s636 + $0x670] sm:$0xff] %v1049
                  %v1051 = vld [vmem:[%s635 + $0xbb8] sm:$0xff]
                  %1052 = vst [vmem:[%s636 + $0x678] sm:$0xff] %v1051
                  %v1053 = vld [vmem:[%s635 + $0xbc0] sm:$0xff]
                  %1054 = vst [vmem:[%s636 + $0x680] sm:$0xff] %v1053
                  %v1055 = vld [vmem:[%s635 + $0xbc8] sm:$0xff]
                  %1056 = vst [vmem:[%s636 + $0x688] sm:$0xff] %v1055
                  %v1057 = vld [vmem:[%s635 + $0xbd0] sm:$0xff]
                  %1058 = vst [vmem:[%s636 + $0x690] sm:$0xff] %v1057
                  %v1059 = vld [vmem:[%s635 + $0xbd8] sm:$0xff]
                  %1060 = vst [vmem:[%s636 + $0x698] sm:$0xff] %v1059
                  %v1061 = vld [vmem:[%s635 + $0xbe0] sm:$0xff]
                  %1062 = vst [vmem:[%s636 + $0x6a0] sm:$0xff] %v1061
                  %v1063 = vld [vmem:[%s635 + $0xbe8] sm:$0xff]
                  %1064 = vst [vmem:[%s636 + $0x6a8] sm:$0xff] %v1063
                  %v1065 = vld [vmem:[%s635 + $0xbf0] sm:$0xff]
                  %1066 = vst [vmem:[%s636 + $0x6b0] sm:$0xff] %v1065
                  %v1067 = vld [vmem:[%s635 + $0xbf8] sm:$0xff]
                  %1068 = vst [vmem:[%s636 + $0x6b8] sm:$0xff] %v1067
                  %v1069 = vld [vmem:[%s635 + $0xc00] sm:$0xff]
                  %1070 = vst [vmem:[%s636 + $0x6c0] sm:$0xff] %v1069
                  %v1071 = vld [vmem:[%s635 + $0xc08] sm:$0xff]
                  %1072 = vst [vmem:[%s636 + $0x6c8] sm:$0xff] %v1071
                  %v1073 = vld [vmem:[%s635 + $0xc10] sm:$0xff]
                  %1074 = vst [vmem:[%s636 + $0x6d0] sm:$0xff] %v1073
                  %v1075 = vld [vmem:[%s635 + $0xc18] sm:$0xff]
                  %1076 = vst [vmem:[%s636 + $0x6d8] sm:$0xff] %v1075
                  %v1077 = vld [vmem:[%s635 + $0xc20] sm:$0xff]
                  %1078 = vst [vmem:[%s636 + $0x6e0] sm:$0xff] %v1077
                  %v1079 = vld [vmem:[%s635 + $0xc28] sm:$0xff]
                  %1080 = vst [vmem:[%s636 + $0x6e8] sm:$0xff] %v1079
                  %v1081 = vld [vmem:[%s635 + $0xc30] sm:$0xff]
                  %1082 = vst [vmem:[%s636 + $0x6f0] sm:$0xff] %v1081
                  %v1083 = vld [vmem:[%s635 + $0xc38] sm:$0xff]
                  %1084 = vst [vmem:[%s636 + $0x6f8] sm:$0xff] %v1083
                $region60: #{fused_forward.1} parent=54 // loop_footer
                  %s634 = sadd.s32 1, %s630
                $region61: #{fused_forward.1} parent=54 // loop_footer_branch
                  %629 = sbr.rel target = $region57
                $region62: #{fused_forward.1} parent=54 // loop_exit
                  _
              $region55: #{fused_forward.1} parent=39 // pred_fallthru
                _
              // Predicated region
              $region63: #{fused_forward.1} parent=39 // pred_check
                _
              $region64: #{fused_forward.1} parent=39 // pred_check_branch
                %1086 = sbr.rel target = $region66
              $region65: #{fused_forward.1} parent=39 // pred_region
                _
              $region66: #{fused_forward.1} parent=39 // pred_fallthru
                _
            $region40: #{fused_forward.1} parent=35 // pred_fallthru
              _
            // Predicated region
            $region41: #{fused_forward.1} parent=35 // pred_check
              _
            $region42: #{fused_forward.1} parent=35 // pred_check_branch
              %169 = sbr.rel target = $region44
            $region43: #{fused_forward.1} parent=35 // pred_region
              loop: start=0, step=1, limit=1
              $region45: #{fused_forward.1} parent=43 // loop_pre_header
                _
              $region46: #{fused_forward.1} parent=43 // loop_header
                %s172 = sphi 0, %s176
                %p173 = scmp.ge.s32.totalorder %s172, 1
                %s177 = sphi %s163, %s163
                %s178 = sphi %s159, %s159
              $region47: #{fused_forward.1} parent=43 // loop_header_branch
                %175 = sbr.rel (%p173) target = $region51
              $region48: #{fused_forward.1} parent=43 // loop_body
                %v179 = vld [vmem:[%s177] sm:$0xff]
                %180 = vst [vmem:[%s178] sm:$0xff] %v179
                %v181 = vld [vmem:[%s177 + $0x8] sm:$0xff]
                %182 = vst [vmem:[%s178 + $0x8] sm:$0xff] %v181
                %v183 = vld [vmem:[%s177 + $0x10] sm:$0xff]
                %184 = vst [vmem:[%s178 + $0x10] sm:$0xff] %v183
                %v185 = vld [vmem:[%s177 + $0x18] sm:$0xff]
                %186 = vst [vmem:[%s178 + $0x18] sm:$0xff] %v185
                %v187 = vld [vmem:[%s177 + $0x20] sm:$0xff]
                %188 = vst [vmem:[%s178 + $0x20] sm:$0xff] %v187
                %v189 = vld [vmem:[%s177 + $0x28] sm:$0xff]
                %190 = vst [vmem:[%s178 + $0x28] sm:$0xff] %v189
                %v191 = vld [vmem:[%s177 + $0x30] sm:$0xff]
                %192 = vst [vmem:[%s178 + $0x30] sm:$0xff] %v191
                %v193 = vld [vmem:[%s177 + $0x38] sm:$0xff]
                %194 = vst [vmem:[%s178 + $0x38] sm:$0xff] %v193
                %v195 = vld [vmem:[%s177 + $0x40] sm:$0xff]
                %196 = vst [vmem:[%s178 + $0x40] sm:$0xff] %v195
                %v197 = vld [vmem:[%s177 + $0x48] sm:$0xff]
                %198 = vst [vmem:[%s178 + $0x48] sm:$0xff] %v197
                %v199 = vld [vmem:[%s177 + $0x50] sm:$0xff]
                %200 = vst [vmem:[%s178 + $0x50] sm:$0xff] %v199
                %v201 = vld [vmem:[%s177 + $0x58] sm:$0xff]
                %202 = vst [vmem:[%s178 + $0x58] sm:$0xff] %v201
                %v203 = vld [vmem:[%s177 + $0x60] sm:$0xff]
                %204 = vst [vmem:[%s178 + $0x60] sm:$0xff] %v203
                %v205 = vld [vmem:[%s177 + $0x68] sm:$0xff]
                %206 = vst [vmem:[%s178 + $0x68] sm:$0xff] %v205
                %v207 = vld [vmem:[%s177 + $0x70] sm:$0xff]
                %208 = vst [vmem:[%s178 + $0x70] sm:$0xff] %v207
                %v209 = vld [vmem:[%s177 + $0x78] sm:$0xff]
                %210 = vst [vmem:[%s178 + $0x78] sm:$0xff] %v209
                %v211 = vld [vmem:[%s177 + $0x80] sm:$0xff]
                %212 = vst [vmem:[%s178 + $0x80] sm:$0xff] %v211
                %v213 = vld [vmem:[%s177 + $0x88] sm:$0xff]
                %214 = vst [vmem:[%s178 + $0x88] sm:$0xff] %v213
                %v215 = vld [vmem:[%s177 + $0x90] sm:$0xff]
                %216 = vst [vmem:[%s178 + $0x90] sm:$0xff] %v215
                %v217 = vld [vmem:[%s177 + $0x98] sm:$0xff]
                %218 = vst [vmem:[%s178 + $0x98] sm:$0xff] %v217
                %v219 = vld [vmem:[%s177 + $0xa0] sm:$0xff]
                %220 = vst [vmem:[%s178 + $0xa0] sm:$0xff] %v219
                %v221 = vld [vmem:[%s177 + $0xa8] sm:$0xff]
                %222 = vst [vmem:[%s178 + $0xa8] sm:$0xff] %v221
                %v223 = vld [vmem:[%s177 + $0xb0] sm:$0xff]
                %224 = vst [vmem:[%s178 + $0xb0] sm:$0xff] %v223
                %v225 = vld [vmem:[%s177 + $0xb8] sm:$0xff]
                %226 = vst [vmem:[%s178 + $0xb8] sm:$0xff] %v225
                %v227 = vld [vmem:[%s177 + $0xc0] sm:$0xff]
                %228 = vst [vmem:[%s178 + $0xc0] sm:$0xff] %v227
                %v229 = vld [vmem:[%s177 + $0xc8] sm:$0xff]
                %230 = vst [vmem:[%s178 + $0xc8] sm:$0xff] %v229
                %v231 = vld [vmem:[%s177 + $0xd0] sm:$0xff]
                %232 = vst [vmem:[%s178 + $0xd0] sm:$0xff] %v231
                %v233 = vld [vmem:[%s177 + $0xd8] sm:$0xff]
                %234 = vst [vmem:[%s178 + $0xd8] sm:$0xff] %v233
                %v235 = vld [vmem:[%s177 + $0xe0] sm:$0xff]
                %236 = vst [vmem:[%s178 + $0xe0] sm:$0xff] %v235
                %v237 = vld [vmem:[%s177 + $0xe8] sm:$0xff]
                %238 = vst [vmem:[%s178 + $0xe8] sm:$0xff] %v237
                %v239 = vld [vmem:[%s177 + $0xf0] sm:$0xff]
                %240 = vst [vmem:[%s178 + $0xf0] sm:$0xff] %v239
                %v241 = vld [vmem:[%s177 + $0xf8] sm:$0xff]
                %242 = vst [vmem:[%s178 + $0xf8] sm:$0xff] %v241
                %v243 = vld [vmem:[%s177 + $0x100] sm:$0xff]
                %244 = vst [vmem:[%s178 + $0x100] sm:$0xff] %v243
                %v245 = vld [vmem:[%s177 + $0x108] sm:$0xff]
                %246 = vst [vmem:[%s178 + $0x108] sm:$0xff] %v245
                %v247 = vld [vmem:[%s177 + $0x110] sm:$0xff]
                %248 = vst [vmem:[%s178 + $0x110] sm:$0xff] %v247
                %v249 = vld [vmem:[%s177 + $0x118] sm:$0xff]
                %250 = vst [vmem:[%s178 + $0x118] sm:$0xff] %v249
                %v251 = vld [vmem:[%s177 + $0x120] sm:$0xff]
                %252 = vst [vmem:[%s178 + $0x120] sm:$0xff] %v251
                %v253 = vld [vmem:[%s177 + $0x128] sm:$0xff]
                %254 = vst [vmem:[%s178 + $0x128] sm:$0xff] %v253
                %v255 = vld [vmem:[%s177 + $0x130] sm:$0xff]
                %256 = vst [vmem:[%s178 + $0x130] sm:$0xff] %v255
                %v257 = vld [vmem:[%s177 + $0x138] sm:$0xff]
                %258 = vst [vmem:[%s178 + $0x138] sm:$0xff] %v257
                %v259 = vld [vmem:[%s177 + $0x140] sm:$0xff]
                %260 = vst [vmem:[%s178 + $0x140] sm:$0xff] %v259
                %v261 = vld [vmem:[%s177 + $0x148] sm:$0xff]
                %262 = vst [vmem:[%s178 + $0x148] sm:$0xff] %v261
                %v263 = vld [vmem:[%s177 + $0x150] sm:$0xff]
                %264 = vst [vmem:[%s178 + $0x150] sm:$0xff] %v263
                %v265 = vld [vmem:[%s177 + $0x158] sm:$0xff]
                %266 = vst [vmem:[%s178 + $0x158] sm:$0xff] %v265
                %v267 = vld [vmem:[%s177 + $0x160] sm:$0xff]
                %268 = vst [vmem:[%s178 + $0x160] sm:$0xff] %v267
                %v269 = vld [vmem:[%s177 + $0x168] sm:$0xff]
                %270 = vst [vmem:[%s178 + $0x168] sm:$0xff] %v269
                %v271 = vld [vmem:[%s177 + $0x170] sm:$0xff]
                %272 = vst [vmem:[%s178 + $0x170] sm:$0xff] %v271
                %v273 = vld [vmem:[%s177 + $0x178] sm:$0xff]
                %274 = vst [vmem:[%s178 + $0x178] sm:$0xff] %v273
                %v275 = vld [vmem:[%s177 + $0x180] sm:$0xff]
                %276 = vst [vmem:[%s178 + $0x180] sm:$0xff] %v275
                %v277 = vld [vmem:[%s177 + $0x188] sm:$0xff]
                %278 = vst [vmem:[%s178 + $0x188] sm:$0xff] %v277
                %v279 = vld [vmem:[%s177 + $0x190] sm:$0xff]
                %280 = vst [vmem:[%s178 + $0x190] sm:$0xff] %v279
                %v281 = vld [vmem:[%s177 + $0x198] sm:$0xff]
                %282 = vst [vmem:[%s178 + $0x198] sm:$0xff] %v281
                %v283 = vld [vmem:[%s177 + $0x1a0] sm:$0xff]
                %284 = vst [vmem:[%s178 + $0x1a0] sm:$0xff] %v283
                %v285 = vld [vmem:[%s177 + $0x1a8] sm:$0xff]
                %286 = vst [vmem:[%s178 + $0x1a8] sm:$0xff] %v285
                %v287 = vld [vmem:[%s177 + $0x1b0] sm:$0xff]
                %288 = vst [vmem:[%s178 + $0x1b0] sm:$0xff] %v287
                %v289 = vld [vmem:[%s177 + $0x1b8] sm:$0xff]
                %290 = vst [vmem:[%s178 + $0x1b8] sm:$0xff] %v289
                %v291 = vld [vmem:[%s177 + $0x380] sm:$0xff]
                %292 = vst [vmem:[%s178 + $0x1c0] sm:$0xff] %v291
                %v293 = vld [vmem:[%s177 + $0x388] sm:$0xff]
                %294 = vst [vmem:[%s178 + $0x1c8] sm:$0xff] %v293
                %v295 = vld [vmem:[%s177 + $0x390] sm:$0xff]
                %296 = vst [vmem:[%s178 + $0x1d0] sm:$0xff] %v295
                %v297 = vld [vmem:[%s177 + $0x398] sm:$0xff]
                %298 = vst [vmem:[%s178 + $0x1d8] sm:$0xff] %v297
                %v299 = vld [vmem:[%s177 + $0x3a0] sm:$0xff]
                %300 = vst [vmem:[%s178 + $0x1e0] sm:$0xff] %v299
                %v301 = vld [vmem:[%s177 + $0x3a8] sm:$0xff]
                %302 = vst [vmem:[%s178 + $0x1e8] sm:$0xff] %v301
                %v303 = vld [vmem:[%s177 + $0x3b0] sm:$0xff]
                %304 = vst [vmem:[%s178 + $0x1f0] sm:$0xff] %v303
                %v305 = vld [vmem:[%s177 + $0x3b8] sm:$0xff]
                %306 = vst [vmem:[%s178 + $0x1f8] sm:$0xff] %v305
                %v307 = vld [vmem:[%s177 + $0x3c0] sm:$0xff]
                %308 = vst [vmem:[%s178 + $0x200] sm:$0xff] %v307
                %v309 = vld [vmem:[%s177 + $0x3c8] sm:$0xff]
                %310 = vst [vmem:[%s178 + $0x208] sm:$0xff] %v309
                %v311 = vld [vmem:[%s177 + $0x3d0] sm:$0xff]
                %312 = vst [vmem:[%s178 + $0x210] sm:$0xff] %v311
                %v313 = vld [vmem:[%s177 + $0x3d8] sm:$0xff]
                %314 = vst [vmem:[%s178 + $0x218] sm:$0xff] %v313
                %v315 = vld [vmem:[%s177 + $0x3e0] sm:$0xff]
                %316 = vst [vmem:[%s178 + $0x220] sm:$0xff] %v315
                %v317 = vld [vmem:[%s177 + $0x3e8] sm:$0xff]
                %318 = vst [vmem:[%s178 + $0x228] sm:$0xff] %v317
                %v319 = vld [vmem:[%s177 + $0x3f0] sm:$0xff]
                %320 = vst [vmem:[%s178 + $0x230] sm:$0xff] %v319
                %v321 = vld [vmem:[%s177 + $0x3f8] sm:$0xff]
                %322 = vst [vmem:[%s178 + $0x238] sm:$0xff] %v321
                %v323 = vld [vmem:[%s177 + $0x400] sm:$0xff]
                %324 = vst [vmem:[%s178 + $0x240] sm:$0xff] %v323
                %v325 = vld [vmem:[%s177 + $0x408] sm:$0xff]
                %326 = vst [vmem:[%s178 + $0x248] sm:$0xff] %v325
                %v327 = vld [vmem:[%s177 + $0x410] sm:$0xff]
                %328 = vst [vmem:[%s178 + $0x250] sm:$0xff] %v327
                %v329 = vld [vmem:[%s177 + $0x418] sm:$0xff]
                %330 = vst [vmem:[%s178 + $0x258] sm:$0xff] %v329
                %v331 = vld [vmem:[%s177 + $0x420] sm:$0xff]
                %332 = vst [vmem:[%s178 + $0x260] sm:$0xff] %v331
                %v333 = vld [vmem:[%s177 + $0x428] sm:$0xff]
                %334 = vst [vmem:[%s178 + $0x268] sm:$0xff] %v333
                %v335 = vld [vmem:[%s177 + $0x430] sm:$0xff]
                %336 = vst [vmem:[%s178 + $0x270] sm:$0xff] %v335
                %v337 = vld [vmem:[%s177 + $0x438] sm:$0xff]
                %338 = vst [vmem:[%s178 + $0x278] sm:$0xff] %v337
                %v339 = vld [vmem:[%s177 + $0x440] sm:$0xff]
                %340 = vst [vmem:[%s178 + $0x280] sm:$0xff] %v339
                %v341 = vld [vmem:[%s177 + $0x448] sm:$0xff]
                %342 = vst [vmem:[%s178 + $0x288] sm:$0xff] %v341
                %v343 = vld [vmem:[%s177 + $0x450] sm:$0xff]
                %344 = vst [vmem:[%s178 + $0x290] sm:$0xff] %v343
                %v345 = vld [vmem:[%s177 + $0x458] sm:$0xff]
                %346 = vst [vmem:[%s178 + $0x298] sm:$0xff] %v345
                %v347 = vld [vmem:[%s177 + $0x460] sm:$0xff]
                %348 = vst [vmem:[%s178 + $0x2a0] sm:$0xff] %v347
                %v349 = vld [vmem:[%s177 + $0x468] sm:$0xff]
                %350 = vst [vmem:[%s178 + $0x2a8] sm:$0xff] %v349
                %v351 = vld [vmem:[%s177 + $0x470] sm:$0xff]
                %352 = vst [vmem:[%s178 + $0x2b0] sm:$0xff] %v351
                %v353 = vld [vmem:[%s177 + $0x478] sm:$0xff]
                %354 = vst [vmem:[%s178 + $0x2b8] sm:$0xff] %v353
                %v355 = vld [vmem:[%s177 + $0x480] sm:$0xff]
                %356 = vst [vmem:[%s178 + $0x2c0] sm:$0xff] %v355
                %v357 = vld [vmem:[%s177 + $0x488] sm:$0xff]
                %358 = vst [vmem:[%s178 + $0x2c8] sm:$0xff] %v357
                %v359 = vld [vmem:[%s177 + $0x490] sm:$0xff]
                %360 = vst [vmem:[%s178 + $0x2d0] sm:$0xff] %v359
                %v361 = vld [vmem:[%s177 + $0x498] sm:$0xff]
                %362 = vst [vmem:[%s178 + $0x2d8] sm:$0xff] %v361
                %v363 = vld [vmem:[%s177 + $0x4a0] sm:$0xff]
                %364 = vst [vmem:[%s178 + $0x2e0] sm:$0xff] %v363
                %v365 = vld [vmem:[%s177 + $0x4a8] sm:$0xff]
                %366 = vst [vmem:[%s178 + $0x2e8] sm:$0xff] %v365
                %v367 = vld [vmem:[%s177 + $0x4b0] sm:$0xff]
                %368 = vst [vmem:[%s178 + $0x2f0] sm:$0xff] %v367
                %v369 = vld [vmem:[%s177 + $0x4b8] sm:$0xff]
                %370 = vst [vmem:[%s178 + $0x2f8] sm:$0xff] %v369
                %v371 = vld [vmem:[%s177 + $0x4c0] sm:$0xff]
                %372 = vst [vmem:[%s178 + $0x300] sm:$0xff] %v371
                %v373 = vld [vmem:[%s177 + $0x4c8] sm:$0xff]
                %374 = vst [vmem:[%s178 + $0x308] sm:$0xff] %v373
                %v375 = vld [vmem:[%s177 + $0x4d0] sm:$0xff]
                %376 = vst [vmem:[%s178 + $0x310] sm:$0xff] %v375
                %v377 = vld [vmem:[%s177 + $0x4d8] sm:$0xff]
                %378 = vst [vmem:[%s178 + $0x318] sm:$0xff] %v377
                %v379 = vld [vmem:[%s177 + $0x4e0] sm:$0xff]
                %380 = vst [vmem:[%s178 + $0x320] sm:$0xff] %v379
                %v381 = vld [vmem:[%s177 + $0x4e8] sm:$0xff]
                %382 = vst [vmem:[%s178 + $0x328] sm:$0xff] %v381
                %v383 = vld [vmem:[%s177 + $0x4f0] sm:$0xff]
                %384 = vst [vmem:[%s178 + $0x330] sm:$0xff] %v383
                %v385 = vld [vmem:[%s177 + $0x4f8] sm:$0xff]
                %386 = vst [vmem:[%s178 + $0x338] sm:$0xff] %v385
                %v387 = vld [vmem:[%s177 + $0x500] sm:$0xff]
                %388 = vst [vmem:[%s178 + $0x340] sm:$0xff] %v387
                %v389 = vld [vmem:[%s177 + $0x508] sm:$0xff]
                %390 = vst [vmem:[%s178 + $0x348] sm:$0xff] %v389
                %v391 = vld [vmem:[%s177 + $0x510] sm:$0xff]
                %392 = vst [vmem:[%s178 + $0x350] sm:$0xff] %v391
                %v393 = vld [vmem:[%s177 + $0x518] sm:$0xff]
                %394 = vst [vmem:[%s178 + $0x358] sm:$0xff] %v393
                %v395 = vld [vmem:[%s177 + $0x520] sm:$0xff]
                %396 = vst [vmem:[%s178 + $0x360] sm:$0xff] %v395
                %v397 = vld [vmem:[%s177 + $0x528] sm:$0xff]
                %398 = vst [vmem:[%s178 + $0x368] sm:$0xff] %v397
                %v399 = vld [vmem:[%s177 + $0x530] sm:$0xff]
                %400 = vst [vmem:[%s178 + $0x370] sm:$0xff] %v399
                %v401 = vld [vmem:[%s177 + $0x538] sm:$0xff]
                %402 = vst [vmem:[%s178 + $0x378] sm:$0xff] %v401
                %v403 = vld [vmem:[%s177 + $0x700] sm:$0xff]
                %404 = vst [vmem:[%s178 + $0x380] sm:$0xff] %v403
                %v405 = vld [vmem:[%s177 + $0x708] sm:$0xff]
                %406 = vst [vmem:[%s178 + $0x388] sm:$0xff] %v405
                %v407 = vld [vmem:[%s177 + $0x710] sm:$0xff]
                %408 = vst [vmem:[%s178 + $0x390] sm:$0xff] %v407
                %v409 = vld [vmem:[%s177 + $0x718] sm:$0xff]
                %410 = vst [vmem:[%s178 + $0x398] sm:$0xff] %v409
                %v411 = vld [vmem:[%s177 + $0x720] sm:$0xff]
                %412 = vst [vmem:[%s178 + $0x3a0] sm:$0xff] %v411
                %v413 = vld [vmem:[%s177 + $0x728] sm:$0xff]
                %414 = vst [vmem:[%s178 + $0x3a8] sm:$0xff] %v413
                %v415 = vld [vmem:[%s177 + $0x730] sm:$0xff]
                %416 = vst [vmem:[%s178 + $0x3b0] sm:$0xff] %v415
                %v417 = vld [vmem:[%s177 + $0x738] sm:$0xff]
                %418 = vst [vmem:[%s178 + $0x3b8] sm:$0xff] %v417
                %v419 = vld [vmem:[%s177 + $0x740] sm:$0xff]
                %420 = vst [vmem:[%s178 + $0x3c0] sm:$0xff] %v419
                %v421 = vld [vmem:[%s177 + $0x748] sm:$0xff]
                %422 = vst [vmem:[%s178 + $0x3c8] sm:$0xff] %v421
                %v423 = vld [vmem:[%s177 + $0x750] sm:$0xff]
                %424 = vst [vmem:[%s178 + $0x3d0] sm:$0xff] %v423
                %v425 = vld [vmem:[%s177 + $0x758] sm:$0xff]
                %426 = vst [vmem:[%s178 + $0x3d8] sm:$0xff] %v425
                %v427 = vld [vmem:[%s177 + $0x760] sm:$0xff]
                %428 = vst [vmem:[%s178 + $0x3e0] sm:$0xff] %v427
                %v429 = vld [vmem:[%s177 + $0x768] sm:$0xff]
                %430 = vst [vmem:[%s178 + $0x3e8] sm:$0xff] %v429
                %v431 = vld [vmem:[%s177 + $0x770] sm:$0xff]
                %432 = vst [vmem:[%s178 + $0x3f0] sm:$0xff] %v431
                %v433 = vld [vmem:[%s177 + $0x778] sm:$0xff]
                %434 = vst [vmem:[%s178 + $0x3f8] sm:$0xff] %v433
                %v435 = vld [vmem:[%s177 + $0x780] sm:$0xff]
                %436 = vst [vmem:[%s178 + $0x400] sm:$0xff] %v435
                %v437 = vld [vmem:[%s177 + $0x788] sm:$0xff]
                %438 = vst [vmem:[%s178 + $0x408] sm:$0xff] %v437
                %v439 = vld [vmem:[%s177 + $0x790] sm:$0xff]
                %440 = vst [vmem:[%s178 + $0x410] sm:$0xff] %v439
                %v441 = vld [vmem:[%s177 + $0x798] sm:$0xff]
                %442 = vst [vmem:[%s178 + $0x418] sm:$0xff] %v441
                %v443 = vld [vmem:[%s177 + $0x7a0] sm:$0xff]
                %444 = vst [vmem:[%s178 + $0x420] sm:$0xff] %v443
                %v445 = vld [vmem:[%s177 + $0x7a8] sm:$0xff]
                %446 = vst [vmem:[%s178 + $0x428] sm:$0xff] %v445
                %v447 = vld [vmem:[%s177 + $0x7b0] sm:$0xff]
                %448 = vst [vmem:[%s178 + $0x430] sm:$0xff] %v447
                %v449 = vld [vmem:[%s177 + $0x7b8] sm:$0xff]
                %450 = vst [vmem:[%s178 + $0x438] sm:$0xff] %v449
                %v451 = vld [vmem:[%s177 + $0x7c0] sm:$0xff]
                %452 = vst [vmem:[%s178 + $0x440] sm:$0xff] %v451
                %v453 = vld [vmem:[%s177 + $0x7c8] sm:$0xff]
                %454 = vst [vmem:[%s178 + $0x448] sm:$0xff] %v453
                %v455 = vld [vmem:[%s177 + $0x7d0] sm:$0xff]
                %456 = vst [vmem:[%s178 + $0x450] sm:$0xff] %v455
                %v457 = vld [vmem:[%s177 + $0x7d8] sm:$0xff]
                %458 = vst [vmem:[%s178 + $0x458] sm:$0xff] %v457
                %v459 = vld [vmem:[%s177 + $0x7e0] sm:$0xff]
                %460 = vst [vmem:[%s178 + $0x460] sm:$0xff] %v459
                %v461 = vld [vmem:[%s177 + $0x7e8] sm:$0xff]
                %462 = vst [vmem:[%s178 + $0x468] sm:$0xff] %v461
                %v463 = vld [vmem:[%s177 + $0x7f0] sm:$0xff]
                %464 = vst [vmem:[%s178 + $0x470] sm:$0xff] %v463
                %v465 = vld [vmem:[%s177 + $0x7f8] sm:$0xff]
                %466 = vst [vmem:[%s178 + $0x478] sm:$0xff] %v465
                %v467 = vld [vmem:[%s177 + $0x800] sm:$0xff]
                %468 = vst [vmem:[%s178 + $0x480] sm:$0xff] %v467
                %v469 = vld [vmem:[%s177 + $0x808] sm:$0xff]
                %470 = vst [vmem:[%s178 + $0x488] sm:$0xff] %v469
                %v471 = vld [vmem:[%s177 + $0x810] sm:$0xff]
                %472 = vst [vmem:[%s178 + $0x490] sm:$0xff] %v471
                %v473 = vld [vmem:[%s177 + $0x818] sm:$0xff]
                %474 = vst [vmem:[%s178 + $0x498] sm:$0xff] %v473
                %v475 = vld [vmem:[%s177 + $0x820] sm:$0xff]
                %476 = vst [vmem:[%s178 + $0x4a0] sm:$0xff] %v475
                %v477 = vld [vmem:[%s177 + $0x828] sm:$0xff]
                %478 = vst [vmem:[%s178 + $0x4a8] sm:$0xff] %v477
                %v479 = vld [vmem:[%s177 + $0x830] sm:$0xff]
                %480 = vst [vmem:[%s178 + $0x4b0] sm:$0xff] %v479
                %v481 = vld [vmem:[%s177 + $0x838] sm:$0xff]
                %482 = vst [vmem:[%s178 + $0x4b8] sm:$0xff] %v481
                %v483 = vld [vmem:[%s177 + $0x840] sm:$0xff]
                %484 = vst [vmem:[%s178 + $0x4c0] sm:$0xff] %v483
                %v485 = vld [vmem:[%s177 + $0x848] sm:$0xff]
                %486 = vst [vmem:[%s178 + $0x4c8] sm:$0xff] %v485
                %v487 = vld [vmem:[%s177 + $0x850] sm:$0xff]
                %488 = vst [vmem:[%s178 + $0x4d0] sm:$0xff] %v487
                %v489 = vld [vmem:[%s177 + $0x858] sm:$0xff]
                %490 = vst [vmem:[%s178 + $0x4d8] sm:$0xff] %v489
                %v491 = vld [vmem:[%s177 + $0x860] sm:$0xff]
                %492 = vst [vmem:[%s178 + $0x4e0] sm:$0xff] %v491
                %v493 = vld [vmem:[%s177 + $0x868] sm:$0xff]
                %494 = vst [vmem:[%s178 + $0x4e8] sm:$0xff] %v493
                %v495 = vld [vmem:[%s177 + $0x870] sm:$0xff]
                %496 = vst [vmem:[%s178 + $0x4f0] sm:$0xff] %v495
                %v497 = vld [vmem:[%s177 + $0x878] sm:$0xff]
                %498 = vst [vmem:[%s178 + $0x4f8] sm:$0xff] %v497
                %v499 = vld [vmem:[%s177 + $0x880] sm:$0xff]
                %500 = vst [vmem:[%s178 + $0x500] sm:$0xff] %v499
                %v501 = vld [vmem:[%s177 + $0x888] sm:$0xff]
                %502 = vst [vmem:[%s178 + $0x508] sm:$0xff] %v501
                %v503 = vld [vmem:[%s177 + $0x890] sm:$0xff]
                %504 = vst [vmem:[%s178 + $0x510] sm:$0xff] %v503
                %v505 = vld [vmem:[%s177 + $0x898] sm:$0xff]
                %506 = vst [vmem:[%s178 + $0x518] sm:$0xff] %v505
                %v507 = vld [vmem:[%s177 + $0x8a0] sm:$0xff]
                %508 = vst [vmem:[%s178 + $0x520] sm:$0xff] %v507
                %v509 = vld [vmem:[%s177 + $0x8a8] sm:$0xff]
                %510 = vst [vmem:[%s178 + $0x528] sm:$0xff] %v509
                %v511 = vld [vmem:[%s177 + $0x8b0] sm:$0xff]
                %512 = vst [vmem:[%s178 + $0x530] sm:$0xff] %v511
                %v513 = vld [vmem:[%s177 + $0x8b8] sm:$0xff]
                %514 = vst [vmem:[%s178 + $0x538] sm:$0xff] %v513
                %v515 = vld [vmem:[%s177 + $0xa80] sm:$0xff]
                %516 = vst [vmem:[%s178 + $0x540] sm:$0xff] %v515
                %v517 = vld [vmem:[%s177 + $0xa88] sm:$0xff]
                %518 = vst [vmem:[%s178 + $0x548] sm:$0xff] %v517
                %v519 = vld [vmem:[%s177 + $0xa90] sm:$0xff]
                %520 = vst [vmem:[%s178 + $0x550] sm:$0xff] %v519
                %v521 = vld [vmem:[%s177 + $0xa98] sm:$0xff]
                %522 = vst [vmem:[%s178 + $0x558] sm:$0xff] %v521
                %v523 = vld [vmem:[%s177 + $0xaa0] sm:$0xff]
                %524 = vst [vmem:[%s178 + $0x560] sm:$0xff] %v523
                %v525 = vld [vmem:[%s177 + $0xaa8] sm:$0xff]
                %526 = vst [vmem:[%s178 + $0x568] sm:$0xff] %v525
                %v527 = vld [vmem:[%s177 + $0xab0] sm:$0xff]
                %528 = vst [vmem:[%s178 + $0x570] sm:$0xff] %v527
                %v529 = vld [vmem:[%s177 + $0xab8] sm:$0xff]
                %530 = vst [vmem:[%s178 + $0x578] sm:$0xff] %v529
                %v531 = vld [vmem:[%s177 + $0xac0] sm:$0xff]
                %532 = vst [vmem:[%s178 + $0x580] sm:$0xff] %v531
                %v533 = vld [vmem:[%s177 + $0xac8] sm:$0xff]
                %534 = vst [vmem:[%s178 + $0x588] sm:$0xff] %v533
                %v535 = vld [vmem:[%s177 + $0xad0] sm:$0xff]
                %536 = vst [vmem:[%s178 + $0x590] sm:$0xff] %v535
                %v537 = vld [vmem:[%s177 + $0xad8] sm:$0xff]
                %538 = vst [vmem:[%s178 + $0x598] sm:$0xff] %v537
                %v539 = vld [vmem:[%s177 + $0xae0] sm:$0xff]
                %540 = vst [vmem:[%s178 + $0x5a0] sm:$0xff] %v539
                %v541 = vld [vmem:[%s177 + $0xae8] sm:$0xff]
                %542 = vst [vmem:[%s178 + $0x5a8] sm:$0xff] %v541
                %v543 = vld [vmem:[%s177 + $0xaf0] sm:$0xff]
                %544 = vst [vmem:[%s178 + $0x5b0] sm:$0xff] %v543
                %v545 = vld [vmem:[%s177 + $0xaf8] sm:$0xff]
                %546 = vst [vmem:[%s178 + $0x5b8] sm:$0xff] %v545
                %v547 = vld [vmem:[%s177 + $0xb00] sm:$0xff]
                %548 = vst [vmem:[%s178 + $0x5c0] sm:$0xff] %v547
                %v549 = vld [vmem:[%s177 + $0xb08] sm:$0xff]
                %550 = vst [vmem:[%s178 + $0x5c8] sm:$0xff] %v549
                %v551 = vld [vmem:[%s177 + $0xb10] sm:$0xff]
                %552 = vst [vmem:[%s178 + $0x5d0] sm:$0xff] %v551
                %v553 = vld [vmem:[%s177 + $0xb18] sm:$0xff]
                %554 = vst [vmem:[%s178 + $0x5d8] sm:$0xff] %v553
                %v555 = vld [vmem:[%s177 + $0xb20] sm:$0xff]
                %556 = vst [vmem:[%s178 + $0x5e0] sm:$0xff] %v555
                %v557 = vld [vmem:[%s177 + $0xb28] sm:$0xff]
                %558 = vst [vmem:[%s178 + $0x5e8] sm:$0xff] %v557
                %v559 = vld [vmem:[%s177 + $0xb30] sm:$0xff]
                %560 = vst [vmem:[%s178 + $0x5f0] sm:$0xff] %v559
                %v561 = vld [vmem:[%s177 + $0xb38] sm:$0xff]
                %562 = vst [vmem:[%s178 + $0x5f8] sm:$0xff] %v561
                %v563 = vld [vmem:[%s177 + $0xb40] sm:$0xff]
                %564 = vst [vmem:[%s178 + $0x600] sm:$0xff] %v563
                %v565 = vld [vmem:[%s177 + $0xb48] sm:$0xff]
                %566 = vst [vmem:[%s178 + $0x608] sm:$0xff] %v565
                %v567 = vld [vmem:[%s177 + $0xb50] sm:$0xff]
                %568 = vst [vmem:[%s178 + $0x610] sm:$0xff] %v567
                %v569 = vld [vmem:[%s177 + $0xb58] sm:$0xff]
                %570 = vst [vmem:[%s178 + $0x618] sm:$0xff] %v569
                %v571 = vld [vmem:[%s177 + $0xb60] sm:$0xff]
                %572 = vst [vmem:[%s178 + $0x620] sm:$0xff] %v571
                %v573 = vld [vmem:[%s177 + $0xb68] sm:$0xff]
                %574 = vst [vmem:[%s178 + $0x628] sm:$0xff] %v573
                %v575 = vld [vmem:[%s177 + $0xb70] sm:$0xff]
                %576 = vst [vmem:[%s178 + $0x630] sm:$0xff] %v575
                %v577 = vld [vmem:[%s177 + $0xb78] sm:$0xff]
                %578 = vst [vmem:[%s178 + $0x638] sm:$0xff] %v577
                %v579 = vld [vmem:[%s177 + $0xb80] sm:$0xff]
                %580 = vst [vmem:[%s178 + $0x640] sm:$0xff] %v579
                %v581 = vld [vmem:[%s177 + $0xb88] sm:$0xff]
                %582 = vst [vmem:[%s178 + $0x648] sm:$0xff] %v581
                %v583 = vld [vmem:[%s177 + $0xb90] sm:$0xff]
                %584 = vst [vmem:[%s178 + $0x650] sm:$0xff] %v583
                %v585 = vld [vmem:[%s177 + $0xb98] sm:$0xff]
                %586 = vst [vmem:[%s178 + $0x658] sm:$0xff] %v585
                %v587 = vld [vmem:[%s177 + $0xba0] sm:$0xff]
                %588 = vst [vmem:[%s178 + $0x660] sm:$0xff] %v587
                %v589 = vld [vmem:[%s177 + $0xba8] sm:$0xff]
                %590 = vst [vmem:[%s178 + $0x668] sm:$0xff] %v589
                %v591 = vld [vmem:[%s177 + $0xbb0] sm:$0xff]
                %592 = vst [vmem:[%s178 + $0x670] sm:$0xff] %v591
                %v593 = vld [vmem:[%s177 + $0xbb8] sm:$0xff]
                %594 = vst [vmem:[%s178 + $0x678] sm:$0xff] %v593
                %v595 = vld [vmem:[%s177 + $0xbc0] sm:$0xff]
                %596 = vst [vmem:[%s178 + $0x680] sm:$0xff] %v595
                %v597 = vld [vmem:[%s177 + $0xbc8] sm:$0xff]
                %598 = vst [vmem:[%s178 + $0x688] sm:$0xff] %v597
                %v599 = vld [vmem:[%s177 + $0xbd0] sm:$0xff]
                %600 = vst [vmem:[%s178 + $0x690] sm:$0xff] %v599
                %v601 = vld [vmem:[%s177 + $0xbd8] sm:$0xff]
                %602 = vst [vmem:[%s178 + $0x698] sm:$0xff] %v601
                %v603 = vld [vmem:[%s177 + $0xbe0] sm:$0xff]
                %604 = vst [vmem:[%s178 + $0x6a0] sm:$0xff] %v603
                %v605 = vld [vmem:[%s177 + $0xbe8] sm:$0xff]
                %606 = vst [vmem:[%s178 + $0x6a8] sm:$0xff] %v605
                %v607 = vld [vmem:[%s177 + $0xbf0] sm:$0xff]
                %608 = vst [vmem:[%s178 + $0x6b0] sm:$0xff] %v607
                %v609 = vld [vmem:[%s177 + $0xbf8] sm:$0xff]
                %610 = vst [vmem:[%s178 + $0x6b8] sm:$0xff] %v609
                %v611 = vld [vmem:[%s177 + $0xc00] sm:$0xff]
                %612 = vst [vmem:[%s178 + $0x6c0] sm:$0xff] %v611
                %v613 = vld [vmem:[%s177 + $0xc08] sm:$0xff]
                %614 = vst [vmem:[%s178 + $0x6c8] sm:$0xff] %v613
                %v615 = vld [vmem:[%s177 + $0xc10] sm:$0xff]
                %616 = vst [vmem:[%s178 + $0x6d0] sm:$0xff] %v615
                %v617 = vld [vmem:[%s177 + $0xc18] sm:$0xff]
                %618 = vst [vmem:[%s178 + $0x6d8] sm:$0xff] %v617
                %v619 = vld [vmem:[%s177 + $0xc20] sm:$0xff]
                %620 = vst [vmem:[%s178 + $0x6e0] sm:$0xff] %v619
                %v621 = vld [vmem:[%s177 + $0xc28] sm:$0xff]
                %622 = vst [vmem:[%s178 + $0x6e8] sm:$0xff] %v621
                %v623 = vld [vmem:[%s177 + $0xc30] sm:$0xff]
                %624 = vst [vmem:[%s178 + $0x6f0] sm:$0xff] %v623
                %v625 = vld [vmem:[%s177 + $0xc38] sm:$0xff]
                %626 = vst [vmem:[%s178 + $0x6f8] sm:$0xff] %v625
              $region49: #{fused_forward.1} parent=43 // loop_footer
                %s176 = sadd.s32 1, %s172
              $region50: #{fused_forward.1} parent=43 // loop_footer_branch
                %171 = sbr.rel target = $region46
              $region51: #{fused_forward.1} parent=43 // loop_exit
                _
            $region44: #{fused_forward.1} parent=35 // pred_fallthru
              _
          $region36: #{fused_forward.1} parent=31 // pred_fallthru
            _
          %1087 = vnop
        $region32: #{fused_forward.1} parent=27 // pred_fallthru
          _
      $region28: #{fused_forward.1} parent=5 // pred_fallthru
        _
      %p1088 = scmp.le.s32.totalorder 1, %s10
      %p1089 = scmp.lt.s32.totalorder %s10, 3
      %p1090 = pnand %p1088, %p1089
      %p1091 = pneg %p1090
      // Predicated region
      $region67: #{fused_forward.1} parent=5 // pred_check
        _
      $region68: #{fused_forward.1} parent=5 // pred_check_branch
        %1093 = sbr.rel (%p1090) target = $region70
      $region69: #{fused_forward.1} parent=5 // pred_region
        %s1094 = ssub.s32 %s10, 1
        %s1095 = sand.u32 %s23, 1
        %s1096 = sand.u32 %s23, 1
        %s1097 = smul.addr %s1096, 1792
        %s1098 = scalar_lea.vmem [#allocation2], %s1097
        // Predicated region
        $region71: #{fused_forward.1} parent=69 // pred_check
          %p1099 = pneg %p36
        $region72: #{fused_forward.1} parent=69 // pred_check_branch
          %1101 = sbr.rel (%p1099) target = $region74
        $region73: #{fused_forward.1} parent=69 // pred_region
          _
        $region74: #{fused_forward.1} parent=69 // pred_fallthru
          _
        %s1102 = sand.u32 %s23, 1
        %s1103 = sand.u32 %s23, 1
        %s1104 = smul.addr %s1103, 1792
        %s1105 = scalar_lea.vmem [#allocation2], %s1104
        %p1106 = pneg %p36
        %p1107 = pneg %p33
        %p1108 = pneg %p57
        %p1109 = pneg %p54
        %p1110 = pneg %p78
        %p1111 = pneg %p75
        %p1112 = pneg %p99
        %p1113 = pneg %p96
        %p1114 = pneg %p125
        %p1115 = pneg %p122
        %s1116 = smul.u32 40, %s15
        %p1117 = scmp.lt.s32.totalorder %s1116, 79
        %s1118 = scalar_select %p1117, %s1116, 79
        %s1119 = smul.addr %s1118, 8
        %s1120 = scalar_lea.vmem %s4, %s1119
        %s1121 = smul.u32 4, %s15
        %s1122 = smul.u32 40, %s15
        %p1123 = scmp.lt.s32.totalorder %s1122, 79
        %s1124 = scalar_select %p1123, %s1122, 79
        %s1125 = smul.addr %s1124, 8
        %s1126 = scalar_lea.vmem %s4, %s1125
        %s1127 = smul.u32 40, %s15
        %v1129 = vld [vmem:[%s1] sm:$0xff]
        %v1130 = vld [vmem:[%s1 + $0x8] sm:$0xff]
        %v1131 = vld [vmem:[%s1 + $0x10] sm:$0xff]
        %v1132 = vld [vmem:[%s1 + $0x18] sm:$0x1]
        %v1133 = vld [vmem:[%s2] sm:$0x1]
        %v1134 = vld [vmem:[%s1098] sm:$0xff]
        %v1135 = vld [vmem:[%s1098 + $0x8] sm:$0xff]
        %v1136 = vld [vmem:[%s1098 + $0x10] sm:$0xff]
        %v1137 = vld [vmem:[%s1098 + $0x18] sm:$0xff]
        %v1138 = vld [vmem:[%s1098 + $0x20] sm:$0xff]
        %v1139 = vld [vmem:[%s1098 + $0x28] sm:$0xff]
        %v1140 = vld [vmem:[%s1098 + $0x30] sm:$0xff]
        %v1141 = vld [vmem:[%s1098 + $0x38] sm:$0xff]
        %v1142 = vld [vmem:[%s1098 + $0x40] sm:$0xff]
        %v1143 = vld [vmem:[%s1098 + $0x48] sm:$0xff]
        %v1144 = vld [vmem:[%s1098 + $0x70] sm:$0xff]
        %v1145 = vld [vmem:[%s1098 + $0x78] sm:$0xff]
        %v1146 = vld [vmem:[%s1098 + $0x80] sm:$0xff]
        %v1147 = vld [vmem:[%s1098 + $0x88] sm:$0xff]
        %v1148 = vld [vmem:[%s1098 + $0x90] sm:$0xff]
        %v1149 = vld [vmem:[%s1098 + $0x98] sm:$0xff]
        %v1150 = vld [vmem:[%s1098 + $0xa0] sm:$0xff]
        %v1151 = vld [vmem:[%s1098 + $0xa8] sm:$0xff]
        %v1152 = vld [vmem:[%s1098 + $0xb0] sm:$0xff]
        %v1153 = vld [vmem:[%s1098 + $0xb8] sm:$0xff]
        %v1154 = vld [vmem:[%s1098 + $0xe0] sm:$0xff]
        %v1155 = vld [vmem:[%s1098 + $0xe8] sm:$0xff]
        %v1156 = vld [vmem:[%s1098 + $0xf0] sm:$0xff]
        %v1157 = vld [vmem:[%s1098 + $0xf8] sm:$0xff]
        %v1158 = vld [vmem:[%s1098 + $0x100] sm:$0xff]
        %v1159 = vld [vmem:[%s1098 + $0x108] sm:$0xff]
        %v1160 = vld [vmem:[%s1098 + $0x110] sm:$0xff]
        %v1161 = vld [vmem:[%s1098 + $0x118] sm:$0xff]
        %v1162 = vld [vmem:[%s1098 + $0x120] sm:$0xff]
        %v1163 = vld [vmem:[%s1098 + $0x128] sm:$0xff]
        %v1164 = vld [vmem:[%s1098 + $0x150] sm:$0xff]
        %v1165 = vld [vmem:[%s1098 + $0x158] sm:$0xff]
        %v1166 = vld [vmem:[%s1098 + $0x160] sm:$0xff]
        %v1167 = vld [vmem:[%s1098 + $0x168] sm:$0xff]
        %v1168 = vld [vmem:[%s1098 + $0x170] sm:$0xff]
        %v1169 = vld [vmem:[%s1098 + $0x178] sm:$0xff]
        %v1170 = vld [vmem:[%s1098 + $0x180] sm:$0xff]
        %v1171 = vld [vmem:[%s1098 + $0x188] sm:$0xff]
        %v1172 = vld [vmem:[%s1098 + $0x190] sm:$0xff]
        %v1173 = vld [vmem:[%s1098 + $0x198] sm:$0xff]
        %v1174 = vlaneseq
        %v1175 = vshrl.u32 %v1174, 7
        %v1176 = vsub.s32 0, %v1175
        %v1177 = vrot.slane %v1129, %v1176
        %v1178 = vmul.f32 %v1134, %v1177
        %v1179 = vmul.f32 %v1135, %v1177
        %v1180 = vmul.f32 %v1136, %v1177
        %v1181 = vmul.f32 %v1137, %v1177
        %v1182 = vmul.f32 %v1138, %v1177
        %v1183 = vmul.f32 %v1139, %v1177
        %v1184 = vmul.f32 %v1140, %v1177
        %v1185 = vmul.f32 %v1141, %v1177
        %v1186 = vmul.f32 %v1142, %v1177
        %v1187 = vmul.f32 %v1143, %v1177
        %v1188 = vmul.f32 %v1144, %v1177
        %v1189 = vmul.f32 %v1145, %v1177
        %v1190 = vmul.f32 %v1146, %v1177
        %v1191 = vmul.f32 %v1147, %v1177
        %v1192 = vmul.f32 %v1148, %v1177
        %v1193 = vmul.f32 %v1149, %v1177
        %v1194 = vmul.f32 %v1150, %v1177
        %v1195 = vmul.f32 %v1151, %v1177
        %v1196 = vmul.f32 %v1152, %v1177
        %v1197 = vmul.f32 %v1153, %v1177
        %v1198 = vmul.f32 %v1154, %v1177
        %v1199 = vmul.f32 %v1155, %v1177
        %v1200 = vmul.f32 %v1156, %v1177
        %v1201 = vmul.f32 %v1157, %v1177
        %v1202 = vmul.f32 %v1158, %v1177
        %v1203 = vmul.f32 %v1159, %v1177
        %v1204 = vmul.f32 %v1160, %v1177
        %v1205 = vmul.f32 %v1161, %v1177
        %v1206 = vmul.f32 %v1162, %v1177
        %v1207 = vmul.f32 %v1163, %v1177
        %v1208 = vmul.f32 %v1164, %v1177
        %v1209 = vmul.f32 %v1165, %v1177
        %v1210 = vmul.f32 %v1166, %v1177
        %v1211 = vmul.f32 %v1167, %v1177
        %v1212 = vmul.f32 %v1168, %v1177
        %v1213 = vmul.f32 %v1169, %v1177
        %v1214 = vmul.f32 %v1170, %v1177
        %v1215 = vmul.f32 %v1171, %v1177
        %v1216 = vmul.f32 %v1172, %v1177
        %v1217 = vmul.f32 %v1173, %v1177
        %v1218 = vadd.f32 %v1178, 0.0
        %v1219 = vadd.f32 %v1179, 0.0
        %v1220 = vadd.f32 %v1180, 0.0
        %v1221 = vadd.f32 %v1181, 0.0
        %v1222 = vadd.f32 %v1182, 0.0
        %v1223 = vadd.f32 %v1183, 0.0
        %v1224 = vadd.f32 %v1184, 0.0
        %v1225 = vadd.f32 %v1185, 0.0
        %v1226 = vadd.f32 %v1186, 0.0
        %v1227 = vadd.f32 %v1187, 0.0
        %v1228 = vadd.f32 %v1188, 0.0
        %v1229 = vadd.f32 %v1189, 0.0
        %v1230 = vadd.f32 %v1190, 0.0
        %v1231 = vadd.f32 %v1191, 0.0
        %v1232 = vadd.f32 %v1192, 0.0
        %v1233 = vadd.f32 %v1193, 0.0
        %v1234 = vadd.f32 %v1194, 0.0
        %v1235 = vadd.f32 %v1195, 0.0
        %v1236 = vadd.f32 %v1196, 0.0
        %v1237 = vadd.f32 %v1197, 0.0
        %v1238 = vadd.f32 %v1198, 0.0
        %v1239 = vadd.f32 %v1199, 0.0
        %v1240 = vadd.f32 %v1200, 0.0
        %v1241 = vadd.f32 %v1201, 0.0
        %v1242 = vadd.f32 %v1202, 0.0
        %v1243 = vadd.f32 %v1203, 0.0
        %v1244 = vadd.f32 %v1204, 0.0
        %v1245 = vadd.f32 %v1205, 0.0
        %v1246 = vadd.f32 %v1206, 0.0
        %v1247 = vadd.f32 %v1207, 0.0
        %v1248 = vadd.f32 %v1208, 0.0
        %v1249 = vadd.f32 %v1209, 0.0
        %v1250 = vadd.f32 %v1210, 0.0
        %v1251 = vadd.f32 %v1211, 0.0
        %v1252 = vadd.f32 %v1212, 0.0
        %v1253 = vadd.f32 %v1213, 0.0
        %v1254 = vadd.f32 %v1214, 0.0
        %v1255 = vadd.f32 %v1215, 0.0
        %v1256 = vadd.f32 %v1216, 0.0
        %v1257 = vadd.f32 %v1217, 0.0
        %s1258 = scalar_lea.vmem %s1098, 448 [#allocation2]
        %v1259 = vld [vmem:[%s1258] sm:$0xff]
        %v1260 = vld [vmem:[%s1258 + $0x8] sm:$0xff]
        %v1261 = vld [vmem:[%s1258 + $0x10] sm:$0xff]
        %v1262 = vld [vmem:[%s1258 + $0x18] sm:$0xff]
        %v1263 = vld [vmem:[%s1258 + $0x20] sm:$0xff]
        %v1264 = vld [vmem:[%s1258 + $0x28] sm:$0xff]
        %v1265 = vld [vmem:[%s1258 + $0x30] sm:$0xff]
        %v1266 = vld [vmem:[%s1258 + $0x38] sm:$0xff]
        %v1267 = vld [vmem:[%s1258 + $0x40] sm:$0xff]
        %v1268 = vld [vmem:[%s1258 + $0x48] sm:$0xff]
        %v1269 = vld [vmem:[%s1258 + $0x70] sm:$0xff]
        %v1270 = vld [vmem:[%s1258 + $0x78] sm:$0xff]
        %v1271 = vld [vmem:[%s1258 + $0x80] sm:$0xff]
        %v1272 = vld [vmem:[%s1258 + $0x88] sm:$0xff]
        %v1273 = vld [vmem:[%s1258 + $0x90] sm:$0xff]
        %v1274 = vld [vmem:[%s1258 + $0x98] sm:$0xff]
        %v1275 = vld [vmem:[%s1258 + $0xa0] sm:$0xff]
        %v1276 = vld [vmem:[%s1258 + $0xa8] sm:$0xff]
        %v1277 = vld [vmem:[%s1258 + $0xb0] sm:$0xff]
        %v1278 = vld [vmem:[%s1258 + $0xb8] sm:$0xff]
        %v1279 = vld [vmem:[%s1258 + $0xe0] sm:$0xff]
        %v1280 = vld [vmem:[%s1258 + $0xe8] sm:$0xff]
        %v1281 = vld [vmem:[%s1258 + $0xf0] sm:$0xff]
        %v1282 = vld [vmem:[%s1258 + $0xf8] sm:$0xff]
        %v1283 = vld [vmem:[%s1258 + $0x100] sm:$0xff]
        %v1284 = vld [vmem:[%s1258 + $0x108] sm:$0xff]
        %v1285 = vld [vmem:[%s1258 + $0x110] sm:$0xff]
        %v1286 = vld [vmem:[%s1258 + $0x118] sm:$0xff]
        %v1287 = vld [vmem:[%s1258 + $0x120] sm:$0xff]
        %v1288 = vld [vmem:[%s1258 + $0x128] sm:$0xff]
        %v1289 = vld [vmem:[%s1258 + $0x150] sm:$0xff]
        %v1290 = vld [vmem:[%s1258 + $0x158] sm:$0xff]
        %v1291 = vld [vmem:[%s1258 + $0x160] sm:$0xff]
        %v1292 = vld [vmem:[%s1258 + $0x168] sm:$0xff]
        %v1293 = vld [vmem:[%s1258 + $0x170] sm:$0xff]
        %v1294 = vld [vmem:[%s1258 + $0x178] sm:$0xff]
        %v1295 = vld [vmem:[%s1258 + $0x180] sm:$0xff]
        %v1296 = vld [vmem:[%s1258 + $0x188] sm:$0xff]
        %v1297 = vld [vmem:[%s1258 + $0x190] sm:$0xff]
        %v1298 = vld [vmem:[%s1258 + $0x198] sm:$0xff]
        %v1299 = vlaneseq
        %v1300 = vshrl.u32 %v1299, 7
        %v1301 = vsub.s32 1, %v1300
        %v1302 = vrot.slane %v1129, %v1301
        %v1303 = vmul.f32 %v1259, %v1302
        %v1304 = vmul.f32 %v1260, %v1302
        %v1305 = vmul.f32 %v1261, %v1302
        %v1306 = vmul.f32 %v1262, %v1302
        %v1307 = vmul.f32 %v1263, %v1302
        %v1308 = vmul.f32 %v1264, %v1302
        %v1309 = vmul.f32 %v1265, %v1302
        %v1310 = vmul.f32 %v1266, %v1302
        %v1311 = vmul.f32 %v1267, %v1302
        %v1312 = vmul.f32 %v1268, %v1302
        %v1313 = vmul.f32 %v1269, %v1302
        %v1314 = vmul.f32 %v1270, %v1302
        %v1315 = vmul.f32 %v1271, %v1302
        %v1316 = vmul.f32 %v1272, %v1302
        %v1317 = vmul.f32 %v1273, %v1302
        %v1318 = vmul.f32 %v1274, %v1302
        %v1319 = vmul.f32 %v1275, %v1302
        %v1320 = vmul.f32 %v1276, %v1302
        %v1321 = vmul.f32 %v1277, %v1302
        %v1322 = vmul.f32 %v1278, %v1302
        %v1323 = vmul.f32 %v1279, %v1302
        %v1324 = vmul.f32 %v1280, %v1302
        %v1325 = vmul.f32 %v1281, %v1302
        %v1326 = vmul.f32 %v1282, %v1302
        %v1327 = vmul.f32 %v1283, %v1302
        %v1328 = vmul.f32 %v1284, %v1302
        %v1329 = vmul.f32 %v1285, %v1302
        %v1330 = vmul.f32 %v1286, %v1302
        %v1331 = vmul.f32 %v1287, %v1302
        %v1332 = vmul.f32 %v1288, %v1302
        %v1333 = vmul.f32 %v1289, %v1302
        %v1334 = vmul.f32 %v1290, %v1302
        %v1335 = vmul.f32 %v1291, %v1302
        %v1336 = vmul.f32 %v1292, %v1302
        %v1337 = vmul.f32 %v1293, %v1302
        %v1338 = vmul.f32 %v1294, %v1302
        %v1339 = vmul.f32 %v1295, %v1302
        %v1340 = vmul.f32 %v1296, %v1302
        %v1341 = vmul.f32 %v1297, %v1302
        %v1342 = vmul.f32 %v1298, %v1302
        %v1343 = vadd.f32 %v1218, %v1303
        %v1344 = vadd.f32 %v1219, %v1304
        %v1345 = vadd.f32 %v1220, %v1305
        %v1346 = vadd.f32 %v1221, %v1306
        %v1347 = vadd.f32 %v1222, %v1307
        %v1348 = vadd.f32 %v1223, %v1308
        %v1349 = vadd.f32 %v1224, %v1309
        %v1350 = vadd.f32 %v1225, %v1310
        %v1351 = vadd.f32 %v1226, %v1311
        %v1352 = vadd.f32 %v1227, %v1312
        %v1353 = vadd.f32 %v1228, %v1313
        %v1354 = vadd.f32 %v1229, %v1314
        %v1355 = vadd.f32 %v1230, %v1315
        %v1356 = vadd.f32 %v1231, %v1316
        %v1357 = vadd.f32 %v1232, %v1317
        %v1358 = vadd.f32 %v1233, %v1318
        %v1359 = vadd.f32 %v1234, %v1319
        %v1360 = vadd.f32 %v1235, %v1320
        %v1361 = vadd.f32 %v1236, %v1321
        %v1362 = vadd.f32 %v1237, %v1322
        %v1363 = vadd.f32 %v1238, %v1323
        %v1364 = vadd.f32 %v1239, %v1324
        %v1365 = vadd.f32 %v1240, %v1325
        %v1366 = vadd.f32 %v1241, %v1326
        %v1367 = vadd.f32 %v1242, %v1327
        %v1368 = vadd.f32 %v1243, %v1328
        %v1369 = vadd.f32 %v1244, %v1329
        %v1370 = vadd.f32 %v1245, %v1330
        %v1371 = vadd.f32 %v1246, %v1331
        %v1372 = vadd.f32 %v1247, %v1332
        %v1373 = vadd.f32 %v1248, %v1333
        %v1374 = vadd.f32 %v1249, %v1334
        %v1375 = vadd.f32 %v1250, %v1335
        %v1376 = vadd.f32 %v1251, %v1336
        %v1377 = vadd.f32 %v1252, %v1337
        %v1378 = vadd.f32 %v1253, %v1338
        %v1379 = vadd.f32 %v1254, %v1339
        %v1380 = vadd.f32 %v1255, %v1340
        %v1381 = vadd.f32 %v1256, %v1341
        %v1382 = vadd.f32 %v1257, %v1342
        %v1383 = vld [vmem:[%s1098 + $0x1] sm:$0xff]
        %v1384 = vld [vmem:[%s1098 + $0x9] sm:$0xff]
        %v1385 = vld [vmem:[%s1098 + $0x11] sm:$0xff]
        %v1386 = vld [vmem:[%s1098 + $0x19] sm:$0xff]
        %v1387 = vld [vmem:[%s1098 + $0x21] sm:$0xff]
        %v1388 = vld [vmem:[%s1098 + $0x29] sm:$0xff]
        %v1389 = vld [vmem:[%s1098 + $0x31] sm:$0xff]
        %v1390 = vld [vmem:[%s1098 + $0x39] sm:$0xff]
        %v1391 = vld [vmem:[%s1098 + $0x41] sm:$0xff]
        %v1392 = vld [vmem:[%s1098 + $0x49] sm:$0xff]
        %v1393 = vld [vmem:[%s1098 + $0x71] sm:$0xff]
        %v1394 = vld [vmem:[%s1098 + $0x79] sm:$0xff]
        %v1395 = vld [vmem:[%s1098 + $0x81] sm:$0xff]
        %v1396 = vld [vmem:[%s1098 + $0x89] sm:$0xff]
        %v1397 = vld [vmem:[%s1098 + $0x91] sm:$0xff]
        %v1398 = vld [vmem:[%s1098 + $0x99] sm:$0xff]
        %v1399 = vld [vmem:[%s1098 + $0xa1] sm:$0xff]
        %v1400 = vld [vmem:[%s1098 + $0xa9] sm:$0xff]
        %v1401 = vld [vmem:[%s1098 + $0xb1] sm:$0xff]
        %v1402 = vld [vmem:[%s1098 + $0xb9] sm:$0xff]
        %v1403 = vld [vmem:[%s1098 + $0xe1] sm:$0xff]
        %v1404 = vld [vmem:[%s1098 + $0xe9] sm:$0xff]
        %v1405 = vld [vmem:[%s1098 + $0xf1] sm:$0xff]
        %v1406 = vld [vmem:[%s1098 + $0xf9] sm:$0xff]
        %v1407 = vld [vmem:[%s1098 + $0x101] sm:$0xff]
        %v1408 = vld [vmem:[%s1098 + $0x109] sm:$0xff]
        %v1409 = vld [vmem:[%s1098 + $0x111] sm:$0xff]
        %v1410 = vld [vmem:[%s1098 + $0x119] sm:$0xff]
        %v1411 = vld [vmem:[%s1098 + $0x121] sm:$0xff]
        %v1412 = vld [vmem:[%s1098 + $0x129] sm:$0xff]
        %v1413 = vld [vmem:[%s1098 + $0x151] sm:$0xff]
        %v1414 = vld [vmem:[%s1098 + $0x159] sm:$0xff]
        %v1415 = vld [vmem:[%s1098 + $0x161] sm:$0xff]
        %v1416 = vld [vmem:[%s1098 + $0x169] sm:$0xff]
        %v1417 = vld [vmem:[%s1098 + $0x171] sm:$0xff]
        %v1418 = vld [vmem:[%s1098 + $0x179] sm:$0xff]
        %v1419 = vld [vmem:[%s1098 + $0x181] sm:$0xff]
        %v1420 = vld [vmem:[%s1098 + $0x189] sm:$0xff]
        %v1421 = vld [vmem:[%s1098 + $0x191] sm:$0xff]
        %v1422 = vld [vmem:[%s1098 + $0x199] sm:$0xff]
        %v1423 = vlaneseq
        %v1424 = vshrl.u32 %v1423, 7
        %v1425 = vsub.s32 2, %v1424
        %v1426 = vrot.slane %v1129, %v1425
        %v1427 = vmul.f32 %v1383, %v1426
        %v1428 = vmul.f32 %v1384, %v1426
        %v1429 = vmul.f32 %v1385, %v1426
        %v1430 = vmul.f32 %v1386, %v1426
        %v1431 = vmul.f32 %v1387, %v1426
        %v1432 = vmul.f32 %v1388, %v1426
        %v1433 = vmul.f32 %v1389, %v1426
        %v1434 = vmul.f32 %v1390, %v1426
        %v1435 = vmul.f32 %v1391, %v1426
        %v1436 = vmul.f32 %v1392, %v1426
        %v1437 = vmul.f32 %v1393, %v1426
        %v1438 = vmul.f32 %v1394, %v1426
        %v1439 = vmul.f32 %v1395, %v1426
        %v1440 = vmul.f32 %v1396, %v1426
        %v1441 = vmul.f32 %v1397, %v1426
        %v1442 = vmul.f32 %v1398, %v1426
        %v1443 = vmul.f32 %v1399, %v1426
        %v1444 = vmul.f32 %v1400, %v1426
        %v1445 = vmul.f32 %v1401, %v1426
        %v1446 = vmul.f32 %v1402, %v1426
        %v1447 = vmul.f32 %v1403, %v1426
        %v1448 = vmul.f32 %v1404, %v1426
        %v1449 = vmul.f32 %v1405, %v1426
        %v1450 = vmul.f32 %v1406, %v1426
        %v1451 = vmul.f32 %v1407, %v1426
        %v1452 = vmul.f32 %v1408, %v1426
        %v1453 = vmul.f32 %v1409, %v1426
        %v1454 = vmul.f32 %v1410, %v1426
        %v1455 = vmul.f32 %v1411, %v1426
        %v1456 = vmul.f32 %v1412, %v1426
        %v1457 = vmul.f32 %v1413, %v1426
        %v1458 = vmul.f32 %v1414, %v1426
        %v1459 = vmul.f32 %v1415, %v1426
        %v1460 = vmul.f32 %v1416, %v1426
        %v1461 = vmul.f32 %v1417, %v1426
        %v1462 = vmul.f32 %v1418, %v1426
        %v1463 = vmul.f32 %v1419, %v1426
        %v1464 = vmul.f32 %v1420, %v1426
        %v1465 = vmul.f32 %v1421, %v1426
        %v1466 = vmul.f32 %v1422, %v1426
        %v1467 = vadd.f32 %v1343, %v1427
        %v1468 = vadd.f32 %v1344, %v1428
        %v1469 = vadd.f32 %v1345, %v1429
        %v1470 = vadd.f32 %v1346, %v1430
        %v1471 = vadd.f32 %v1347, %v1431
        %v1472 = vadd.f32 %v1348, %v1432
        %v1473 = vadd.f32 %v1349, %v1433
        %v1474 = vadd.f32 %v1350, %v1434
        %v1475 = vadd.f32 %v1351, %v1435
        %v1476 = vadd.f32 %v1352, %v1436
        %v1477 = vadd.f32 %v1353, %v1437
        %v1478 = vadd.f32 %v1354, %v1438
        %v1479 = vadd.f32 %v1355, %v1439
        %v1480 = vadd.f32 %v1356, %v1440
        %v1481 = vadd.f32 %v1357, %v1441
        %v1482 = vadd.f32 %v1358, %v1442
        %v1483 = vadd.f32 %v1359, %v1443
        %v1484 = vadd.f32 %v1360, %v1444
        %v1485 = vadd.f32 %v1361, %v1445
        %v1486 = vadd.f32 %v1362, %v1446
        %v1487 = vadd.f32 %v1363, %v1447
        %v1488 = vadd.f32 %v1364, %v1448
        %v1489 = vadd.f32 %v1365, %v1449
        %v1490 = vadd.f32 %v1366, %v1450
        %v1491 = vadd.f32 %v1367, %v1451
        %v1492 = vadd.f32 %v1368, %v1452
        %v1493 = vadd.f32 %v1369, %v1453
        %v1494 = vadd.f32 %v1370, %v1454
        %v1495 = vadd.f32 %v1371, %v1455
        %v1496 = vadd.f32 %v1372, %v1456
        %v1497 = vadd.f32 %v1373, %v1457
        %v1498 = vadd.f32 %v1374, %v1458
        %v1499 = vadd.f32 %v1375, %v1459
        %v1500 = vadd.f32 %v1376, %v1460
        %v1501 = vadd.f32 %v1377, %v1461
        %v1502 = vadd.f32 %v1378, %v1462
        %v1503 = vadd.f32 %v1379, %v1463
        %v1504 = vadd.f32 %v1380, %v1464
        %v1505 = vadd.f32 %v1381, %v1465
        %v1506 = vadd.f32 %v1382, %v1466
        %v1507 = vld [vmem:[%s1258 + $0x1] sm:$0xff]
        %v1508 = vld [vmem:[%s1258 + $0x9] sm:$0xff]
        %v1509 = vld [vmem:[%s1258 + $0x11] sm:$0xff]
        %v1510 = vld [vmem:[%s1258 + $0x19] sm:$0xff]
        %v1511 = vld [vmem:[%s1258 + $0x21] sm:$0xff]
        %v1512 = vld [vmem:[%s1258 + $0x29] sm:$0xff]
        %v1513 = vld [vmem:[%s1258 + $0x31] sm:$0xff]
        %v1514 = vld [vmem:[%s1258 + $0x39] sm:$0xff]
        %v1515 = vld [vmem:[%s1258 + $0x41] sm:$0xff]
        %v1516 = vld [vmem:[%s1258 + $0x49] sm:$0xff]
        %v1517 = vld [vmem:[%s1258 + $0x71] sm:$0xff]
        %v1518 = vld [vmem:[%s1258 + $0x79] sm:$0xff]
        %v1519 = vld [vmem:[%s1258 + $0x81] sm:$0xff]
        %v1520 = vld [vmem:[%s1258 + $0x89] sm:$0xff]
        %v1521 = vld [vmem:[%s1258 + $0x91] sm:$0xff]
        %v1522 = vld [vmem:[%s1258 + $0x99] sm:$0xff]
        %v1523 = vld [vmem:[%s1258 + $0xa1] sm:$0xff]
        %v1524 = vld [vmem:[%s1258 + $0xa9] sm:$0xff]
        %v1525 = vld [vmem:[%s1258 + $0xb1] sm:$0xff]
        %v1526 = vld [vmem:[%s1258 + $0xb9] sm:$0xff]
        %v1527 = vld [vmem:[%s1258 + $0xe1] sm:$0xff]
        %v1528 = vld [vmem:[%s1258 + $0xe9] sm:$0xff]
        %v1529 = vld [vmem:[%s1258 + $0xf1] sm:$0xff]
        %v1530 = vld [vmem:[%s1258 + $0xf9] sm:$0xff]
        %v1531 = vld [vmem:[%s1258 + $0x101] sm:$0xff]
        %v1532 = vld [vmem:[%s1258 + $0x109] sm:$0xff]
        %v1533 = vld [vmem:[%s1258 + $0x111] sm:$0xff]
        %v1534 = vld [vmem:[%s1258 + $0x119] sm:$0xff]
        %v1535 = vld [vmem:[%s1258 + $0x121] sm:$0xff]
        %v1536 = vld [vmem:[%s1258 + $0x129] sm:$0xff]
        %v1537 = vld [vmem:[%s1258 + $0x151] sm:$0xff]
        %v1538 = vld [vmem:[%s1258 + $0x159] sm:$0xff]
        %v1539 = vld [vmem:[%s1258 + $0x161] sm:$0xff]
        %v1540 = vld [vmem:[%s1258 + $0x169] sm:$0xff]
        %v1541 = vld [vmem:[%s1258 + $0x171] sm:$0xff]
        %v1542 = vld [vmem:[%s1258 + $0x179] sm:$0xff]
        %v1543 = vld [vmem:[%s1258 + $0x181] sm:$0xff]
        %v1544 = vld [vmem:[%s1258 + $0x189] sm:$0xff]
        %v1545 = vld [vmem:[%s1258 + $0x191] sm:$0xff]
        %v1546 = vld [vmem:[%s1258 + $0x199] sm:$0xff]
        %v1547 = vlaneseq
        %v1548 = vshrl.u32 %v1547, 7
        %v1549 = vsub.s32 3, %v1548
        %v1550 = vrot.slane %v1129, %v1549
        %v1551 = vmul.f32 %v1507, %v1550
        %v1552 = vmul.f32 %v1508, %v1550
        %v1553 = vmul.f32 %v1509, %v1550
        %v1554 = vmul.f32 %v1510, %v1550
        %v1555 = vmul.f32 %v1511, %v1550
        %v1556 = vmul.f32 %v1512, %v1550
        %v1557 = vmul.f32 %v1513, %v1550
        %v1558 = vmul.f32 %v1514, %v1550
        %v1559 = vmul.f32 %v1515, %v1550
        %v1560 = vmul.f32 %v1516, %v1550
        %v1561 = vmul.f32 %v1517, %v1550
        %v1562 = vmul.f32 %v1518, %v1550
        %v1563 = vmul.f32 %v1519, %v1550
        %v1564 = vmul.f32 %v1520, %v1550
        %v1565 = vmul.f32 %v1521, %v1550
        %v1566 = vmul.f32 %v1522, %v1550
        %v1567 = vmul.f32 %v1523, %v1550
        %v1568 = vmul.f32 %v1524, %v1550
        %v1569 = vmul.f32 %v1525, %v1550
        %v1570 = vmul.f32 %v1526, %v1550
        %v1571 = vmul.f32 %v1527, %v1550
        %v1572 = vmul.f32 %v1528, %v1550
        %v1573 = vmul.f32 %v1529, %v1550
        %v1574 = vmul.f32 %v1530, %v1550
        %v1575 = vmul.f32 %v1531, %v1550
        %v1576 = vmul.f32 %v1532, %v1550
        %v1577 = vmul.f32 %v1533, %v1550
        %v1578 = vmul.f32 %v1534, %v1550
        %v1579 = vmul.f32 %v1535, %v1550
        %v1580 = vmul.f32 %v1536, %v1550
        %v1581 = vmul.f32 %v1537, %v1550
        %v1582 = vmul.f32 %v1538, %v1550
        %v1583 = vmul.f32 %v1539, %v1550
        %v1584 = vmul.f32 %v1540, %v1550
        %v1585 = vmul.f32 %v1541, %v1550
        %v1586 = vmul.f32 %v1542, %v1550
        %v1587 = vmul.f32 %v1543, %v1550
        %v1588 = vmul.f32 %v1544, %v1550
        %v1589 = vmul.f32 %v1545, %v1550
        %v1590 = vmul.f32 %v1546, %v1550
        %v1591 = vadd.f32 %v1467, %v1551
        %v1592 = vadd.f32 %v1468, %v1552
        %v1593 = vadd.f32 %v1469, %v1553
        %v1594 = vadd.f32 %v1470, %v1554
        %v1595 = vadd.f32 %v1471, %v1555
        %v1596 = vadd.f32 %v1472, %v1556
        %v1597 = vadd.f32 %v1473, %v1557
        %v1598 = vadd.f32 %v1474, %v1558
        %v1599 = vadd.f32 %v1475, %v1559
        %v1600 = vadd.f32 %v1476, %v1560
        %v1601 = vadd.f32 %v1477, %v1561
        %v1602 = vadd.f32 %v1478, %v1562
        %v1603 = vadd.f32 %v1479, %v1563
        %v1604 = vadd.f32 %v1480, %v1564
        %v1605 = vadd.f32 %v1481, %v1565
        %v1606 = vadd.f32 %v1482, %v1566
        %v1607 = vadd.f32 %v1483, %v1567
        %v1608 = vadd.f32 %v1484, %v1568
        %v1609 = vadd.f32 %v1485, %v1569
        %v1610 = vadd.f32 %v1486, %v1570
        %v1611 = vadd.f32 %v1487, %v1571
        %v1612 = vadd.f32 %v1488, %v1572
        %v1613 = vadd.f32 %v1489, %v1573
        %v1614 = vadd.f32 %v1490, %v1574
        %v1615 = vadd.f32 %v1491, %v1575
        %v1616 = vadd.f32 %v1492, %v1576
        %v1617 = vadd.f32 %v1493, %v1577
        %v1618 = vadd.f32 %v1494, %v1578
        %v1619 = vadd.f32 %v1495, %v1579
        %v1620 = vadd.f32 %v1496, %v1580
        %v1621 = vadd.f32 %v1497, %v1581
        %v1622 = vadd.f32 %v1498, %v1582
        %v1623 = vadd.f32 %v1499, %v1583
        %v1624 = vadd.f32 %v1500, %v1584
        %v1625 = vadd.f32 %v1501, %v1585
        %v1626 = vadd.f32 %v1502, %v1586
        %v1627 = vadd.f32 %v1503, %v1587
        %v1628 = vadd.f32 %v1504, %v1588
        %v1629 = vadd.f32 %v1505, %v1589
        %v1630 = vadd.f32 %v1506, %v1590
        %v1631 = vld [vmem:[%s1098 + $0x2] sm:$0xff]
        %v1632 = vld [vmem:[%s1098 + $0xa] sm:$0xff]
        %v1633 = vld [vmem:[%s1098 + $0x12] sm:$0xff]
        %v1634 = vld [vmem:[%s1098 + $0x1a] sm:$0xff]
        %v1635 = vld [vmem:[%s1098 + $0x22] sm:$0xff]
        %v1636 = vld [vmem:[%s1098 + $0x2a] sm:$0xff]
        %v1637 = vld [vmem:[%s1098 + $0x32] sm:$0xff]
        %v1638 = vld [vmem:[%s1098 + $0x3a] sm:$0xff]
        %v1639 = vld [vmem:[%s1098 + $0x42] sm:$0xff]
        %v1640 = vld [vmem:[%s1098 + $0x4a] sm:$0xff]
        %v1641 = vld [vmem:[%s1098 + $0x72] sm:$0xff]
        %v1642 = vld [vmem:[%s1098 + $0x7a] sm:$0xff]
        %v1643 = vld [vmem:[%s1098 + $0x82] sm:$0xff]
        %v1644 = vld [vmem:[%s1098 + $0x8a] sm:$0xff]
        %v1645 = vld [vmem:[%s1098 + $0x92] sm:$0xff]
        %v1646 = vld [vmem:[%s1098 + $0x9a] sm:$0xff]
        %v1647 = vld [vmem:[%s1098 + $0xa2] sm:$0xff]
        %v1648 = vld [vmem:[%s1098 + $0xaa] sm:$0xff]
        %v1649 = vld [vmem:[%s1098 + $0xb2] sm:$0xff]
        %v1650 = vld [vmem:[%s1098 + $0xba] sm:$0xff]
        %v1651 = vld [vmem:[%s1098 + $0xe2] sm:$0xff]
        %v1652 = vld [vmem:[%s1098 + $0xea] sm:$0xff]
        %v1653 = vld [vmem:[%s1098 + $0xf2] sm:$0xff]
        %v1654 = vld [vmem:[%s1098 + $0xfa] sm:$0xff]
        %v1655 = vld [vmem:[%s1098 + $0x102] sm:$0xff]
        %v1656 = vld [vmem:[%s1098 + $0x10a] sm:$0xff]
        %v1657 = vld [vmem:[%s1098 + $0x112] sm:$0xff]
        %v1658 = vld [vmem:[%s1098 + $0x11a] sm:$0xff]
        %v1659 = vld [vmem:[%s1098 + $0x122] sm:$0xff]
        %v1660 = vld [vmem:[%s1098 + $0x12a] sm:$0xff]
        %v1661 = vld [vmem:[%s1098 + $0x152] sm:$0xff]
        %v1662 = vld [vmem:[%s1098 + $0x15a] sm:$0xff]
        %v1663 = vld [vmem:[%s1098 + $0x162] sm:$0xff]
        %v1664 = vld [vmem:[%s1098 + $0x16a] sm:$0xff]
        %v1665 = vld [vmem:[%s1098 + $0x172] sm:$0xff]
        %v1666 = vld [vmem:[%s1098 + $0x17a] sm:$0xff]
        %v1667 = vld [vmem:[%s1098 + $0x182] sm:$0xff]
        %v1668 = vld [vmem:[%s1098 + $0x18a] sm:$0xff]
        %v1669 = vld [vmem:[%s1098 + $0x192] sm:$0xff]
        %v1670 = vld [vmem:[%s1098 + $0x19a] sm:$0xff]
        %v1671 = vlaneseq
        %v1672 = vshrl.u32 %v1671, 7
        %v1673 = vsub.s32 4, %v1672
        %v1674 = vrot.slane %v1129, %v1673
        %v1675 = vmul.f32 %v1631, %v1674
        %v1676 = vmul.f32 %v1632, %v1674
        %v1677 = vmul.f32 %v1633, %v1674
        %v1678 = vmul.f32 %v1634, %v1674
        %v1679 = vmul.f32 %v1635, %v1674
        %v1680 = vmul.f32 %v1636, %v1674
        %v1681 = vmul.f32 %v1637, %v1674
        %v1682 = vmul.f32 %v1638, %v1674
        %v1683 = vmul.f32 %v1639, %v1674
        %v1684 = vmul.f32 %v1640, %v1674
        %v1685 = vmul.f32 %v1641, %v1674
        %v1686 = vmul.f32 %v1642, %v1674
        %v1687 = vmul.f32 %v1643, %v1674
        %v1688 = vmul.f32 %v1644, %v1674
        %v1689 = vmul.f32 %v1645, %v1674
        %v1690 = vmul.f32 %v1646, %v1674
        %v1691 = vmul.f32 %v1647, %v1674
        %v1692 = vmul.f32 %v1648, %v1674
        %v1693 = vmul.f32 %v1649, %v1674
        %v1694 = vmul.f32 %v1650, %v1674
        %v1695 = vmul.f32 %v1651, %v1674
        %v1696 = vmul.f32 %v1652, %v1674
        %v1697 = vmul.f32 %v1653, %v1674
        %v1698 = vmul.f32 %v1654, %v1674
        %v1699 = vmul.f32 %v1655, %v1674
        %v1700 = vmul.f32 %v1656, %v1674
        %v1701 = vmul.f32 %v1657, %v1674
        %v1702 = vmul.f32 %v1658, %v1674
        %v1703 = vmul.f32 %v1659, %v1674
        %v1704 = vmul.f32 %v1660, %v1674
        %v1705 = vmul.f32 %v1661, %v1674
        %v1706 = vmul.f32 %v1662, %v1674
        %v1707 = vmul.f32 %v1663, %v1674
        %v1708 = vmul.f32 %v1664, %v1674
        %v1709 = vmul.f32 %v1665, %v1674
        %v1710 = vmul.f32 %v1666, %v1674
        %v1711 = vmul.f32 %v1667, %v1674
        %v1712 = vmul.f32 %v1668, %v1674
        %v1713 = vmul.f32 %v1669, %v1674
        %v1714 = vmul.f32 %v1670, %v1674
        %v1715 = vadd.f32 %v1591, %v1675
        %v1716 = vadd.f32 %v1592, %v1676
        %v1717 = vadd.f32 %v1593, %v1677
        %v1718 = vadd.f32 %v1594, %v1678
        %v1719 = vadd.f32 %v1595, %v1679
        %v1720 = vadd.f32 %v1596, %v1680
        %v1721 = vadd.f32 %v1597, %v1681
        %v1722 = vadd.f32 %v1598, %v1682
        %v1723 = vadd.f32 %v1599, %v1683
        %v1724 = vadd.f32 %v1600, %v1684
        %v1725 = vadd.f32 %v1601, %v1685
        %v1726 = vadd.f32 %v1602, %v1686
        %v1727 = vadd.f32 %v1603, %v1687
        %v1728 = vadd.f32 %v1604, %v1688
        %v1729 = vadd.f32 %v1605, %v1689
        %v1730 = vadd.f32 %v1606, %v1690
        %v1731 = vadd.f32 %v1607, %v1691
        %v1732 = vadd.f32 %v1608, %v1692
        %v1733 = vadd.f32 %v1609, %v1693
        %v1734 = vadd.f32 %v1610, %v1694
        %v1735 = vadd.f32 %v1611, %v1695
        %v1736 = vadd.f32 %v1612, %v1696
        %v1737 = vadd.f32 %v1613, %v1697
        %v1738 = vadd.f32 %v1614, %v1698
        %v1739 = vadd.f32 %v1615, %v1699
        %v1740 = vadd.f32 %v1616, %v1700
        %v1741 = vadd.f32 %v1617, %v1701
        %v1742 = vadd.f32 %v1618, %v1702
        %v1743 = vadd.f32 %v1619, %v1703
        %v1744 = vadd.f32 %v1620, %v1704
        %v1745 = vadd.f32 %v1621, %v1705
        %v1746 = vadd.f32 %v1622, %v1706
        %v1747 = vadd.f32 %v1623, %v1707
        %v1748 = vadd.f32 %v1624, %v1708
        %v1749 = vadd.f32 %v1625, %v1709
        %v1750 = vadd.f32 %v1626, %v1710
        %v1751 = vadd.f32 %v1627, %v1711
        %v1752 = vadd.f32 %v1628, %v1712
        %v1753 = vadd.f32 %v1629, %v1713
        %v1754 = vadd.f32 %v1630, %v1714
        %s1755 = scalar_lea.vmem %s1098, 896 [#allocation2]
        %v1756 = vld [vmem:[%s1755] sm:$0xff]
        %v1757 = vld [vmem:[%s1755 + $0x8] sm:$0xff]
        %v1758 = vld [vmem:[%s1755 + $0x10] sm:$0xff]
        %v1759 = vld [vmem:[%s1755 + $0x18] sm:$0xff]
        %v1760 = vld [vmem:[%s1755 + $0x20] sm:$0xff]
        %v1761 = vld [vmem:[%s1755 + $0x28] sm:$0xff]
        %v1762 = vld [vmem:[%s1755 + $0x30] sm:$0xff]
        %v1763 = vld [vmem:[%s1755 + $0x38] sm:$0xff]
        %v1764 = vld [vmem:[%s1755 + $0x40] sm:$0xff]
        %v1765 = vld [vmem:[%s1755 + $0x48] sm:$0xff]
        %v1766 = vld [vmem:[%s1755 + $0x70] sm:$0xff]
        %v1767 = vld [vmem:[%s1755 + $0x78] sm:$0xff]
        %v1768 = vld [vmem:[%s1755 + $0x80] sm:$0xff]
        %v1769 = vld [vmem:[%s1755 + $0x88] sm:$0xff]
        %v1770 = vld [vmem:[%s1755 + $0x90] sm:$0xff]
        %v1771 = vld [vmem:[%s1755 + $0x98] sm:$0xff]
        %v1772 = vld [vmem:[%s1755 + $0xa0] sm:$0xff]
        %v1773 = vld [vmem:[%s1755 + $0xa8] sm:$0xff]
        %v1774 = vld [vmem:[%s1755 + $0xb0] sm:$0xff]
        %v1775 = vld [vmem:[%s1755 + $0xb8] sm:$0xff]
        %v1776 = vld [vmem:[%s1755 + $0xe0] sm:$0xff]
        %v1777 = vld [vmem:[%s1755 + $0xe8] sm:$0xff]
        %v1778 = vld [vmem:[%s1755 + $0xf0] sm:$0xff]
        %v1779 = vld [vmem:[%s1755 + $0xf8] sm:$0xff]
        %v1780 = vld [vmem:[%s1755 + $0x100] sm:$0xff]
        %v1781 = vld [vmem:[%s1755 + $0x108] sm:$0xff]
        %v1782 = vld [vmem:[%s1755 + $0x110] sm:$0xff]
        %v1783 = vld [vmem:[%s1755 + $0x118] sm:$0xff]
        %v1784 = vld [vmem:[%s1755 + $0x120] sm:$0xff]
        %v1785 = vld [vmem:[%s1755 + $0x128] sm:$0xff]
        %v1786 = vld [vmem:[%s1755 + $0x150] sm:$0xff]
        %v1787 = vld [vmem:[%s1755 + $0x158] sm:$0xff]
        %v1788 = vld [vmem:[%s1755 + $0x160] sm:$0xff]
        %v1789 = vld [vmem:[%s1755 + $0x168] sm:$0xff]
        %v1790 = vld [vmem:[%s1755 + $0x170] sm:$0xff]
        %v1791 = vld [vmem:[%s1755 + $0x178] sm:$0xff]
        %v1792 = vld [vmem:[%s1755 + $0x180] sm:$0xff]
        %v1793 = vld [vmem:[%s1755 + $0x188] sm:$0xff]
        %v1794 = vld [vmem:[%s1755 + $0x190] sm:$0xff]
        %v1795 = vld [vmem:[%s1755 + $0x198] sm:$0xff]
        %v1796 = vlaneseq
        %v1797 = vshrl.u32 %v1796, 7
        %v1798 = vsub.s32 5, %v1797
        %v1799 = vrot.slane %v1129, %v1798
        %v1800 = vmul.f32 %v1756, %v1799
        %v1801 = vmul.f32 %v1757, %v1799
        %v1802 = vmul.f32 %v1758, %v1799
        %v1803 = vmul.f32 %v1759, %v1799
        %v1804 = vmul.f32 %v1760, %v1799
        %v1805 = vmul.f32 %v1761, %v1799
        %v1806 = vmul.f32 %v1762, %v1799
        %v1807 = vmul.f32 %v1763, %v1799
        %v1808 = vmul.f32 %v1764, %v1799
        %v1809 = vmul.f32 %v1765, %v1799
        %v1810 = vmul.f32 %v1766, %v1799
        %v1811 = vmul.f32 %v1767, %v1799
        %v1812 = vmul.f32 %v1768, %v1799
        %v1813 = vmul.f32 %v1769, %v1799
        %v1814 = vmul.f32 %v1770, %v1799
        %v1815 = vmul.f32 %v1771, %v1799
        %v1816 = vmul.f32 %v1772, %v1799
        %v1817 = vmul.f32 %v1773, %v1799
        %v1818 = vmul.f32 %v1774, %v1799
        %v1819 = vmul.f32 %v1775, %v1799
        %v1820 = vmul.f32 %v1776, %v1799
        %v1821 = vmul.f32 %v1777, %v1799
        %v1822 = vmul.f32 %v1778, %v1799
        %v1823 = vmul.f32 %v1779, %v1799
        %v1824 = vmul.f32 %v1780, %v1799
        %v1825 = vmul.f32 %v1781, %v1799
        %v1826 = vmul.f32 %v1782, %v1799
        %v1827 = vmul.f32 %v1783, %v1799
        %v1828 = vmul.f32 %v1784, %v1799
        %v1829 = vmul.f32 %v1785, %v1799
        %v1830 = vmul.f32 %v1786, %v1799
        %v1831 = vmul.f32 %v1787, %v1799
        %v1832 = vmul.f32 %v1788, %v1799
        %v1833 = vmul.f32 %v1789, %v1799
        %v1834 = vmul.f32 %v1790, %v1799
        %v1835 = vmul.f32 %v1791, %v1799
        %v1836 = vmul.f32 %v1792, %v1799
        %v1837 = vmul.f32 %v1793, %v1799
        %v1838 = vmul.f32 %v1794, %v1799
        %v1839 = vmul.f32 %v1795, %v1799
        %v1840 = vadd.f32 %v1715, %v1800
        %v1841 = vadd.f32 %v1716, %v1801
        %v1842 = vadd.f32 %v1717, %v1802
        %v1843 = vadd.f32 %v1718, %v1803
        %v1844 = vadd.f32 %v1719, %v1804
        %v1845 = vadd.f32 %v1720, %v1805
        %v1846 = vadd.f32 %v1721, %v1806
        %v1847 = vadd.f32 %v1722, %v1807
        %v1848 = vadd.f32 %v1723, %v1808
        %v1849 = vadd.f32 %v1724, %v1809
        %v1850 = vadd.f32 %v1725, %v1810
        %v1851 = vadd.f32 %v1726, %v1811
        %v1852 = vadd.f32 %v1727, %v1812
        %v1853 = vadd.f32 %v1728, %v1813
        %v1854 = vadd.f32 %v1729, %v1814
        %v1855 = vadd.f32 %v1730, %v1815
        %v1856 = vadd.f32 %v1731, %v1816
        %v1857 = vadd.f32 %v1732, %v1817
        %v1858 = vadd.f32 %v1733, %v1818
        %v1859 = vadd.f32 %v1734, %v1819
        %v1860 = vadd.f32 %v1735, %v1820
        %v1861 = vadd.f32 %v1736, %v1821
        %v1862 = vadd.f32 %v1737, %v1822
        %v1863 = vadd.f32 %v1738, %v1823
        %v1864 = vadd.f32 %v1739, %v1824
        %v1865 = vadd.f32 %v1740, %v1825
        %v1866 = vadd.f32 %v1741, %v1826
        %v1867 = vadd.f32 %v1742, %v1827
        %v1868 = vadd.f32 %v1743, %v1828
        %v1869 = vadd.f32 %v1744, %v1829
        %v1870 = vadd.f32 %v1745, %v1830
        %v1871 = vadd.f32 %v1746, %v1831
        %v1872 = vadd.f32 %v1747, %v1832
        %v1873 = vadd.f32 %v1748, %v1833
        %v1874 = vadd.f32 %v1749, %v1834
        %v1875 = vadd.f32 %v1750, %v1835
        %v1876 = vadd.f32 %v1751, %v1836
        %v1877 = vadd.f32 %v1752, %v1837
        %v1878 = vadd.f32 %v1753, %v1838
        %v1879 = vadd.f32 %v1754, %v1839
        %s1880 = scalar_lea.vmem %s1098, 1344 [#allocation2]
        %v1881 = vld [vmem:[%s1880] sm:$0xff]
        %v1882 = vld [vmem:[%s1880 + $0x8] sm:$0xff]
        %v1883 = vld [vmem:[%s1880 + $0x10] sm:$0xff]
        %v1884 = vld [vmem:[%s1880 + $0x18] sm:$0xff]
        %v1885 = vld [vmem:[%s1880 + $0x20] sm:$0xff]
        %v1886 = vld [vmem:[%s1880 + $0x28] sm:$0xff]
        %v1887 = vld [vmem:[%s1880 + $0x30] sm:$0xff]
        %v1888 = vld [vmem:[%s1880 + $0x38] sm:$0xff]
        %v1889 = vld [vmem:[%s1880 + $0x40] sm:$0xff]
        %v1890 = vld [vmem:[%s1880 + $0x48] sm:$0xff]
        %v1891 = vld [vmem:[%s1880 + $0x70] sm:$0xff]
        %v1892 = vld [vmem:[%s1880 + $0x78] sm:$0xff]
        %v1893 = vld [vmem:[%s1880 + $0x80] sm:$0xff]
        %v1894 = vld [vmem:[%s1880 + $0x88] sm:$0xff]
        %v1895 = vld [vmem:[%s1880 + $0x90] sm:$0xff]
        %v1896 = vld [vmem:[%s1880 + $0x98] sm:$0xff]
        %v1897 = vld [vmem:[%s1880 + $0xa0] sm:$0xff]
        %v1898 = vld [vmem:[%s1880 + $0xa8] sm:$0xff]
        %v1899 = vld [vmem:[%s1880 + $0xb0] sm:$0xff]
        %v1900 = vld [vmem:[%s1880 + $0xb8] sm:$0xff]
        %v1901 = vld [vmem:[%s1880 + $0xe0] sm:$0xff]
        %v1902 = vld [vmem:[%s1880 + $0xe8] sm:$0xff]
        %v1903 = vld [vmem:[%s1880 + $0xf0] sm:$0xff]
        %v1904 = vld [vmem:[%s1880 + $0xf8] sm:$0xff]
        %v1905 = vld [vmem:[%s1880 + $0x100] sm:$0xff]
        %v1906 = vld [vmem:[%s1880 + $0x108] sm:$0xff]
        %v1907 = vld [vmem:[%s1880 + $0x110] sm:$0xff]
        %v1908 = vld [vmem:[%s1880 + $0x118] sm:$0xff]
        %v1909 = vld [vmem:[%s1880 + $0x120] sm:$0xff]
        %v1910 = vld [vmem:[%s1880 + $0x128] sm:$0xff]
        %v1911 = vld [vmem:[%s1880 + $0x150] sm:$0xff]
        %v1912 = vld [vmem:[%s1880 + $0x158] sm:$0xff]
        %v1913 = vld [vmem:[%s1880 + $0x160] sm:$0xff]
        %v1914 = vld [vmem:[%s1880 + $0x168] sm:$0xff]
        %v1915 = vld [vmem:[%s1880 + $0x170] sm:$0xff]
        %v1916 = vld [vmem:[%s1880 + $0x178] sm:$0xff]
        %v1917 = vld [vmem:[%s1880 + $0x180] sm:$0xff]
        %v1918 = vld [vmem:[%s1880 + $0x188] sm:$0xff]
        %v1919 = vld [vmem:[%s1880 + $0x190] sm:$0xff]
        %v1920 = vld [vmem:[%s1880 + $0x198] sm:$0xff]
        %v1921 = vlaneseq
        %v1922 = vshrl.u32 %v1921, 7
        %v1923 = vsub.s32 6, %v1922
        %v1924 = vrot.slane %v1129, %v1923
        %v1925 = vmul.f32 %v1881, %v1924
        %v1926 = vmul.f32 %v1882, %v1924
        %v1927 = vmul.f32 %v1883, %v1924
        %v1928 = vmul.f32 %v1884, %v1924
        %v1929 = vmul.f32 %v1885, %v1924
        %v1930 = vmul.f32 %v1886, %v1924
        %v1931 = vmul.f32 %v1887, %v1924
        %v1932 = vmul.f32 %v1888, %v1924
        %v1933 = vmul.f32 %v1889, %v1924
        %v1934 = vmul.f32 %v1890, %v1924
        %v1935 = vmul.f32 %v1891, %v1924
        %v1936 = vmul.f32 %v1892, %v1924
        %v1937 = vmul.f32 %v1893, %v1924
        %v1938 = vmul.f32 %v1894, %v1924
        %v1939 = vmul.f32 %v1895, %v1924
        %v1940 = vmul.f32 %v1896, %v1924
        %v1941 = vmul.f32 %v1897, %v1924
        %v1942 = vmul.f32 %v1898, %v1924
        %v1943 = vmul.f32 %v1899, %v1924
        %v1944 = vmul.f32 %v1900, %v1924
        %v1945 = vmul.f32 %v1901, %v1924
        %v1946 = vmul.f32 %v1902, %v1924
        %v1947 = vmul.f32 %v1903, %v1924
        %v1948 = vmul.f32 %v1904, %v1924
        %v1949 = vmul.f32 %v1905, %v1924
        %v1950 = vmul.f32 %v1906, %v1924
        %v1951 = vmul.f32 %v1907, %v1924
        %v1952 = vmul.f32 %v1908, %v1924
        %v1953 = vmul.f32 %v1909, %v1924
        %v1954 = vmul.f32 %v1910, %v1924
        %v1955 = vmul.f32 %v1911, %v1924
        %v1956 = vmul.f32 %v1912, %v1924
        %v1957 = vmul.f32 %v1913, %v1924
        %v1958 = vmul.f32 %v1914, %v1924
        %v1959 = vmul.f32 %v1915, %v1924
        %v1960 = vmul.f32 %v1916, %v1924
        %v1961 = vmul.f32 %v1917, %v1924
        %v1962 = vmul.f32 %v1918, %v1924
        %v1963 = vmul.f32 %v1919, %v1924
        %v1964 = vmul.f32 %v1920, %v1924
        %v1965 = vadd.f32 %v1840, %v1925
        %v1966 = vadd.f32 %v1841, %v1926
        %v1967 = vadd.f32 %v1842, %v1927
        %v1968 = vadd.f32 %v1843, %v1928
        %v1969 = vadd.f32 %v1844, %v1929
        %v1970 = vadd.f32 %v1845, %v1930
        %v1971 = vadd.f32 %v1846, %v1931
        %v1972 = vadd.f32 %v1847, %v1932
        %v1973 = vadd.f32 %v1848, %v1933
        %v1974 = vadd.f32 %v1849, %v1934
        %v1975 = vadd.f32 %v1850, %v1935
        %v1976 = vadd.f32 %v1851, %v1936
        %v1977 = vadd.f32 %v1852, %v1937
        %v1978 = vadd.f32 %v1853, %v1938
        %v1979 = vadd.f32 %v1854, %v1939
        %v1980 = vadd.f32 %v1855, %v1940
        %v1981 = vadd.f32 %v1856, %v1941
        %v1982 = vadd.f32 %v1857, %v1942
        %v1983 = vadd.f32 %v1858, %v1943
        %v1984 = vadd.f32 %v1859, %v1944
        %v1985 = vadd.f32 %v1860, %v1945
        %v1986 = vadd.f32 %v1861, %v1946
        %v1987 = vadd.f32 %v1862, %v1947
        %v1988 = vadd.f32 %v1863, %v1948
        %v1989 = vadd.f32 %v1864, %v1949
        %v1990 = vadd.f32 %v1865, %v1950
        %v1991 = vadd.f32 %v1866, %v1951
        %v1992 = vadd.f32 %v1867, %v1952
        %v1993 = vadd.f32 %v1868, %v1953
        %v1994 = vadd.f32 %v1869, %v1954
        %v1995 = vadd.f32 %v1870, %v1955
        %v1996 = vadd.f32 %v1871, %v1956
        %v1997 = vadd.f32 %v1872, %v1957
        %v1998 = vadd.f32 %v1873, %v1958
        %v1999 = vadd.f32 %v1874, %v1959
        %v2000 = vadd.f32 %v1875, %v1960
        %v2001 = vadd.f32 %v1876, %v1961
        %v2002 = vadd.f32 %v1877, %v1962
        %v2003 = vadd.f32 %v1878, %v1963
        %v2004 = vadd.f32 %v1879, %v1964
        %v2005 = vld [vmem:[%s1755 + $0x1] sm:$0xff]
        %v2006 = vld [vmem:[%s1755 + $0x9] sm:$0xff]
        %v2007 = vld [vmem:[%s1755 + $0x11] sm:$0xff]
        %v2008 = vld [vmem:[%s1755 + $0x19] sm:$0xff]
        %v2009 = vld [vmem:[%s1755 + $0x21] sm:$0xff]
        %v2010 = vld [vmem:[%s1755 + $0x29] sm:$0xff]
        %v2011 = vld [vmem:[%s1755 + $0x31] sm:$0xff]
        %v2012 = vld [vmem:[%s1755 + $0x39] sm:$0xff]
        %v2013 = vld [vmem:[%s1755 + $0x41] sm:$0xff]
        %v2014 = vld [vmem:[%s1755 + $0x49] sm:$0xff]
        %v2015 = vld [vmem:[%s1755 + $0x71] sm:$0xff]
        %v2016 = vld [vmem:[%s1755 + $0x79] sm:$0xff]
        %v2017 = vld [vmem:[%s1755 + $0x81] sm:$0xff]
        %v2018 = vld [vmem:[%s1755 + $0x89] sm:$0xff]
        %v2019 = vld [vmem:[%s1755 + $0x91] sm:$0xff]
        %v2020 = vld [vmem:[%s1755 + $0x99] sm:$0xff]
        %v2021 = vld [vmem:[%s1755 + $0xa1] sm:$0xff]
        %v2022 = vld [vmem:[%s1755 + $0xa9] sm:$0xff]
        %v2023 = vld [vmem:[%s1755 + $0xb1] sm:$0xff]
        %v2024 = vld [vmem:[%s1755 + $0xb9] sm:$0xff]
        %v2025 = vld [vmem:[%s1755 + $0xe1] sm:$0xff]
        %v2026 = vld [vmem:[%s1755 + $0xe9] sm:$0xff]
        %v2027 = vld [vmem:[%s1755 + $0xf1] sm:$0xff]
        %v2028 = vld [vmem:[%s1755 + $0xf9] sm:$0xff]
        %v2029 = vld [vmem:[%s1755 + $0x101] sm:$0xff]
        %v2030 = vld [vmem:[%s1755 + $0x109] sm:$0xff]
        %v2031 = vld [vmem:[%s1755 + $0x111] sm:$0xff]
        %v2032 = vld [vmem:[%s1755 + $0x119] sm:$0xff]
        %v2033 = vld [vmem:[%s1755 + $0x121] sm:$0xff]
        %v2034 = vld [vmem:[%s1755 + $0x129] sm:$0xff]
        %v2035 = vld [vmem:[%s1755 + $0x151] sm:$0xff]
        %v2036 = vld [vmem:[%s1755 + $0x159] sm:$0xff]
        %v2037 = vld [vmem:[%s1755 + $0x161] sm:$0xff]
        %v2038 = vld [vmem:[%s1755 + $0x169] sm:$0xff]
        %v2039 = vld [vmem:[%s1755 + $0x171] sm:$0xff]
        %v2040 = vld [vmem:[%s1755 + $0x179] sm:$0xff]
        %v2041 = vld [vmem:[%s1755 + $0x181] sm:$0xff]
        %v2042 = vld [vmem:[%s1755 + $0x189] sm:$0xff]
        %v2043 = vld [vmem:[%s1755 + $0x191] sm:$0xff]
        %v2044 = vld [vmem:[%s1755 + $0x199] sm:$0xff]
        %v2045 = vlaneseq
        %v2046 = vshrl.u32 %v2045, 7
        %v2047 = vsub.s32 7, %v2046
        %v2048 = vrot.slane %v1129, %v2047
        %v2049 = vmul.f32 %v2005, %v2048
        %v2050 = vmul.f32 %v2006, %v2048
        %v2051 = vmul.f32 %v2007, %v2048
        %v2052 = vmul.f32 %v2008, %v2048
        %v2053 = vmul.f32 %v2009, %v2048
        %v2054 = vmul.f32 %v2010, %v2048
        %v2055 = vmul.f32 %v2011, %v2048
        %v2056 = vmul.f32 %v2012, %v2048
        %v2057 = vmul.f32 %v2013, %v2048
        %v2058 = vmul.f32 %v2014, %v2048
        %v2059 = vmul.f32 %v2015, %v2048
        %v2060 = vmul.f32 %v2016, %v2048
        %v2061 = vmul.f32 %v2017, %v2048
        %v2062 = vmul.f32 %v2018, %v2048
        %v2063 = vmul.f32 %v2019, %v2048
        %v2064 = vmul.f32 %v2020, %v2048
        %v2065 = vmul.f32 %v2021, %v2048
        %v2066 = vmul.f32 %v2022, %v2048
        %v2067 = vmul.f32 %v2023, %v2048
        %v2068 = vmul.f32 %v2024, %v2048
        %v2069 = vmul.f32 %v2025, %v2048
        %v2070 = vmul.f32 %v2026, %v2048
        %v2071 = vmul.f32 %v2027, %v2048
        %v2072 = vmul.f32 %v2028, %v2048
        %v2073 = vmul.f32 %v2029, %v2048
        %v2074 = vmul.f32 %v2030, %v2048
        %v2075 = vmul.f32 %v2031, %v2048
        %v2076 = vmul.f32 %v2032, %v2048
        %v2077 = vmul.f32 %v2033, %v2048
        %v2078 = vmul.f32 %v2034, %v2048
        %v2079 = vmul.f32 %v2035, %v2048
        %v2080 = vmul.f32 %v2036, %v2048
        %v2081 = vmul.f32 %v2037, %v2048
        %v2082 = vmul.f32 %v2038, %v2048
        %v2083 = vmul.f32 %v2039, %v2048
        %v2084 = vmul.f32 %v2040, %v2048
        %v2085 = vmul.f32 %v2041, %v2048
        %v2086 = vmul.f32 %v2042, %v2048
        %v2087 = vmul.f32 %v2043, %v2048
        %v2088 = vmul.f32 %v2044, %v2048
        %v2089 = vadd.f32 %v1965, %v2049
        %v2090 = vadd.f32 %v1966, %v2050
        %v2091 = vadd.f32 %v1967, %v2051
        %v2092 = vadd.f32 %v1968, %v2052
        %v2093 = vadd.f32 %v1969, %v2053
        %v2094 = vadd.f32 %v1970, %v2054
        %v2095 = vadd.f32 %v1971, %v2055
        %v2096 = vadd.f32 %v1972, %v2056
        %v2097 = vadd.f32 %v1973, %v2057
        %v2098 = vadd.f32 %v1974, %v2058
        %v2099 = vadd.f32 %v1975, %v2059
        %v2100 = vadd.f32 %v1976, %v2060
        %v2101 = vadd.f32 %v1977, %v2061
        %v2102 = vadd.f32 %v1978, %v2062
        %v2103 = vadd.f32 %v1979, %v2063
        %v2104 = vadd.f32 %v1980, %v2064
        %v2105 = vadd.f32 %v1981, %v2065
        %v2106 = vadd.f32 %v1982, %v2066
        %v2107 = vadd.f32 %v1983, %v2067
        %v2108 = vadd.f32 %v1984, %v2068
        %v2109 = vadd.f32 %v1985, %v2069
        %v2110 = vadd.f32 %v1986, %v2070
        %v2111 = vadd.f32 %v1987, %v2071
        %v2112 = vadd.f32 %v1988, %v2072
        %v2113 = vadd.f32 %v1989, %v2073
        %v2114 = vadd.f32 %v1990, %v2074
        %v2115 = vadd.f32 %v1991, %v2075
        %v2116 = vadd.f32 %v1992, %v2076
        %v2117 = vadd.f32 %v1993, %v2077
        %v2118 = vadd.f32 %v1994, %v2078
        %v2119 = vadd.f32 %v1995, %v2079
        %v2120 = vadd.f32 %v1996, %v2080
        %v2121 = vadd.f32 %v1997, %v2081
        %v2122 = vadd.f32 %v1998, %v2082
        %v2123 = vadd.f32 %v1999, %v2083
        %v2124 = vadd.f32 %v2000, %v2084
        %v2125 = vadd.f32 %v2001, %v2085
        %v2126 = vadd.f32 %v2002, %v2086
        %v2127 = vadd.f32 %v2003, %v2087
        %v2128 = vadd.f32 %v2004, %v2088
        %v2129 = vld [vmem:[%s1880 + $0x1] sm:$0xff]
        %v2130 = vld [vmem:[%s1880 + $0x9] sm:$0xff]
        %v2131 = vld [vmem:[%s1880 + $0x11] sm:$0xff]
        %v2132 = vld [vmem:[%s1880 + $0x19] sm:$0xff]
        %v2133 = vld [vmem:[%s1880 + $0x21] sm:$0xff]
        %v2134 = vld [vmem:[%s1880 + $0x29] sm:$0xff]
        %v2135 = vld [vmem:[%s1880 + $0x31] sm:$0xff]
        %v2136 = vld [vmem:[%s1880 + $0x39] sm:$0xff]
        %v2137 = vld [vmem:[%s1880 + $0x41] sm:$0xff]
        %v2138 = vld [vmem:[%s1880 + $0x49] sm:$0xff]
        %v2139 = vld [vmem:[%s1880 + $0x71] sm:$0xff]
        %v2140 = vld [vmem:[%s1880 + $0x79] sm:$0xff]
        %v2141 = vld [vmem:[%s1880 + $0x81] sm:$0xff]
        %v2142 = vld [vmem:[%s1880 + $0x89] sm:$0xff]
        %v2143 = vld [vmem:[%s1880 + $0x91] sm:$0xff]
        %v2144 = vld [vmem:[%s1880 + $0x99] sm:$0xff]
        %v2145 = vld [vmem:[%s1880 + $0xa1] sm:$0xff]
        %v2146 = vld [vmem:[%s1880 + $0xa9] sm:$0xff]
        %v2147 = vld [vmem:[%s1880 + $0xb1] sm:$0xff]
        %v2148 = vld [vmem:[%s1880 + $0xb9] sm:$0xff]
        %v2149 = vld [vmem:[%s1880 + $0xe1] sm:$0xff]
        %v2150 = vld [vmem:[%s1880 + $0xe9] sm:$0xff]
        %v2151 = vld [vmem:[%s1880 + $0xf1] sm:$0xff]
        %v2152 = vld [vmem:[%s1880 + $0xf9] sm:$0xff]
        %v2153 = vld [vmem:[%s1880 + $0x101] sm:$0xff]
        %v2154 = vld [vmem:[%s1880 + $0x109] sm:$0xff]
        %v2155 = vld [vmem:[%s1880 + $0x111] sm:$0xff]
        %v2156 = vld [vmem:[%s1880 + $0x119] sm:$0xff]
        %v2157 = vld [vmem:[%s1880 + $0x121] sm:$0xff]
        %v2158 = vld [vmem:[%s1880 + $0x129] sm:$0xff]
        %v2159 = vld [vmem:[%s1880 + $0x151] sm:$0xff]
        %v2160 = vld [vmem:[%s1880 + $0x159] sm:$0xff]
        %v2161 = vld [vmem:[%s1880 + $0x161] sm:$0xff]
        %v2162 = vld [vmem:[%s1880 + $0x169] sm:$0xff]
        %v2163 = vld [vmem:[%s1880 + $0x171] sm:$0xff]
        %v2164 = vld [vmem:[%s1880 + $0x179] sm:$0xff]
        %v2165 = vld [vmem:[%s1880 + $0x181] sm:$0xff]
        %v2166 = vld [vmem:[%s1880 + $0x189] sm:$0xff]
        %v2167 = vld [vmem:[%s1880 + $0x191] sm:$0xff]
        %v2168 = vld [vmem:[%s1880 + $0x199] sm:$0xff]
        %v2169 = vlaneseq
        %v2170 = vshrl.u32 %v2169, 7
        %v2171 = vsub.s32 0, %v2170
        %v2172 = vrot.slane %v1130, %v2171
        %v2173 = vmul.f32 %v2129, %v2172
        %v2174 = vmul.f32 %v2130, %v2172
        %v2175 = vmul.f32 %v2131, %v2172
        %v2176 = vmul.f32 %v2132, %v2172
        %v2177 = vmul.f32 %v2133, %v2172
        %v2178 = vmul.f32 %v2134, %v2172
        %v2179 = vmul.f32 %v2135, %v2172
        %v2180 = vmul.f32 %v2136, %v2172
        %v2181 = vmul.f32 %v2137, %v2172
        %v2182 = vmul.f32 %v2138, %v2172
        %v2183 = vmul.f32 %v2139, %v2172
        %v2184 = vmul.f32 %v2140, %v2172
        %v2185 = vmul.f32 %v2141, %v2172
        %v2186 = vmul.f32 %v2142, %v2172
        %v2187 = vmul.f32 %v2143, %v2172
        %v2188 = vmul.f32 %v2144, %v2172
        %v2189 = vmul.f32 %v2145, %v2172
        %v2190 = vmul.f32 %v2146, %v2172
        %v2191 = vmul.f32 %v2147, %v2172
        %v2192 = vmul.f32 %v2148, %v2172
        %v2193 = vmul.f32 %v2149, %v2172
        %v2194 = vmul.f32 %v2150, %v2172
        %v2195 = vmul.f32 %v2151, %v2172
        %v2196 = vmul.f32 %v2152, %v2172
        %v2197 = vmul.f32 %v2153, %v2172
        %v2198 = vmul.f32 %v2154, %v2172
        %v2199 = vmul.f32 %v2155, %v2172
        %v2200 = vmul.f32 %v2156, %v2172
        %v2201 = vmul.f32 %v2157, %v2172
        %v2202 = vmul.f32 %v2158, %v2172
        %v2203 = vmul.f32 %v2159, %v2172
        %v2204 = vmul.f32 %v2160, %v2172
        %v2205 = vmul.f32 %v2161, %v2172
        %v2206 = vmul.f32 %v2162, %v2172
        %v2207 = vmul.f32 %v2163, %v2172
        %v2208 = vmul.f32 %v2164, %v2172
        %v2209 = vmul.f32 %v2165, %v2172
        %v2210 = vmul.f32 %v2166, %v2172
        %v2211 = vmul.f32 %v2167, %v2172
        %v2212 = vmul.f32 %v2168, %v2172
        %v2213 = vadd.f32 %v2089, %v2173
        %v2214 = vadd.f32 %v2090, %v2174
        %v2215 = vadd.f32 %v2091, %v2175
        %v2216 = vadd.f32 %v2092, %v2176
        %v2217 = vadd.f32 %v2093, %v2177
        %v2218 = vadd.f32 %v2094, %v2178
        %v2219 = vadd.f32 %v2095, %v2179
        %v2220 = vadd.f32 %v2096, %v2180
        %v2221 = vadd.f32 %v2097, %v2181
        %v2222 = vadd.f32 %v2098, %v2182
        %v2223 = vadd.f32 %v2099, %v2183
        %v2224 = vadd.f32 %v2100, %v2184
        %v2225 = vadd.f32 %v2101, %v2185
        %v2226 = vadd.f32 %v2102, %v2186
        %v2227 = vadd.f32 %v2103, %v2187
        %v2228 = vadd.f32 %v2104, %v2188
        %v2229 = vadd.f32 %v2105, %v2189
        %v2230 = vadd.f32 %v2106, %v2190
        %v2231 = vadd.f32 %v2107, %v2191
        %v2232 = vadd.f32 %v2108, %v2192
        %v2233 = vadd.f32 %v2109, %v2193
        %v2234 = vadd.f32 %v2110, %v2194
        %v2235 = vadd.f32 %v2111, %v2195
        %v2236 = vadd.f32 %v2112, %v2196
        %v2237 = vadd.f32 %v2113, %v2197
        %v2238 = vadd.f32 %v2114, %v2198
        %v2239 = vadd.f32 %v2115, %v2199
        %v2240 = vadd.f32 %v2116, %v2200
        %v2241 = vadd.f32 %v2117, %v2201
        %v2242 = vadd.f32 %v2118, %v2202
        %v2243 = vadd.f32 %v2119, %v2203
        %v2244 = vadd.f32 %v2120, %v2204
        %v2245 = vadd.f32 %v2121, %v2205
        %v2246 = vadd.f32 %v2122, %v2206
        %v2247 = vadd.f32 %v2123, %v2207
        %v2248 = vadd.f32 %v2124, %v2208
        %v2249 = vadd.f32 %v2125, %v2209
        %v2250 = vadd.f32 %v2126, %v2210
        %v2251 = vadd.f32 %v2127, %v2211
        %v2252 = vadd.f32 %v2128, %v2212
        %v2253 = vld [vmem:[%s1755 + $0x2] sm:$0xff]
        %v2254 = vld [vmem:[%s1755 + $0xa] sm:$0xff]
        %v2255 = vld [vmem:[%s1755 + $0x12] sm:$0xff]
        %v2256 = vld [vmem:[%s1755 + $0x1a] sm:$0xff]
        %v2257 = vld [vmem:[%s1755 + $0x22] sm:$0xff]
        %v2258 = vld [vmem:[%s1755 + $0x2a] sm:$0xff]
        %v2259 = vld [vmem:[%s1755 + $0x32] sm:$0xff]
        %v2260 = vld [vmem:[%s1755 + $0x3a] sm:$0xff]
        %v2261 = vld [vmem:[%s1755 + $0x42] sm:$0xff]
        %v2262 = vld [vmem:[%s1755 + $0x4a] sm:$0xff]
        %v2263 = vld [vmem:[%s1755 + $0x72] sm:$0xff]
        %v2264 = vld [vmem:[%s1755 + $0x7a] sm:$0xff]
        %v2265 = vld [vmem:[%s1755 + $0x82] sm:$0xff]
        %v2266 = vld [vmem:[%s1755 + $0x8a] sm:$0xff]
        %v2267 = vld [vmem:[%s1755 + $0x92] sm:$0xff]
        %v2268 = vld [vmem:[%s1755 + $0x9a] sm:$0xff]
        %v2269 = vld [vmem:[%s1755 + $0xa2] sm:$0xff]
        %v2270 = vld [vmem:[%s1755 + $0xaa] sm:$0xff]
        %v2271 = vld [vmem:[%s1755 + $0xb2] sm:$0xff]
        %v2272 = vld [vmem:[%s1755 + $0xba] sm:$0xff]
        %v2273 = vld [vmem:[%s1755 + $0xe2] sm:$0xff]
        %v2274 = vld [vmem:[%s1755 + $0xea] sm:$0xff]
        %v2275 = vld [vmem:[%s1755 + $0xf2] sm:$0xff]
        %v2276 = vld [vmem:[%s1755 + $0xfa] sm:$0xff]
        %v2277 = vld [vmem:[%s1755 + $0x102] sm:$0xff]
        %v2278 = vld [vmem:[%s1755 + $0x10a] sm:$0xff]
        %v2279 = vld [vmem:[%s1755 + $0x112] sm:$0xff]
        %v2280 = vld [vmem:[%s1755 + $0x11a] sm:$0xff]
        %v2281 = vld [vmem:[%s1755 + $0x122] sm:$0xff]
        %v2282 = vld [vmem:[%s1755 + $0x12a] sm:$0xff]
        %v2283 = vld [vmem:[%s1755 + $0x152] sm:$0xff]
        %v2284 = vld [vmem:[%s1755 + $0x15a] sm:$0xff]
        %v2285 = vld [vmem:[%s1755 + $0x162] sm:$0xff]
        %v2286 = vld [vmem:[%s1755 + $0x16a] sm:$0xff]
        %v2287 = vld [vmem:[%s1755 + $0x172] sm:$0xff]
        %v2288 = vld [vmem:[%s1755 + $0x17a] sm:$0xff]
        %v2289 = vld [vmem:[%s1755 + $0x182] sm:$0xff]
        %v2290 = vld [vmem:[%s1755 + $0x18a] sm:$0xff]
        %v2291 = vld [vmem:[%s1755 + $0x192] sm:$0xff]
        %v2292 = vld [vmem:[%s1755 + $0x19a] sm:$0xff]
        %v2293 = vlaneseq
        %v2294 = vshrl.u32 %v2293, 7
        %v2295 = vsub.s32 1, %v2294
        %v2296 = vrot.slane %v1130, %v2295
        %v2297 = vmul.f32 %v2253, %v2296
        %v2298 = vmul.f32 %v2254, %v2296
        %v2299 = vmul.f32 %v2255, %v2296
        %v2300 = vmul.f32 %v2256, %v2296
        %v2301 = vmul.f32 %v2257, %v2296
        %v2302 = vmul.f32 %v2258, %v2296
        %v2303 = vmul.f32 %v2259, %v2296
        %v2304 = vmul.f32 %v2260, %v2296
        %v2305 = vmul.f32 %v2261, %v2296
        %v2306 = vmul.f32 %v2262, %v2296
        %v2307 = vmul.f32 %v2263, %v2296
        %v2308 = vmul.f32 %v2264, %v2296
        %v2309 = vmul.f32 %v2265, %v2296
        %v2310 = vmul.f32 %v2266, %v2296
        %v2311 = vmul.f32 %v2267, %v2296
        %v2312 = vmul.f32 %v2268, %v2296
        %v2313 = vmul.f32 %v2269, %v2296
        %v2314 = vmul.f32 %v2270, %v2296
        %v2315 = vmul.f32 %v2271, %v2296
        %v2316 = vmul.f32 %v2272, %v2296
        %v2317 = vmul.f32 %v2273, %v2296
        %v2318 = vmul.f32 %v2274, %v2296
        %v2319 = vmul.f32 %v2275, %v2296
        %v2320 = vmul.f32 %v2276, %v2296
        %v2321 = vmul.f32 %v2277, %v2296
        %v2322 = vmul.f32 %v2278, %v2296
        %v2323 = vmul.f32 %v2279, %v2296
        %v2324 = vmul.f32 %v2280, %v2296
        %v2325 = vmul.f32 %v2281, %v2296
        %v2326 = vmul.f32 %v2282, %v2296
        %v2327 = vmul.f32 %v2283, %v2296
        %v2328 = vmul.f32 %v2284, %v2296
        %v2329 = vmul.f32 %v2285, %v2296
        %v2330 = vmul.f32 %v2286, %v2296
        %v2331 = vmul.f32 %v2287, %v2296
        %v2332 = vmul.f32 %v2288, %v2296
        %v2333 = vmul.f32 %v2289, %v2296
        %v2334 = vmul.f32 %v2290, %v2296
        %v2335 = vmul.f32 %v2291, %v2296
        %v2336 = vmul.f32 %v2292, %v2296
        %v2337 = vadd.f32 %v2213, %v2297
        %v2338 = vadd.f32 %v2214, %v2298
        %v2339 = vadd.f32 %v2215, %v2299
        %v2340 = vadd.f32 %v2216, %v2300
        %v2341 = vadd.f32 %v2217, %v2301
        %v2342 = vadd.f32 %v2218, %v2302
        %v2343 = vadd.f32 %v2219, %v2303
        %v2344 = vadd.f32 %v2220, %v2304
        %v2345 = vadd.f32 %v2221, %v2305
        %v2346 = vadd.f32 %v2222, %v2306
        %v2347 = vadd.f32 %v2223, %v2307
        %v2348 = vadd.f32 %v2224, %v2308
        %v2349 = vadd.f32 %v2225, %v2309
        %v2350 = vadd.f32 %v2226, %v2310
        %v2351 = vadd.f32 %v2227, %v2311
        %v2352 = vadd.f32 %v2228, %v2312
        %v2353 = vadd.f32 %v2229, %v2313
        %v2354 = vadd.f32 %v2230, %v2314
        %v2355 = vadd.f32 %v2231, %v2315
        %v2356 = vadd.f32 %v2232, %v2316
        %v2357 = vadd.f32 %v2233, %v2317
        %v2358 = vadd.f32 %v2234, %v2318
        %v2359 = vadd.f32 %v2235, %v2319
        %v2360 = vadd.f32 %v2236, %v2320
        %v2361 = vadd.f32 %v2237, %v2321
        %v2362 = vadd.f32 %v2238, %v2322
        %v2363 = vadd.f32 %v2239, %v2323
        %v2364 = vadd.f32 %v2240, %v2324
        %v2365 = vadd.f32 %v2241, %v2325
        %v2366 = vadd.f32 %v2242, %v2326
        %v2367 = vadd.f32 %v2243, %v2327
        %v2368 = vadd.f32 %v2244, %v2328
        %v2369 = vadd.f32 %v2245, %v2329
        %v2370 = vadd.f32 %v2246, %v2330
        %v2371 = vadd.f32 %v2247, %v2331
        %v2372 = vadd.f32 %v2248, %v2332
        %v2373 = vadd.f32 %v2249, %v2333
        %v2374 = vadd.f32 %v2250, %v2334
        %v2375 = vadd.f32 %v2251, %v2335
        %v2376 = vadd.f32 %v2252, %v2336
        %v2377 = vld [vmem:[%s1098 + $0x52] sm:$0xff]
        %v2378 = vld [vmem:[%s1098 + $0xc2] sm:$0xff]
        %v2379 = vld [vmem:[%s1098 + $0x132] sm:$0xff]
        %v2380 = vld [vmem:[%s1098 + $0x1a2] sm:$0xff]
        %v2381 = vlaneseq
        %v2382 = vshrl.u32 %v2381, 7
        %v2383 = vsub.s32 2, %v2382
        %v2384 = vrot.slane %v1130, %v2383
        %v2385 = vmul.f32 %v1632, %v2384
        %v2386 = vmul.f32 %v1633, %v2384
        %v2387 = vmul.f32 %v1634, %v2384
        %v2388 = vmul.f32 %v1635, %v2384
        %v2389 = vmul.f32 %v1636, %v2384
        %v2390 = vmul.f32 %v1637, %v2384
        %v2391 = vmul.f32 %v1638, %v2384
        %v2392 = vmul.f32 %v1639, %v2384
        %v2393 = vmul.f32 %v1640, %v2384
        %v2394 = vmul.f32 %v2377, %v2384
        %v2395 = vmul.f32 %v1642, %v2384
        %v2396 = vmul.f32 %v1643, %v2384
        %v2397 = vmul.f32 %v1644, %v2384
        %v2398 = vmul.f32 %v1645, %v2384
        %v2399 = vmul.f32 %v1646, %v2384
        %v2400 = vmul.f32 %v1647, %v2384
        %v2401 = vmul.f32 %v1648, %v2384
        %v2402 = vmul.f32 %v1649, %v2384
        %v2403 = vmul.f32 %v1650, %v2384
        %v2404 = vmul.f32 %v2378, %v2384
        %v2405 = vmul.f32 %v1652, %v2384
        %v2406 = vmul.f32 %v1653, %v2384
        %v2407 = vmul.f32 %v1654, %v2384
        %v2408 = vmul.f32 %v1655, %v2384
        %v2409 = vmul.f32 %v1656, %v2384
        %v2410 = vmul.f32 %v1657, %v2384
        %v2411 = vmul.f32 %v1658, %v2384
        %v2412 = vmul.f32 %v1659, %v2384
        %v2413 = vmul.f32 %v1660, %v2384
        %v2414 = vmul.f32 %v2379, %v2384
        %v2415 = vmul.f32 %v1662, %v2384
        %v2416 = vmul.f32 %v1663, %v2384
        %v2417 = vmul.f32 %v1664, %v2384
        %v2418 = vmul.f32 %v1665, %v2384
        %v2419 = vmul.f32 %v1666, %v2384
        %v2420 = vmul.f32 %v1667, %v2384
        %v2421 = vmul.f32 %v1668, %v2384
        %v2422 = vmul.f32 %v1669, %v2384
        %v2423 = vmul.f32 %v1670, %v2384
        %v2424 = vmul.f32 %v2380, %v2384
        %v2425 = vadd.f32 %v2337, %v2385
        %v2426 = vadd.f32 %v2338, %v2386
        %v2427 = vadd.f32 %v2339, %v2387
        %v2428 = vadd.f32 %v2340, %v2388
        %v2429 = vadd.f32 %v2341, %v2389
        %v2430 = vadd.f32 %v2342, %v2390
        %v2431 = vadd.f32 %v2343, %v2391
        %v2432 = vadd.f32 %v2344, %v2392
        %v2433 = vadd.f32 %v2345, %v2393
        %v2434 = vadd.f32 %v2346, %v2394
        %v2435 = vadd.f32 %v2347, %v2395
        %v2436 = vadd.f32 %v2348, %v2396
        %v2437 = vadd.f32 %v2349, %v2397
        %v2438 = vadd.f32 %v2350, %v2398
        %v2439 = vadd.f32 %v2351, %v2399
        %v2440 = vadd.f32 %v2352, %v2400
        %v2441 = vadd.f32 %v2353, %v2401
        %v2442 = vadd.f32 %v2354, %v2402
        %v2443 = vadd.f32 %v2355, %v2403
        %v2444 = vadd.f32 %v2356, %v2404
        %v2445 = vadd.f32 %v2357, %v2405
        %v2446 = vadd.f32 %v2358, %v2406
        %v2447 = vadd.f32 %v2359, %v2407
        %v2448 = vadd.f32 %v2360, %v2408
        %v2449 = vadd.f32 %v2361, %v2409
        %v2450 = vadd.f32 %v2362, %v2410
        %v2451 = vadd.f32 %v2363, %v2411
        %v2452 = vadd.f32 %v2364, %v2412
        %v2453 = vadd.f32 %v2365, %v2413
        %v2454 = vadd.f32 %v2366, %v2414
        %v2455 = vadd.f32 %v2367, %v2415
        %v2456 = vadd.f32 %v2368, %v2416
        %v2457 = vadd.f32 %v2369, %v2417
        %v2458 = vadd.f32 %v2370, %v2418
        %v2459 = vadd.f32 %v2371, %v2419
        %v2460 = vadd.f32 %v2372, %v2420
        %v2461 = vadd.f32 %v2373, %v2421
        %v2462 = vadd.f32 %v2374, %v2422
        %v2463 = vadd.f32 %v2375, %v2423
        %v2464 = vadd.f32 %v2376, %v2424
        %v2465 = vld [vmem:[%s1258 + $0xa] sm:$0xff]
        %v2466 = vld [vmem:[%s1258 + $0x12] sm:$0xff]
        %v2467 = vld [vmem:[%s1258 + $0x1a] sm:$0xff]
        %v2468 = vld [vmem:[%s1258 + $0x22] sm:$0xff]
        %v2469 = vld [vmem:[%s1258 + $0x2a] sm:$0xff]
        %v2470 = vld [vmem:[%s1258 + $0x32] sm:$0xff]
        %v2471 = vld [vmem:[%s1258 + $0x3a] sm:$0xff]
        %v2472 = vld [vmem:[%s1258 + $0x42] sm:$0xff]
        %v2473 = vld [vmem:[%s1258 + $0x4a] sm:$0xff]
        %v2474 = vld [vmem:[%s1258 + $0x52] sm:$0xff]
        %v2475 = vld [vmem:[%s1258 + $0x7a] sm:$0xff]
        %v2476 = vld [vmem:[%s1258 + $0x82] sm:$0xff]
        %v2477 = vld [vmem:[%s1258 + $0x8a] sm:$0xff]
        %v2478 = vld [vmem:[%s1258 + $0x92] sm:$0xff]
        %v2479 = vld [vmem:[%s1258 + $0x9a] sm:$0xff]
        %v2480 = vld [vmem:[%s1258 + $0xa2] sm:$0xff]
        %v2481 = vld [vmem:[%s1258 + $0xaa] sm:$0xff]
        %v2482 = vld [vmem:[%s1258 + $0xb2] sm:$0xff]
        %v2483 = vld [vmem:[%s1258 + $0xba] sm:$0xff]
        %v2484 = vld [vmem:[%s1258 + $0xc2] sm:$0xff]
        %v2485 = vld [vmem:[%s1258 + $0xea] sm:$0xff]
        %v2486 = vld [vmem:[%s1258 + $0xf2] sm:$0xff]
        %v2487 = vld [vmem:[%s1258 + $0xfa] sm:$0xff]
        %v2488 = vld [vmem:[%s1258 + $0x102] sm:$0xff]
        %v2489 = vld [vmem:[%s1258 + $0x10a] sm:$0xff]
        %v2490 = vld [vmem:[%s1258 + $0x112] sm:$0xff]
        %v2491 = vld [vmem:[%s1258 + $0x11a] sm:$0xff]
        %v2492 = vld [vmem:[%s1258 + $0x122] sm:$0xff]
        %v2493 = vld [vmem:[%s1258 + $0x12a] sm:$0xff]
        %v2494 = vld [vmem:[%s1258 + $0x132] sm:$0xff]
        %v2495 = vld [vmem:[%s1258 + $0x15a] sm:$0xff]
        %v2496 = vld [vmem:[%s1258 + $0x162] sm:$0xff]
        %v2497 = vld [vmem:[%s1258 + $0x16a] sm:$0xff]
        %v2498 = vld [vmem:[%s1258 + $0x172] sm:$0xff]
        %v2499 = vld [vmem:[%s1258 + $0x17a] sm:$0xff]
        %v2500 = vld [vmem:[%s1258 + $0x182] sm:$0xff]
        %v2501 = vld [vmem:[%s1258 + $0x18a] sm:$0xff]
        %v2502 = vld [vmem:[%s1258 + $0x192] sm:$0xff]
        %v2503 = vld [vmem:[%s1258 + $0x19a] sm:$0xff]
        %v2504 = vld [vmem:[%s1258 + $0x1a2] sm:$0xff]
        %v2505 = vlaneseq
        %v2506 = vshrl.u32 %v2505, 7
        %v2507 = vsub.s32 3, %v2506
        %v2508 = vrot.slane %v1130, %v2507
        %v2509 = vmul.f32 %v2465, %v2508
        %v2510 = vmul.f32 %v2466, %v2508
        %v2511 = vmul.f32 %v2467, %v2508
        %v2512 = vmul.f32 %v2468, %v2508
        %v2513 = vmul.f32 %v2469, %v2508
        %v2514 = vmul.f32 %v2470, %v2508
        %v2515 = vmul.f32 %v2471, %v2508
        %v2516 = vmul.f32 %v2472, %v2508
        %v2517 = vmul.f32 %v2473, %v2508
        %v2518 = vmul.f32 %v2474, %v2508
        %v2519 = vmul.f32 %v2475, %v2508
        %v2520 = vmul.f32 %v2476, %v2508
        %v2521 = vmul.f32 %v2477, %v2508
        %v2522 = vmul.f32 %v2478, %v2508
        %v2523 = vmul.f32 %v2479, %v2508
        %v2524 = vmul.f32 %v2480, %v2508
        %v2525 = vmul.f32 %v2481, %v2508
        %v2526 = vmul.f32 %v2482, %v2508
        %v2527 = vmul.f32 %v2483, %v2508
        %v2528 = vmul.f32 %v2484, %v2508
        %v2529 = vmul.f32 %v2485, %v2508
        %v2530 = vmul.f32 %v2486, %v2508
        %v2531 = vmul.f32 %v2487, %v2508
        %v2532 = vmul.f32 %v2488, %v2508
        %v2533 = vmul.f32 %v2489, %v2508
        %v2534 = vmul.f32 %v2490, %v2508
        %v2535 = vmul.f32 %v2491, %v2508
        %v2536 = vmul.f32 %v2492, %v2508
        %v2537 = vmul.f32 %v2493, %v2508
        %v2538 = vmul.f32 %v2494, %v2508
        %v2539 = vmul.f32 %v2495, %v2508
        %v2540 = vmul.f32 %v2496, %v2508
        %v2541 = vmul.f32 %v2497, %v2508
        %v2542 = vmul.f32 %v2498, %v2508
        %v2543 = vmul.f32 %v2499, %v2508
        %v2544 = vmul.f32 %v2500, %v2508
        %v2545 = vmul.f32 %v2501, %v2508
        %v2546 = vmul.f32 %v2502, %v2508
        %v2547 = vmul.f32 %v2503, %v2508
        %v2548 = vmul.f32 %v2504, %v2508
        %v2549 = vadd.f32 %v2425, %v2509
        %v2550 = vadd.f32 %v2426, %v2510
        %v2551 = vadd.f32 %v2427, %v2511
        %v2552 = vadd.f32 %v2428, %v2512
        %v2553 = vadd.f32 %v2429, %v2513
        %v2554 = vadd.f32 %v2430, %v2514
        %v2555 = vadd.f32 %v2431, %v2515
        %v2556 = vadd.f32 %v2432, %v2516
        %v2557 = vadd.f32 %v2433, %v2517
        %v2558 = vadd.f32 %v2434, %v2518
        %v2559 = vadd.f32 %v2435, %v2519
        %v2560 = vadd.f32 %v2436, %v2520
        %v2561 = vadd.f32 %v2437, %v2521
        %v2562 = vadd.f32 %v2438, %v2522
        %v2563 = vadd.f32 %v2439, %v2523
        %v2564 = vadd.f32 %v2440, %v2524
        %v2565 = vadd.f32 %v2441, %v2525
        %v2566 = vadd.f32 %v2442, %v2526
        %v2567 = vadd.f32 %v2443, %v2527
        %v2568 = vadd.f32 %v2444, %v2528
        %v2569 = vadd.f32 %v2445, %v2529
        %v2570 = vadd.f32 %v2446, %v2530
        %v2571 = vadd.f32 %v2447, %v2531
        %v2572 = vadd.f32 %v2448, %v2532
        %v2573 = vadd.f32 %v2449, %v2533
        %v2574 = vadd.f32 %v2450, %v2534
        %v2575 = vadd.f32 %v2451, %v2535
        %v2576 = vadd.f32 %v2452, %v2536
        %v2577 = vadd.f32 %v2453, %v2537
        %v2578 = vadd.f32 %v2454, %v2538
        %v2579 = vadd.f32 %v2455, %v2539
        %v2580 = vadd.f32 %v2456, %v2540
        %v2581 = vadd.f32 %v2457, %v2541
        %v2582 = vadd.f32 %v2458, %v2542
        %v2583 = vadd.f32 %v2459, %v2543
        %v2584 = vadd.f32 %v2460, %v2544
        %v2585 = vadd.f32 %v2461, %v2545
        %v2586 = vadd.f32 %v2462, %v2546
        %v2587 = vadd.f32 %v2463, %v2547
        %v2588 = vadd.f32 %v2464, %v2548
        %v2589 = vld [vmem:[%s1098 + $0xb] sm:$0xff]
        %v2590 = vld [vmem:[%s1098 + $0x13] sm:$0xff]
        %v2591 = vld [vmem:[%s1098 + $0x1b] sm:$0xff]
        %v2592 = vld [vmem:[%s1098 + $0x23] sm:$0xff]
        %v2593 = vld [vmem:[%s1098 + $0x2b] sm:$0xff]
        %v2594 = vld [vmem:[%s1098 + $0x33] sm:$0xff]
        %v2595 = vld [vmem:[%s1098 + $0x3b] sm:$0xff]
        %v2596 = vld [vmem:[%s1098 + $0x43] sm:$0xff]
        %v2597 = vld [vmem:[%s1098 + $0x4b] sm:$0xff]
        %v2598 = vld [vmem:[%s1098 + $0x53] sm:$0xff]
        %v2599 = vld [vmem:[%s1098 + $0x7b] sm:$0xff]
        %v2600 = vld [vmem:[%s1098 + $0x83] sm:$0xff]
        %v2601 = vld [vmem:[%s1098 + $0x8b] sm:$0xff]
        %v2602 = vld [vmem:[%s1098 + $0x93] sm:$0xff]
        %v2603 = vld [vmem:[%s1098 + $0x9b] sm:$0xff]
        %v2604 = vld [vmem:[%s1098 + $0xa3] sm:$0xff]
        %v2605 = vld [vmem:[%s1098 + $0xab] sm:$0xff]
        %v2606 = vld [vmem:[%s1098 + $0xb3] sm:$0xff]
        %v2607 = vld [vmem:[%s1098 + $0xbb] sm:$0xff]
        %v2608 = vld [vmem:[%s1098 + $0xc3] sm:$0xff]
        %v2609 = vld [vmem:[%s1098 + $0xeb] sm:$0xff]
        %v2610 = vld [vmem:[%s1098 + $0xf3] sm:$0xff]
        %v2611 = vld [vmem:[%s1098 + $0xfb] sm:$0xff]
        %v2612 = vld [vmem:[%s1098 + $0x103] sm:$0xff]
        %v2613 = vld [vmem:[%s1098 + $0x10b] sm:$0xff]
        %v2614 = vld [vmem:[%s1098 + $0x113] sm:$0xff]
        %v2615 = vld [vmem:[%s1098 + $0x11b] sm:$0xff]
        %v2616 = vld [vmem:[%s1098 + $0x123] sm:$0xff]
        %v2617 = vld [vmem:[%s1098 + $0x12b] sm:$0xff]
        %v2618 = vld [vmem:[%s1098 + $0x133] sm:$0xff]
        %v2619 = vld [vmem:[%s1098 + $0x15b] sm:$0xff]
        %v2620 = vld [vmem:[%s1098 + $0x163] sm:$0xff]
        %v2621 = vld [vmem:[%s1098 + $0x16b] sm:$0xff]
        %v2622 = vld [vmem:[%s1098 + $0x173] sm:$0xff]
        %v2623 = vld [vmem:[%s1098 + $0x17b] sm:$0xff]
        %v2624 = vld [vmem:[%s1098 + $0x183] sm:$0xff]
        %v2625 = vld [vmem:[%s1098 + $0x18b] sm:$0xff]
        %v2626 = vld [vmem:[%s1098 + $0x193] sm:$0xff]
        %v2627 = vld [vmem:[%s1098 + $0x19b] sm:$0xff]
        %v2628 = vld [vmem:[%s1098 + $0x1a3] sm:$0xff]
        %v2629 = vlaneseq
        %v2630 = vshrl.u32 %v2629, 7
        %v2631 = vsub.s32 4, %v2630
        %v2632 = vrot.slane %v1130, %v2631
        %v2633 = vmul.f32 %v2589, %v2632
        %v2634 = vmul.f32 %v2590, %v2632
        %v2635 = vmul.f32 %v2591, %v2632
        %v2636 = vmul.f32 %v2592, %v2632
        %v2637 = vmul.f32 %v2593, %v2632
        %v2638 = vmul.f32 %v2594, %v2632
        %v2639 = vmul.f32 %v2595, %v2632
        %v2640 = vmul.f32 %v2596, %v2632
        %v2641 = vmul.f32 %v2597, %v2632
        %v2642 = vmul.f32 %v2598, %v2632
        %v2643 = vmul.f32 %v2599, %v2632
        %v2644 = vmul.f32 %v2600, %v2632
        %v2645 = vmul.f32 %v2601, %v2632
        %v2646 = vmul.f32 %v2602, %v2632
        %v2647 = vmul.f32 %v2603, %v2632
        %v2648 = vmul.f32 %v2604, %v2632
        %v2649 = vmul.f32 %v2605, %v2632
        %v2650 = vmul.f32 %v2606, %v2632
        %v2651 = vmul.f32 %v2607, %v2632
        %v2652 = vmul.f32 %v2608, %v2632
        %v2653 = vmul.f32 %v2609, %v2632
        %v2654 = vmul.f32 %v2610, %v2632
        %v2655 = vmul.f32 %v2611, %v2632
        %v2656 = vmul.f32 %v2612, %v2632
        %v2657 = vmul.f32 %v2613, %v2632
        %v2658 = vmul.f32 %v2614, %v2632
        %v2659 = vmul.f32 %v2615, %v2632
        %v2660 = vmul.f32 %v2616, %v2632
        %v2661 = vmul.f32 %v2617, %v2632
        %v2662 = vmul.f32 %v2618, %v2632
        %v2663 = vmul.f32 %v2619, %v2632
        %v2664 = vmul.f32 %v2620, %v2632
        %v2665 = vmul.f32 %v2621, %v2632
        %v2666 = vmul.f32 %v2622, %v2632
        %v2667 = vmul.f32 %v2623, %v2632
        %v2668 = vmul.f32 %v2624, %v2632
        %v2669 = vmul.f32 %v2625, %v2632
        %v2670 = vmul.f32 %v2626, %v2632
        %v2671 = vmul.f32 %v2627, %v2632
        %v2672 = vmul.f32 %v2628, %v2632
        %v2673 = vadd.f32 %v2549, %v2633
        %v2674 = vadd.f32 %v2550, %v2634
        %v2675 = vadd.f32 %v2551, %v2635
        %v2676 = vadd.f32 %v2552, %v2636
        %v2677 = vadd.f32 %v2553, %v2637
        %v2678 = vadd.f32 %v2554, %v2638
        %v2679 = vadd.f32 %v2555, %v2639
        %v2680 = vadd.f32 %v2556, %v2640
        %v2681 = vadd.f32 %v2557, %v2641
        %v2682 = vadd.f32 %v2558, %v2642
        %v2683 = vadd.f32 %v2559, %v2643
        %v2684 = vadd.f32 %v2560, %v2644
        %v2685 = vadd.f32 %v2561, %v2645
        %v2686 = vadd.f32 %v2562, %v2646
        %v2687 = vadd.f32 %v2563, %v2647
        %v2688 = vadd.f32 %v2564, %v2648
        %v2689 = vadd.f32 %v2565, %v2649
        %v2690 = vadd.f32 %v2566, %v2650
        %v2691 = vadd.f32 %v2567, %v2651
        %v2692 = vadd.f32 %v2568, %v2652
        %v2693 = vadd.f32 %v2569, %v2653
        %v2694 = vadd.f32 %v2570, %v2654
        %v2695 = vadd.f32 %v2571, %v2655
        %v2696 = vadd.f32 %v2572, %v2656
        %v2697 = vadd.f32 %v2573, %v2657
        %v2698 = vadd.f32 %v2574, %v2658
        %v2699 = vadd.f32 %v2575, %v2659
        %v2700 = vadd.f32 %v2576, %v2660
        %v2701 = vadd.f32 %v2577, %v2661
        %v2702 = vadd.f32 %v2578, %v2662
        %v2703 = vadd.f32 %v2579, %v2663
        %v2704 = vadd.f32 %v2580, %v2664
        %v2705 = vadd.f32 %v2581, %v2665
        %v2706 = vadd.f32 %v2582, %v2666
        %v2707 = vadd.f32 %v2583, %v2667
        %v2708 = vadd.f32 %v2584, %v2668
        %v2709 = vadd.f32 %v2585, %v2669
        %v2710 = vadd.f32 %v2586, %v2670
        %v2711 = vadd.f32 %v2587, %v2671
        %v2712 = vadd.f32 %v2588, %v2672
        %v2713 = vld [vmem:[%s1258 + $0xb] sm:$0xff]
        %v2714 = vld [vmem:[%s1258 + $0x13] sm:$0xff]
        %v2715 = vld [vmem:[%s1258 + $0x1b] sm:$0xff]
        %v2716 = vld [vmem:[%s1258 + $0x23] sm:$0xff]
        %v2717 = vld [vmem:[%s1258 + $0x2b] sm:$0xff]
        %v2718 = vld [vmem:[%s1258 + $0x33] sm:$0xff]
        %v2719 = vld [vmem:[%s1258 + $0x3b] sm:$0xff]
        %v2720 = vld [vmem:[%s1258 + $0x43] sm:$0xff]
        %v2721 = vld [vmem:[%s1258 + $0x4b] sm:$0xff]
        %v2722 = vld [vmem:[%s1258 + $0x53] sm:$0xff]
        %v2723 = vld [vmem:[%s1258 + $0x7b] sm:$0xff]
        %v2724 = vld [vmem:[%s1258 + $0x83] sm:$0xff]
        %v2725 = vld [vmem:[%s1258 + $0x8b] sm:$0xff]
        %v2726 = vld [vmem:[%s1258 + $0x93] sm:$0xff]
        %v2727 = vld [vmem:[%s1258 + $0x9b] sm:$0xff]
        %v2728 = vld [vmem:[%s1258 + $0xa3] sm:$0xff]
        %v2729 = vld [vmem:[%s1258 + $0xab] sm:$0xff]
        %v2730 = vld [vmem:[%s1258 + $0xb3] sm:$0xff]
        %v2731 = vld [vmem:[%s1258 + $0xbb] sm:$0xff]
        %v2732 = vld [vmem:[%s1258 + $0xc3] sm:$0xff]
        %v2733 = vld [vmem:[%s1258 + $0xeb] sm:$0xff]
        %v2734 = vld [vmem:[%s1258 + $0xf3] sm:$0xff]
        %v2735 = vld [vmem:[%s1258 + $0xfb] sm:$0xff]
        %v2736 = vld [vmem:[%s1258 + $0x103] sm:$0xff]
        %v2737 = vld [vmem:[%s1258 + $0x10b] sm:$0xff]
        %v2738 = vld [vmem:[%s1258 + $0x113] sm:$0xff]
        %v2739 = vld [vmem:[%s1258 + $0x11b] sm:$0xff]
        %v2740 = vld [vmem:[%s1258 + $0x123] sm:$0xff]
        %v2741 = vld [vmem:[%s1258 + $0x12b] sm:$0xff]
        %v2742 = vld [vmem:[%s1258 + $0x133] sm:$0xff]
        %v2743 = vld [vmem:[%s1258 + $0x15b] sm:$0xff]
        %v2744 = vld [vmem:[%s1258 + $0x163] sm:$0xff]
        %v2745 = vld [vmem:[%s1258 + $0x16b] sm:$0xff]
        %v2746 = vld [vmem:[%s1258 + $0x173] sm:$0xff]
        %v2747 = vld [vmem:[%s1258 + $0x17b] sm:$0xff]
        %v2748 = vld [vmem:[%s1258 + $0x183] sm:$0xff]
        %v2749 = vld [vmem:[%s1258 + $0x18b] sm:$0xff]
        %v2750 = vld [vmem:[%s1258 + $0x193] sm:$0xff]
        %v2751 = vld [vmem:[%s1258 + $0x19b] sm:$0xff]
        %v2752 = vld [vmem:[%s1258 + $0x1a3] sm:$0xff]
        %v2753 = vlaneseq
        %v2754 = vshrl.u32 %v2753, 7
        %v2755 = vsub.s32 5, %v2754
        %v2756 = vrot.slane %v1130, %v2755
        %v2757 = vmul.f32 %v2713, %v2756
        %v2758 = vmul.f32 %v2714, %v2756
        %v2759 = vmul.f32 %v2715, %v2756
        %v2760 = vmul.f32 %v2716, %v2756
        %v2761 = vmul.f32 %v2717, %v2756
        %v2762 = vmul.f32 %v2718, %v2756
        %v2763 = vmul.f32 %v2719, %v2756
        %v2764 = vmul.f32 %v2720, %v2756
        %v2765 = vmul.f32 %v2721, %v2756
        %v2766 = vmul.f32 %v2722, %v2756
        %v2767 = vmul.f32 %v2723, %v2756
        %v2768 = vmul.f32 %v2724, %v2756
        %v2769 = vmul.f32 %v2725, %v2756
        %v2770 = vmul.f32 %v2726, %v2756
        %v2771 = vmul.f32 %v2727, %v2756
        %v2772 = vmul.f32 %v2728, %v2756
        %v2773 = vmul.f32 %v2729, %v2756
        %v2774 = vmul.f32 %v2730, %v2756
        %v2775 = vmul.f32 %v2731, %v2756
        %v2776 = vmul.f32 %v2732, %v2756
        %v2777 = vmul.f32 %v2733, %v2756
        %v2778 = vmul.f32 %v2734, %v2756
        %v2779 = vmul.f32 %v2735, %v2756
        %v2780 = vmul.f32 %v2736, %v2756
        %v2781 = vmul.f32 %v2737, %v2756
        %v2782 = vmul.f32 %v2738, %v2756
        %v2783 = vmul.f32 %v2739, %v2756
        %v2784 = vmul.f32 %v2740, %v2756
        %v2785 = vmul.f32 %v2741, %v2756
        %v2786 = vmul.f32 %v2742, %v2756
        %v2787 = vmul.f32 %v2743, %v2756
        %v2788 = vmul.f32 %v2744, %v2756
        %v2789 = vmul.f32 %v2745, %v2756
        %v2790 = vmul.f32 %v2746, %v2756
        %v2791 = vmul.f32 %v2747, %v2756
        %v2792 = vmul.f32 %v2748, %v2756
        %v2793 = vmul.f32 %v2749, %v2756
        %v2794 = vmul.f32 %v2750, %v2756
        %v2795 = vmul.f32 %v2751, %v2756
        %v2796 = vmul.f32 %v2752, %v2756
        %v2797 = vadd.f32 %v2673, %v2757
        %v2798 = vadd.f32 %v2674, %v2758
        %v2799 = vadd.f32 %v2675, %v2759
        %v2800 = vadd.f32 %v2676, %v2760
        %v2801 = vadd.f32 %v2677, %v2761
        %v2802 = vadd.f32 %v2678, %v2762
        %v2803 = vadd.f32 %v2679, %v2763
        %v2804 = vadd.f32 %v2680, %v2764
        %v2805 = vadd.f32 %v2681, %v2765
        %v2806 = vadd.f32 %v2682, %v2766
        %v2807 = vadd.f32 %v2683, %v2767
        %v2808 = vadd.f32 %v2684, %v2768
        %v2809 = vadd.f32 %v2685, %v2769
        %v2810 = vadd.f32 %v2686, %v2770
        %v2811 = vadd.f32 %v2687, %v2771
        %v2812 = vadd.f32 %v2688, %v2772
        %v2813 = vadd.f32 %v2689, %v2773
        %v2814 = vadd.f32 %v2690, %v2774
        %v2815 = vadd.f32 %v2691, %v2775
        %v2816 = vadd.f32 %v2692, %v2776
        %v2817 = vadd.f32 %v2693, %v2777
        %v2818 = vadd.f32 %v2694, %v2778
        %v2819 = vadd.f32 %v2695, %v2779
        %v2820 = vadd.f32 %v2696, %v2780
        %v2821 = vadd.f32 %v2697, %v2781
        %v2822 = vadd.f32 %v2698, %v2782
        %v2823 = vadd.f32 %v2699, %v2783
        %v2824 = vadd.f32 %v2700, %v2784
        %v2825 = vadd.f32 %v2701, %v2785
        %v2826 = vadd.f32 %v2702, %v2786
        %v2827 = vadd.f32 %v2703, %v2787
        %v2828 = vadd.f32 %v2704, %v2788
        %v2829 = vadd.f32 %v2705, %v2789
        %v2830 = vadd.f32 %v2706, %v2790
        %v2831 = vadd.f32 %v2707, %v2791
        %v2832 = vadd.f32 %v2708, %v2792
        %v2833 = vadd.f32 %v2709, %v2793
        %v2834 = vadd.f32 %v2710, %v2794
        %v2835 = vadd.f32 %v2711, %v2795
        %v2836 = vadd.f32 %v2712, %v2796
        %v2837 = vld [vmem:[%s1098 + $0xc] sm:$0xff]
        %v2838 = vld [vmem:[%s1098 + $0x14] sm:$0xff]
        %v2839 = vld [vmem:[%s1098 + $0x1c] sm:$0xff]
        %v2840 = vld [vmem:[%s1098 + $0x24] sm:$0xff]
        %v2841 = vld [vmem:[%s1098 + $0x2c] sm:$0xff]
        %v2842 = vld [vmem:[%s1098 + $0x34] sm:$0xff]
        %v2843 = vld [vmem:[%s1098 + $0x3c] sm:$0xff]
        %v2844 = vld [vmem:[%s1098 + $0x44] sm:$0xff]
        %v2845 = vld [vmem:[%s1098 + $0x4c] sm:$0xff]
        %v2846 = vld [vmem:[%s1098 + $0x54] sm:$0xff]
        %v2847 = vld [vmem:[%s1098 + $0x7c] sm:$0xff]
        %v2848 = vld [vmem:[%s1098 + $0x84] sm:$0xff]
        %v2849 = vld [vmem:[%s1098 + $0x8c] sm:$0xff]
        %v2850 = vld [vmem:[%s1098 + $0x94] sm:$0xff]
        %v2851 = vld [vmem:[%s1098 + $0x9c] sm:$0xff]
        %v2852 = vld [vmem:[%s1098 + $0xa4] sm:$0xff]
        %v2853 = vld [vmem:[%s1098 + $0xac] sm:$0xff]
        %v2854 = vld [vmem:[%s1098 + $0xb4] sm:$0xff]
        %v2855 = vld [vmem:[%s1098 + $0xbc] sm:$0xff]
        %v2856 = vld [vmem:[%s1098 + $0xc4] sm:$0xff]
        %v2857 = vld [vmem:[%s1098 + $0xec] sm:$0xff]
        %v2858 = vld [vmem:[%s1098 + $0xf4] sm:$0xff]
        %v2859 = vld [vmem:[%s1098 + $0xfc] sm:$0xff]
        %v2860 = vld [vmem:[%s1098 + $0x104] sm:$0xff]
        %v2861 = vld [vmem:[%s1098 + $0x10c] sm:$0xff]
        %v2862 = vld [vmem:[%s1098 + $0x114] sm:$0xff]
        %v2863 = vld [vmem:[%s1098 + $0x11c] sm:$0xff]
        %v2864 = vld [vmem:[%s1098 + $0x124] sm:$0xff]
        %v2865 = vld [vmem:[%s1098 + $0x12c] sm:$0xff]
        %v2866 = vld [vmem:[%s1098 + $0x134] sm:$0xff]
        %v2867 = vld [vmem:[%s1098 + $0x15c] sm:$0xff]
        %v2868 = vld [vmem:[%s1098 + $0x164] sm:$0xff]
        %v2869 = vld [vmem:[%s1098 + $0x16c] sm:$0xff]
        %v2870 = vld [vmem:[%s1098 + $0x174] sm:$0xff]
        %v2871 = vld [vmem:[%s1098 + $0x17c] sm:$0xff]
        %v2872 = vld [vmem:[%s1098 + $0x184] sm:$0xff]
        %v2873 = vld [vmem:[%s1098 + $0x18c] sm:$0xff]
        %v2874 = vld [vmem:[%s1098 + $0x194] sm:$0xff]
        %v2875 = vld [vmem:[%s1098 + $0x19c] sm:$0xff]
        %v2876 = vld [vmem:[%s1098 + $0x1a4] sm:$0xff]
        %v2877 = vlaneseq
        %v2878 = vshrl.u32 %v2877, 7
        %v2879 = vsub.s32 6, %v2878
        %v2880 = vrot.slane %v1130, %v2879
        %v2881 = vmul.f32 %v2837, %v2880
        %v2882 = vmul.f32 %v2838, %v2880
        %v2883 = vmul.f32 %v2839, %v2880
        %v2884 = vmul.f32 %v2840, %v2880
        %v2885 = vmul.f32 %v2841, %v2880
        %v2886 = vmul.f32 %v2842, %v2880
        %v2887 = vmul.f32 %v2843, %v2880
        %v2888 = vmul.f32 %v2844, %v2880
        %v2889 = vmul.f32 %v2845, %v2880
        %v2890 = vmul.f32 %v2846, %v2880
        %v2891 = vmul.f32 %v2847, %v2880
        %v2892 = vmul.f32 %v2848, %v2880
        %v2893 = vmul.f32 %v2849, %v2880
        %v2894 = vmul.f32 %v2850, %v2880
        %v2895 = vmul.f32 %v2851, %v2880
        %v2896 = vmul.f32 %v2852, %v2880
        %v2897 = vmul.f32 %v2853, %v2880
        %v2898 = vmul.f32 %v2854, %v2880
        %v2899 = vmul.f32 %v2855, %v2880
        %v2900 = vmul.f32 %v2856, %v2880
        %v2901 = vmul.f32 %v2857, %v2880
        %v2902 = vmul.f32 %v2858, %v2880
        %v2903 = vmul.f32 %v2859, %v2880
        %v2904 = vmul.f32 %v2860, %v2880
        %v2905 = vmul.f32 %v2861, %v2880
        %v2906 = vmul.f32 %v2862, %v2880
        %v2907 = vmul.f32 %v2863, %v2880
        %v2908 = vmul.f32 %v2864, %v2880
        %v2909 = vmul.f32 %v2865, %v2880
        %v2910 = vmul.f32 %v2866, %v2880
        %v2911 = vmul.f32 %v2867, %v2880
        %v2912 = vmul.f32 %v2868, %v2880
        %v2913 = vmul.f32 %v2869, %v2880
        %v2914 = vmul.f32 %v2870, %v2880
        %v2915 = vmul.f32 %v2871, %v2880
        %v2916 = vmul.f32 %v2872, %v2880
        %v2917 = vmul.f32 %v2873, %v2880
        %v2918 = vmul.f32 %v2874, %v2880
        %v2919 = vmul.f32 %v2875, %v2880
        %v2920 = vmul.f32 %v2876, %v2880
        %v2921 = vadd.f32 %v2797, %v2881
        %v2922 = vadd.f32 %v2798, %v2882
        %v2923 = vadd.f32 %v2799, %v2883
        %v2924 = vadd.f32 %v2800, %v2884
        %v2925 = vadd.f32 %v2801, %v2885
        %v2926 = vadd.f32 %v2802, %v2886
        %v2927 = vadd.f32 %v2803, %v2887
        %v2928 = vadd.f32 %v2804, %v2888
        %v2929 = vadd.f32 %v2805, %v2889
        %v2930 = vadd.f32 %v2806, %v2890
        %v2931 = vadd.f32 %v2807, %v2891
        %v2932 = vadd.f32 %v2808, %v2892
        %v2933 = vadd.f32 %v2809, %v2893
        %v2934 = vadd.f32 %v2810, %v2894
        %v2935 = vadd.f32 %v2811, %v2895
        %v2936 = vadd.f32 %v2812, %v2896
        %v2937 = vadd.f32 %v2813, %v2897
        %v2938 = vadd.f32 %v2814, %v2898
        %v2939 = vadd.f32 %v2815, %v2899
        %v2940 = vadd.f32 %v2816, %v2900
        %v2941 = vadd.f32 %v2817, %v2901
        %v2942 = vadd.f32 %v2818, %v2902
        %v2943 = vadd.f32 %v2819, %v2903
        %v2944 = vadd.f32 %v2820, %v2904
        %v2945 = vadd.f32 %v2821, %v2905
        %v2946 = vadd.f32 %v2822, %v2906
        %v2947 = vadd.f32 %v2823, %v2907
        %v2948 = vadd.f32 %v2824, %v2908
        %v2949 = vadd.f32 %v2825, %v2909
        %v2950 = vadd.f32 %v2826, %v2910
        %v2951 = vadd.f32 %v2827, %v2911
        %v2952 = vadd.f32 %v2828, %v2912
        %v2953 = vadd.f32 %v2829, %v2913
        %v2954 = vadd.f32 %v2830, %v2914
        %v2955 = vadd.f32 %v2831, %v2915
        %v2956 = vadd.f32 %v2832, %v2916
        %v2957 = vadd.f32 %v2833, %v2917
        %v2958 = vadd.f32 %v2834, %v2918
        %v2959 = vadd.f32 %v2835, %v2919
        %v2960 = vadd.f32 %v2836, %v2920
        %v2961 = vld [vmem:[%s1755 + $0x52] sm:$0xff]
        %v2962 = vld [vmem:[%s1755 + $0xc2] sm:$0xff]
        %v2963 = vld [vmem:[%s1755 + $0x132] sm:$0xff]
        %v2964 = vld [vmem:[%s1755 + $0x1a2] sm:$0xff]
        %v2965 = vlaneseq
        %v2966 = vshrl.u32 %v2965, 7
        %v2967 = vsub.s32 7, %v2966
        %v2968 = vrot.slane %v1130, %v2967
        %v2969 = vmul.f32 %v2254, %v2968
        %v2970 = vmul.f32 %v2255, %v2968
        %v2971 = vmul.f32 %v2256, %v2968
        %v2972 = vmul.f32 %v2257, %v2968
        %v2973 = vmul.f32 %v2258, %v2968
        %v2974 = vmul.f32 %v2259, %v2968
        %v2975 = vmul.f32 %v2260, %v2968
        %v2976 = vmul.f32 %v2261, %v2968
        %v2977 = vmul.f32 %v2262, %v2968
        %v2978 = vmul.f32 %v2961, %v2968
        %v2979 = vmul.f32 %v2264, %v2968
        %v2980 = vmul.f32 %v2265, %v2968
        %v2981 = vmul.f32 %v2266, %v2968
        %v2982 = vmul.f32 %v2267, %v2968
        %v2983 = vmul.f32 %v2268, %v2968
        %v2984 = vmul.f32 %v2269, %v2968
        %v2985 = vmul.f32 %v2270, %v2968
        %v2986 = vmul.f32 %v2271, %v2968
        %v2987 = vmul.f32 %v2272, %v2968
        %v2988 = vmul.f32 %v2962, %v2968
        %v2989 = vmul.f32 %v2274, %v2968
        %v2990 = vmul.f32 %v2275, %v2968
        %v2991 = vmul.f32 %v2276, %v2968
        %v2992 = vmul.f32 %v2277, %v2968
        %v2993 = vmul.f32 %v2278, %v2968
        %v2994 = vmul.f32 %v2279, %v2968
        %v2995 = vmul.f32 %v2280, %v2968
        %v2996 = vmul.f32 %v2281, %v2968
        %v2997 = vmul.f32 %v2282, %v2968
        %v2998 = vmul.f32 %v2963, %v2968
        %v2999 = vmul.f32 %v2284, %v2968
        %v3000 = vmul.f32 %v2285, %v2968
        %v3001 = vmul.f32 %v2286, %v2968
        %v3002 = vmul.f32 %v2287, %v2968
        %v3003 = vmul.f32 %v2288, %v2968
        %v3004 = vmul.f32 %v2289, %v2968
        %v3005 = vmul.f32 %v2290, %v2968
        %v3006 = vmul.f32 %v2291, %v2968
        %v3007 = vmul.f32 %v2292, %v2968
        %v3008 = vmul.f32 %v2964, %v2968
        %v3009 = vadd.f32 %v2921, %v2969
        %v3010 = vadd.f32 %v2922, %v2970
        %v3011 = vadd.f32 %v2923, %v2971
        %v3012 = vadd.f32 %v2924, %v2972
        %v3013 = vadd.f32 %v2925, %v2973
        %v3014 = vadd.f32 %v2926, %v2974
        %v3015 = vadd.f32 %v2927, %v2975
        %v3016 = vadd.f32 %v2928, %v2976
        %v3017 = vadd.f32 %v2929, %v2977
        %v3018 = vadd.f32 %v2930, %v2978
        %v3019 = vadd.f32 %v2931, %v2979
        %v3020 = vadd.f32 %v2932, %v2980
        %v3021 = vadd.f32 %v2933, %v2981
        %v3022 = vadd.f32 %v2934, %v2982
        %v3023 = vadd.f32 %v2935, %v2983
        %v3024 = vadd.f32 %v2936, %v2984
        %v3025 = vadd.f32 %v2937, %v2985
        %v3026 = vadd.f32 %v2938, %v2986
        %v3027 = vadd.f32 %v2939, %v2987
        %v3028 = vadd.f32 %v2940, %v2988
        %v3029 = vadd.f32 %v2941, %v2989
        %v3030 = vadd.f32 %v2942, %v2990
        %v3031 = vadd.f32 %v2943, %v2991
        %v3032 = vadd.f32 %v2944, %v2992
        %v3033 = vadd.f32 %v2945, %v2993
        %v3034 = vadd.f32 %v2946, %v2994
        %v3035 = vadd.f32 %v2947, %v2995
        %v3036 = vadd.f32 %v2948, %v2996
        %v3037 = vadd.f32 %v2949, %v2997
        %v3038 = vadd.f32 %v2950, %v2998
        %v3039 = vadd.f32 %v2951, %v2999
        %v3040 = vadd.f32 %v2952, %v3000
        %v3041 = vadd.f32 %v2953, %v3001
        %v3042 = vadd.f32 %v2954, %v3002
        %v3043 = vadd.f32 %v2955, %v3003
        %v3044 = vadd.f32 %v2956, %v3004
        %v3045 = vadd.f32 %v2957, %v3005
        %v3046 = vadd.f32 %v2958, %v3006
        %v3047 = vadd.f32 %v2959, %v3007
        %v3048 = vadd.f32 %v2960, %v3008
        %v3049 = vld [vmem:[%s1880 + $0xa] sm:$0xff]
        %v3050 = vld [vmem:[%s1880 + $0x12] sm:$0xff]
        %v3051 = vld [vmem:[%s1880 + $0x1a] sm:$0xff]
        %v3052 = vld [vmem:[%s1880 + $0x22] sm:$0xff]
        %v3053 = vld [vmem:[%s1880 + $0x2a] sm:$0xff]
        %v3054 = vld [vmem:[%s1880 + $0x32] sm:$0xff]
        %v3055 = vld [vmem:[%s1880 + $0x3a] sm:$0xff]
        %v3056 = vld [vmem:[%s1880 + $0x42] sm:$0xff]
        %v3057 = vld [vmem:[%s1880 + $0x4a] sm:$0xff]
        %v3058 = vld [vmem:[%s1880 + $0x52] sm:$0xff]
        %v3059 = vld [vmem:[%s1880 + $0x7a] sm:$0xff]
        %v3060 = vld [vmem:[%s1880 + $0x82] sm:$0xff]
        %v3061 = vld [vmem:[%s1880 + $0x8a] sm:$0xff]
        %v3062 = vld [vmem:[%s1880 + $0x92] sm:$0xff]
        %v3063 = vld [vmem:[%s1880 + $0x9a] sm:$0xff]
        %v3064 = vld [vmem:[%s1880 + $0xa2] sm:$0xff]
        %v3065 = vld [vmem:[%s1880 + $0xaa] sm:$0xff]
        %v3066 = vld [vmem:[%s1880 + $0xb2] sm:$0xff]
        %v3067 = vld [vmem:[%s1880 + $0xba] sm:$0xff]
        %v3068 = vld [vmem:[%s1880 + $0xc2] sm:$0xff]
        %v3069 = vld [vmem:[%s1880 + $0xea] sm:$0xff]
        %v3070 = vld [vmem:[%s1880 + $0xf2] sm:$0xff]
        %v3071 = vld [vmem:[%s1880 + $0xfa] sm:$0xff]
        %v3072 = vld [vmem:[%s1880 + $0x102] sm:$0xff]
        %v3073 = vld [vmem:[%s1880 + $0x10a] sm:$0xff]
        %v3074 = vld [vmem:[%s1880 + $0x112] sm:$0xff]
        %v3075 = vld [vmem:[%s1880 + $0x11a] sm:$0xff]
        %v3076 = vld [vmem:[%s1880 + $0x122] sm:$0xff]
        %v3077 = vld [vmem:[%s1880 + $0x12a] sm:$0xff]
        %v3078 = vld [vmem:[%s1880 + $0x132] sm:$0xff]
        %v3079 = vld [vmem:[%s1880 + $0x15a] sm:$0xff]
        %v3080 = vld [vmem:[%s1880 + $0x162] sm:$0xff]
        %v3081 = vld [vmem:[%s1880 + $0x16a] sm:$0xff]
        %v3082 = vld [vmem:[%s1880 + $0x172] sm:$0xff]
        %v3083 = vld [vmem:[%s1880 + $0x17a] sm:$0xff]
        %v3084 = vld [vmem:[%s1880 + $0x182] sm:$0xff]
        %v3085 = vld [vmem:[%s1880 + $0x18a] sm:$0xff]
        %v3086 = vld [vmem:[%s1880 + $0x192] sm:$0xff]
        %v3087 = vld [vmem:[%s1880 + $0x19a] sm:$0xff]
        %v3088 = vld [vmem:[%s1880 + $0x1a2] sm:$0xff]
        %v3089 = vlaneseq
        %v3090 = vshrl.u32 %v3089, 7
        %v3091 = vsub.s32 0, %v3090
        %v3092 = vrot.slane %v1131, %v3091
        %v3093 = vmul.f32 %v3049, %v3092
        %v3094 = vmul.f32 %v3050, %v3092
        %v3095 = vmul.f32 %v3051, %v3092
        %v3096 = vmul.f32 %v3052, %v3092
        %v3097 = vmul.f32 %v3053, %v3092
        %v3098 = vmul.f32 %v3054, %v3092
        %v3099 = vmul.f32 %v3055, %v3092
        %v3100 = vmul.f32 %v3056, %v3092
        %v3101 = vmul.f32 %v3057, %v3092
        %v3102 = vmul.f32 %v3058, %v3092
        %v3103 = vmul.f32 %v3059, %v3092
        %v3104 = vmul.f32 %v3060, %v3092
        %v3105 = vmul.f32 %v3061, %v3092
        %v3106 = vmul.f32 %v3062, %v3092
        %v3107 = vmul.f32 %v3063, %v3092
        %v3108 = vmul.f32 %v3064, %v3092
        %v3109 = vmul.f32 %v3065, %v3092
        %v3110 = vmul.f32 %v3066, %v3092
        %v3111 = vmul.f32 %v3067, %v3092
        %v3112 = vmul.f32 %v3068, %v3092
        %v3113 = vmul.f32 %v3069, %v3092
        %v3114 = vmul.f32 %v3070, %v3092
        %v3115 = vmul.f32 %v3071, %v3092
        %v3116 = vmul.f32 %v3072, %v3092
        %v3117 = vmul.f32 %v3073, %v3092
        %v3118 = vmul.f32 %v3074, %v3092
        %v3119 = vmul.f32 %v3075, %v3092
        %v3120 = vmul.f32 %v3076, %v3092
        %v3121 = vmul.f32 %v3077, %v3092
        %v3122 = vmul.f32 %v3078, %v3092
        %v3123 = vmul.f32 %v3079, %v3092
        %v3124 = vmul.f32 %v3080, %v3092
        %v3125 = vmul.f32 %v3081, %v3092
        %v3126 = vmul.f32 %v3082, %v3092
        %v3127 = vmul.f32 %v3083, %v3092
        %v3128 = vmul.f32 %v3084, %v3092
        %v3129 = vmul.f32 %v3085, %v3092
        %v3130 = vmul.f32 %v3086, %v3092
        %v3131 = vmul.f32 %v3087, %v3092
        %v3132 = vmul.f32 %v3088, %v3092
        %v3133 = vadd.f32 %v3009, %v3093
        %v3134 = vadd.f32 %v3010, %v3094
        %v3135 = vadd.f32 %v3011, %v3095
        %v3136 = vadd.f32 %v3012, %v3096
        %v3137 = vadd.f32 %v3013, %v3097
        %v3138 = vadd.f32 %v3014, %v3098
        %v3139 = vadd.f32 %v3015, %v3099
        %v3140 = vadd.f32 %v3016, %v3100
        %v3141 = vadd.f32 %v3017, %v3101
        %v3142 = vadd.f32 %v3018, %v3102
        %v3143 = vadd.f32 %v3019, %v3103
        %v3144 = vadd.f32 %v3020, %v3104
        %v3145 = vadd.f32 %v3021, %v3105
        %v3146 = vadd.f32 %v3022, %v3106
        %v3147 = vadd.f32 %v3023, %v3107
        %v3148 = vadd.f32 %v3024, %v3108
        %v3149 = vadd.f32 %v3025, %v3109
        %v3150 = vadd.f32 %v3026, %v3110
        %v3151 = vadd.f32 %v3027, %v3111
        %v3152 = vadd.f32 %v3028, %v3112
        %v3153 = vadd.f32 %v3029, %v3113
        %v3154 = vadd.f32 %v3030, %v3114
        %v3155 = vadd.f32 %v3031, %v3115
        %v3156 = vadd.f32 %v3032, %v3116
        %v3157 = vadd.f32 %v3033, %v3117
        %v3158 = vadd.f32 %v3034, %v3118
        %v3159 = vadd.f32 %v3035, %v3119
        %v3160 = vadd.f32 %v3036, %v3120
        %v3161 = vadd.f32 %v3037, %v3121
        %v3162 = vadd.f32 %v3038, %v3122
        %v3163 = vadd.f32 %v3039, %v3123
        %v3164 = vadd.f32 %v3040, %v3124
        %v3165 = vadd.f32 %v3041, %v3125
        %v3166 = vadd.f32 %v3042, %v3126
        %v3167 = vadd.f32 %v3043, %v3127
        %v3168 = vadd.f32 %v3044, %v3128
        %v3169 = vadd.f32 %v3045, %v3129
        %v3170 = vadd.f32 %v3046, %v3130
        %v3171 = vadd.f32 %v3047, %v3131
        %v3172 = vadd.f32 %v3048, %v3132
        %v3173 = vld [vmem:[%s1755 + $0xb] sm:$0xff]
        %v3174 = vld [vmem:[%s1755 + $0x13] sm:$0xff]
        %v3175 = vld [vmem:[%s1755 + $0x1b] sm:$0xff]
        %v3176 = vld [vmem:[%s1755 + $0x23] sm:$0xff]
        %v3177 = vld [vmem:[%s1755 + $0x2b] sm:$0xff]
        %v3178 = vld [vmem:[%s1755 + $0x33] sm:$0xff]
        %v3179 = vld [vmem:[%s1755 + $0x3b] sm:$0xff]
        %v3180 = vld [vmem:[%s1755 + $0x43] sm:$0xff]
        %v3181 = vld [vmem:[%s1755 + $0x4b] sm:$0xff]
        %v3182 = vld [vmem:[%s1755 + $0x53] sm:$0xff]
        %v3183 = vld [vmem:[%s1755 + $0x7b] sm:$0xff]
        %v3184 = vld [vmem:[%s1755 + $0x83] sm:$0xff]
        %v3185 = vld [vmem:[%s1755 + $0x8b] sm:$0xff]
        %v3186 = vld [vmem:[%s1755 + $0x93] sm:$0xff]
        %v3187 = vld [vmem:[%s1755 + $0x9b] sm:$0xff]
        %v3188 = vld [vmem:[%s1755 + $0xa3] sm:$0xff]
        %v3189 = vld [vmem:[%s1755 + $0xab] sm:$0xff]
        %v3190 = vld [vmem:[%s1755 + $0xb3] sm:$0xff]
        %v3191 = vld [vmem:[%s1755 + $0xbb] sm:$0xff]
        %v3192 = vld [vmem:[%s1755 + $0xc3] sm:$0xff]
        %v3193 = vld [vmem:[%s1755 + $0xeb] sm:$0xff]
        %v3194 = vld [vmem:[%s1755 + $0xf3] sm:$0xff]
        %v3195 = vld [vmem:[%s1755 + $0xfb] sm:$0xff]
        %v3196 = vld [vmem:[%s1755 + $0x103] sm:$0xff]
        %v3197 = vld [vmem:[%s1755 + $0x10b] sm:$0xff]
        %v3198 = vld [vmem:[%s1755 + $0x113] sm:$0xff]
        %v3199 = vld [vmem:[%s1755 + $0x11b] sm:$0xff]
        %v3200 = vld [vmem:[%s1755 + $0x123] sm:$0xff]
        %v3201 = vld [vmem:[%s1755 + $0x12b] sm:$0xff]
        %v3202 = vld [vmem:[%s1755 + $0x133] sm:$0xff]
        %v3203 = vld [vmem:[%s1755 + $0x15b] sm:$0xff]
        %v3204 = vld [vmem:[%s1755 + $0x163] sm:$0xff]
        %v3205 = vld [vmem:[%s1755 + $0x16b] sm:$0xff]
        %v3206 = vld [vmem:[%s1755 + $0x173] sm:$0xff]
        %v3207 = vld [vmem:[%s1755 + $0x17b] sm:$0xff]
        %v3208 = vld [vmem:[%s1755 + $0x183] sm:$0xff]
        %v3209 = vld [vmem:[%s1755 + $0x18b] sm:$0xff]
        %v3210 = vld [vmem:[%s1755 + $0x193] sm:$0xff]
        %v3211 = vld [vmem:[%s1755 + $0x19b] sm:$0xff]
        %v3212 = vld [vmem:[%s1755 + $0x1a3] sm:$0xff]
        %v3213 = vlaneseq
        %v3214 = vshrl.u32 %v3213, 7
        %v3215 = vsub.s32 1, %v3214
        %v3216 = vrot.slane %v1131, %v3215
        %v3217 = vmul.f32 %v3173, %v3216
        %v3218 = vmul.f32 %v3174, %v3216
        %v3219 = vmul.f32 %v3175, %v3216
        %v3220 = vmul.f32 %v3176, %v3216
        %v3221 = vmul.f32 %v3177, %v3216
        %v3222 = vmul.f32 %v3178, %v3216
        %v3223 = vmul.f32 %v3179, %v3216
        %v3224 = vmul.f32 %v3180, %v3216
        %v3225 = vmul.f32 %v3181, %v3216
        %v3226 = vmul.f32 %v3182, %v3216
        %v3227 = vmul.f32 %v3183, %v3216
        %v3228 = vmul.f32 %v3184, %v3216
        %v3229 = vmul.f32 %v3185, %v3216
        %v3230 = vmul.f32 %v3186, %v3216
        %v3231 = vmul.f32 %v3187, %v3216
        %v3232 = vmul.f32 %v3188, %v3216
        %v3233 = vmul.f32 %v3189, %v3216
        %v3234 = vmul.f32 %v3190, %v3216
        %v3235 = vmul.f32 %v3191, %v3216
        %v3236 = vmul.f32 %v3192, %v3216
        %v3237 = vmul.f32 %v3193, %v3216
        %v3238 = vmul.f32 %v3194, %v3216
        %v3239 = vmul.f32 %v3195, %v3216
        %v3240 = vmul.f32 %v3196, %v3216
        %v3241 = vmul.f32 %v3197, %v3216
        %v3242 = vmul.f32 %v3198, %v3216
        %v3243 = vmul.f32 %v3199, %v3216
        %v3244 = vmul.f32 %v3200, %v3216
        %v3245 = vmul.f32 %v3201, %v3216
        %v3246 = vmul.f32 %v3202, %v3216
        %v3247 = vmul.f32 %v3203, %v3216
        %v3248 = vmul.f32 %v3204, %v3216
        %v3249 = vmul.f32 %v3205, %v3216
        %v3250 = vmul.f32 %v3206, %v3216
        %v3251 = vmul.f32 %v3207, %v3216
        %v3252 = vmul.f32 %v3208, %v3216
        %v3253 = vmul.f32 %v3209, %v3216
        %v3254 = vmul.f32 %v3210, %v3216
        %v3255 = vmul.f32 %v3211, %v3216
        %v3256 = vmul.f32 %v3212, %v3216
        %v3257 = vadd.f32 %v3133, %v3217
        %v3258 = vadd.f32 %v3134, %v3218
        %v3259 = vadd.f32 %v3135, %v3219
        %v3260 = vadd.f32 %v3136, %v3220
        %v3261 = vadd.f32 %v3137, %v3221
        %v3262 = vadd.f32 %v3138, %v3222
        %v3263 = vadd.f32 %v3139, %v3223
        %v3264 = vadd.f32 %v3140, %v3224
        %v3265 = vadd.f32 %v3141, %v3225
        %v3266 = vadd.f32 %v3142, %v3226
        %v3267 = vadd.f32 %v3143, %v3227
        %v3268 = vadd.f32 %v3144, %v3228
        %v3269 = vadd.f32 %v3145, %v3229
        %v3270 = vadd.f32 %v3146, %v3230
        %v3271 = vadd.f32 %v3147, %v3231
        %v3272 = vadd.f32 %v3148, %v3232
        %v3273 = vadd.f32 %v3149, %v3233
        %v3274 = vadd.f32 %v3150, %v3234
        %v3275 = vadd.f32 %v3151, %v3235
        %v3276 = vadd.f32 %v3152, %v3236
        %v3277 = vadd.f32 %v3153, %v3237
        %v3278 = vadd.f32 %v3154, %v3238
        %v3279 = vadd.f32 %v3155, %v3239
        %v3280 = vadd.f32 %v3156, %v3240
        %v3281 = vadd.f32 %v3157, %v3241
        %v3282 = vadd.f32 %v3158, %v3242
        %v3283 = vadd.f32 %v3159, %v3243
        %v3284 = vadd.f32 %v3160, %v3244
        %v3285 = vadd.f32 %v3161, %v3245
        %v3286 = vadd.f32 %v3162, %v3246
        %v3287 = vadd.f32 %v3163, %v3247
        %v3288 = vadd.f32 %v3164, %v3248
        %v3289 = vadd.f32 %v3165, %v3249
        %v3290 = vadd.f32 %v3166, %v3250
        %v3291 = vadd.f32 %v3167, %v3251
        %v3292 = vadd.f32 %v3168, %v3252
        %v3293 = vadd.f32 %v3169, %v3253
        %v3294 = vadd.f32 %v3170, %v3254
        %v3295 = vadd.f32 %v3171, %v3255
        %v3296 = vadd.f32 %v3172, %v3256
        %v3297 = vld [vmem:[%s1880 + $0xb] sm:$0xff]
        %v3298 = vld [vmem:[%s1880 + $0x13] sm:$0xff]
        %v3299 = vld [vmem:[%s1880 + $0x1b] sm:$0xff]
        %v3300 = vld [vmem:[%s1880 + $0x23] sm:$0xff]
        %v3301 = vld [vmem:[%s1880 + $0x2b] sm:$0xff]
        %v3302 = vld [vmem:[%s1880 + $0x33] sm:$0xff]
        %v3303 = vld [vmem:[%s1880 + $0x3b] sm:$0xff]
        %v3304 = vld [vmem:[%s1880 + $0x43] sm:$0xff]
        %v3305 = vld [vmem:[%s1880 + $0x4b] sm:$0xff]
        %v3306 = vld [vmem:[%s1880 + $0x53] sm:$0xff]
        %v3307 = vld [vmem:[%s1880 + $0x7b] sm:$0xff]
        %v3308 = vld [vmem:[%s1880 + $0x83] sm:$0xff]
        %v3309 = vld [vmem:[%s1880 + $0x8b] sm:$0xff]
        %v3310 = vld [vmem:[%s1880 + $0x93] sm:$0xff]
        %v3311 = vld [vmem:[%s1880 + $0x9b] sm:$0xff]
        %v3312 = vld [vmem:[%s1880 + $0xa3] sm:$0xff]
        %v3313 = vld [vmem:[%s1880 + $0xab] sm:$0xff]
        %v3314 = vld [vmem:[%s1880 + $0xb3] sm:$0xff]
        %v3315 = vld [vmem:[%s1880 + $0xbb] sm:$0xff]
        %v3316 = vld [vmem:[%s1880 + $0xc3] sm:$0xff]
        %v3317 = vld [vmem:[%s1880 + $0xeb] sm:$0xff]
        %v3318 = vld [vmem:[%s1880 + $0xf3] sm:$0xff]
        %v3319 = vld [vmem:[%s1880 + $0xfb] sm:$0xff]
        %v3320 = vld [vmem:[%s1880 + $0x103] sm:$0xff]
        %v3321 = vld [vmem:[%s1880 + $0x10b] sm:$0xff]
        %v3322 = vld [vmem:[%s1880 + $0x113] sm:$0xff]
        %v3323 = vld [vmem:[%s1880 + $0x11b] sm:$0xff]
        %v3324 = vld [vmem:[%s1880 + $0x123] sm:$0xff]
        %v3325 = vld [vmem:[%s1880 + $0x12b] sm:$0xff]
        %v3326 = vld [vmem:[%s1880 + $0x133] sm:$0xff]
        %v3327 = vld [vmem:[%s1880 + $0x15b] sm:$0xff]
        %v3328 = vld [vmem:[%s1880 + $0x163] sm:$0xff]
        %v3329 = vld [vmem:[%s1880 + $0x16b] sm:$0xff]
        %v3330 = vld [vmem:[%s1880 + $0x173] sm:$0xff]
        %v3331 = vld [vmem:[%s1880 + $0x17b] sm:$0xff]
        %v3332 = vld [vmem:[%s1880 + $0x183] sm:$0xff]
        %v3333 = vld [vmem:[%s1880 + $0x18b] sm:$0xff]
        %v3334 = vld [vmem:[%s1880 + $0x193] sm:$0xff]
        %v3335 = vld [vmem:[%s1880 + $0x19b] sm:$0xff]
        %v3336 = vld [vmem:[%s1880 + $0x1a3] sm:$0xff]
        %v3337 = vlaneseq
        %v3338 = vshrl.u32 %v3337, 7
        %v3339 = vsub.s32 2, %v3338
        %v3340 = vrot.slane %v1131, %v3339
        %v3341 = vmul.f32 %v3297, %v3340
        %v3342 = vmul.f32 %v3298, %v3340
        %v3343 = vmul.f32 %v3299, %v3340
        %v3344 = vmul.f32 %v3300, %v3340
        %v3345 = vmul.f32 %v3301, %v3340
        %v3346 = vmul.f32 %v3302, %v3340
        %v3347 = vmul.f32 %v3303, %v3340
        %v3348 = vmul.f32 %v3304, %v3340
        %v3349 = vmul.f32 %v3305, %v3340
        %v3350 = vmul.f32 %v3306, %v3340
        %v3351 = vmul.f32 %v3307, %v3340
        %v3352 = vmul.f32 %v3308, %v3340
        %v3353 = vmul.f32 %v3309, %v3340
        %v3354 = vmul.f32 %v3310, %v3340
        %v3355 = vmul.f32 %v3311, %v3340
        %v3356 = vmul.f32 %v3312, %v3340
        %v3357 = vmul.f32 %v3313, %v3340
        %v3358 = vmul.f32 %v3314, %v3340
        %v3359 = vmul.f32 %v3315, %v3340
        %v3360 = vmul.f32 %v3316, %v3340
        %v3361 = vmul.f32 %v3317, %v3340
        %v3362 = vmul.f32 %v3318, %v3340
        %v3363 = vmul.f32 %v3319, %v3340
        %v3364 = vmul.f32 %v3320, %v3340
        %v3365 = vmul.f32 %v3321, %v3340
        %v3366 = vmul.f32 %v3322, %v3340
        %v3367 = vmul.f32 %v3323, %v3340
        %v3368 = vmul.f32 %v3324, %v3340
        %v3369 = vmul.f32 %v3325, %v3340
        %v3370 = vmul.f32 %v3326, %v3340
        %v3371 = vmul.f32 %v3327, %v3340
        %v3372 = vmul.f32 %v3328, %v3340
        %v3373 = vmul.f32 %v3329, %v3340
        %v3374 = vmul.f32 %v3330, %v3340
        %v3375 = vmul.f32 %v3331, %v3340
        %v3376 = vmul.f32 %v3332, %v3340
        %v3377 = vmul.f32 %v3333, %v3340
        %v3378 = vmul.f32 %v3334, %v3340
        %v3379 = vmul.f32 %v3335, %v3340
        %v3380 = vmul.f32 %v3336, %v3340
        %v3381 = vadd.f32 %v3257, %v3341
        %v3382 = vadd.f32 %v3258, %v3342
        %v3383 = vadd.f32 %v3259, %v3343
        %v3384 = vadd.f32 %v3260, %v3344
        %v3385 = vadd.f32 %v3261, %v3345
        %v3386 = vadd.f32 %v3262, %v3346
        %v3387 = vadd.f32 %v3263, %v3347
        %v3388 = vadd.f32 %v3264, %v3348
        %v3389 = vadd.f32 %v3265, %v3349
        %v3390 = vadd.f32 %v3266, %v3350
        %v3391 = vadd.f32 %v3267, %v3351
        %v3392 = vadd.f32 %v3268, %v3352
        %v3393 = vadd.f32 %v3269, %v3353
        %v3394 = vadd.f32 %v3270, %v3354
        %v3395 = vadd.f32 %v3271, %v3355
        %v3396 = vadd.f32 %v3272, %v3356
        %v3397 = vadd.f32 %v3273, %v3357
        %v3398 = vadd.f32 %v3274, %v3358
        %v3399 = vadd.f32 %v3275, %v3359
        %v3400 = vadd.f32 %v3276, %v3360
        %v3401 = vadd.f32 %v3277, %v3361
        %v3402 = vadd.f32 %v3278, %v3362
        %v3403 = vadd.f32 %v3279, %v3363
        %v3404 = vadd.f32 %v3280, %v3364
        %v3405 = vadd.f32 %v3281, %v3365
        %v3406 = vadd.f32 %v3282, %v3366
        %v3407 = vadd.f32 %v3283, %v3367
        %v3408 = vadd.f32 %v3284, %v3368
        %v3409 = vadd.f32 %v3285, %v3369
        %v3410 = vadd.f32 %v3286, %v3370
        %v3411 = vadd.f32 %v3287, %v3371
        %v3412 = vadd.f32 %v3288, %v3372
        %v3413 = vadd.f32 %v3289, %v3373
        %v3414 = vadd.f32 %v3290, %v3374
        %v3415 = vadd.f32 %v3291, %v3375
        %v3416 = vadd.f32 %v3292, %v3376
        %v3417 = vadd.f32 %v3293, %v3377
        %v3418 = vadd.f32 %v3294, %v3378
        %v3419 = vadd.f32 %v3295, %v3379
        %v3420 = vadd.f32 %v3296, %v3380
        %v3421 = vld [vmem:[%s1755 + $0xc] sm:$0xff]
        %v3422 = vld [vmem:[%s1755 + $0x14] sm:$0xff]
        %v3423 = vld [vmem:[%s1755 + $0x1c] sm:$0xff]
        %v3424 = vld [vmem:[%s1755 + $0x24] sm:$0xff]
        %v3425 = vld [vmem:[%s1755 + $0x2c] sm:$0xff]
        %v3426 = vld [vmem:[%s1755 + $0x34] sm:$0xff]
        %v3427 = vld [vmem:[%s1755 + $0x3c] sm:$0xff]
        %v3428 = vld [vmem:[%s1755 + $0x44] sm:$0xff]
        %v3429 = vld [vmem:[%s1755 + $0x4c] sm:$0xff]
        %v3430 = vld [vmem:[%s1755 + $0x54] sm:$0xff]
        %v3431 = vld [vmem:[%s1755 + $0x7c] sm:$0xff]
        %v3432 = vld [vmem:[%s1755 + $0x84] sm:$0xff]
        %v3433 = vld [vmem:[%s1755 + $0x8c] sm:$0xff]
        %v3434 = vld [vmem:[%s1755 + $0x94] sm:$0xff]
        %v3435 = vld [vmem:[%s1755 + $0x9c] sm:$0xff]
        %v3436 = vld [vmem:[%s1755 + $0xa4] sm:$0xff]
        %v3437 = vld [vmem:[%s1755 + $0xac] sm:$0xff]
        %v3438 = vld [vmem:[%s1755 + $0xb4] sm:$0xff]
        %v3439 = vld [vmem:[%s1755 + $0xbc] sm:$0xff]
        %v3440 = vld [vmem:[%s1755 + $0xc4] sm:$0xff]
        %v3441 = vld [vmem:[%s1755 + $0xec] sm:$0xff]
        %v3442 = vld [vmem:[%s1755 + $0xf4] sm:$0xff]
        %v3443 = vld [vmem:[%s1755 + $0xfc] sm:$0xff]
        %v3444 = vld [vmem:[%s1755 + $0x104] sm:$0xff]
        %v3445 = vld [vmem:[%s1755 + $0x10c] sm:$0xff]
        %v3446 = vld [vmem:[%s1755 + $0x114] sm:$0xff]
        %v3447 = vld [vmem:[%s1755 + $0x11c] sm:$0xff]
        %v3448 = vld [vmem:[%s1755 + $0x124] sm:$0xff]
        %v3449 = vld [vmem:[%s1755 + $0x12c] sm:$0xff]
        %v3450 = vld [vmem:[%s1755 + $0x134] sm:$0xff]
        %v3451 = vld [vmem:[%s1755 + $0x15c] sm:$0xff]
        %v3452 = vld [vmem:[%s1755 + $0x164] sm:$0xff]
        %v3453 = vld [vmem:[%s1755 + $0x16c] sm:$0xff]
        %v3454 = vld [vmem:[%s1755 + $0x174] sm:$0xff]
        %v3455 = vld [vmem:[%s1755 + $0x17c] sm:$0xff]
        %v3456 = vld [vmem:[%s1755 + $0x184] sm:$0xff]
        %v3457 = vld [vmem:[%s1755 + $0x18c] sm:$0xff]
        %v3458 = vld [vmem:[%s1755 + $0x194] sm:$0xff]
        %v3459 = vld [vmem:[%s1755 + $0x19c] sm:$0xff]
        %v3460 = vld [vmem:[%s1755 + $0x1a4] sm:$0xff]
        %v3461 = vlaneseq
        %v3462 = vshrl.u32 %v3461, 7
        %v3463 = vsub.s32 3, %v3462
        %v3464 = vrot.slane %v1131, %v3463
        %v3465 = vmul.f32 %v3421, %v3464
        %v3466 = vmul.f32 %v3422, %v3464
        %v3467 = vmul.f32 %v3423, %v3464
        %v3468 = vmul.f32 %v3424, %v3464
        %v3469 = vmul.f32 %v3425, %v3464
        %v3470 = vmul.f32 %v3426, %v3464
        %v3471 = vmul.f32 %v3427, %v3464
        %v3472 = vmul.f32 %v3428, %v3464
        %v3473 = vmul.f32 %v3429, %v3464
        %v3474 = vmul.f32 %v3430, %v3464
        %v3475 = vmul.f32 %v3431, %v3464
        %v3476 = vmul.f32 %v3432, %v3464
        %v3477 = vmul.f32 %v3433, %v3464
        %v3478 = vmul.f32 %v3434, %v3464
        %v3479 = vmul.f32 %v3435, %v3464
        %v3480 = vmul.f32 %v3436, %v3464
        %v3481 = vmul.f32 %v3437, %v3464
        %v3482 = vmul.f32 %v3438, %v3464
        %v3483 = vmul.f32 %v3439, %v3464
        %v3484 = vmul.f32 %v3440, %v3464
        %v3485 = vmul.f32 %v3441, %v3464
        %v3486 = vmul.f32 %v3442, %v3464
        %v3487 = vmul.f32 %v3443, %v3464
        %v3488 = vmul.f32 %v3444, %v3464
        %v3489 = vmul.f32 %v3445, %v3464
        %v3490 = vmul.f32 %v3446, %v3464
        %v3491 = vmul.f32 %v3447, %v3464
        %v3492 = vmul.f32 %v3448, %v3464
        %v3493 = vmul.f32 %v3449, %v3464
        %v3494 = vmul.f32 %v3450, %v3464
        %v3495 = vmul.f32 %v3451, %v3464
        %v3496 = vmul.f32 %v3452, %v3464
        %v3497 = vmul.f32 %v3453, %v3464
        %v3498 = vmul.f32 %v3454, %v3464
        %v3499 = vmul.f32 %v3455, %v3464
        %v3500 = vmul.f32 %v3456, %v3464
        %v3501 = vmul.f32 %v3457, %v3464
        %v3502 = vmul.f32 %v3458, %v3464
        %v3503 = vmul.f32 %v3459, %v3464
        %v3504 = vmul.f32 %v3460, %v3464
        %v3505 = vadd.f32 %v3381, %v3465
        %v3506 = vadd.f32 %v3382, %v3466
        %v3507 = vadd.f32 %v3383, %v3467
        %v3508 = vadd.f32 %v3384, %v3468
        %v3509 = vadd.f32 %v3385, %v3469
        %v3510 = vadd.f32 %v3386, %v3470
        %v3511 = vadd.f32 %v3387, %v3471
        %v3512 = vadd.f32 %v3388, %v3472
        %v3513 = vadd.f32 %v3389, %v3473
        %v3514 = vadd.f32 %v3390, %v3474
        %v3515 = vadd.f32 %v3391, %v3475
        %v3516 = vadd.f32 %v3392, %v3476
        %v3517 = vadd.f32 %v3393, %v3477
        %v3518 = vadd.f32 %v3394, %v3478
        %v3519 = vadd.f32 %v3395, %v3479
        %v3520 = vadd.f32 %v3396, %v3480
        %v3521 = vadd.f32 %v3397, %v3481
        %v3522 = vadd.f32 %v3398, %v3482
        %v3523 = vadd.f32 %v3399, %v3483
        %v3524 = vadd.f32 %v3400, %v3484
        %v3525 = vadd.f32 %v3401, %v3485
        %v3526 = vadd.f32 %v3402, %v3486
        %v3527 = vadd.f32 %v3403, %v3487
        %v3528 = vadd.f32 %v3404, %v3488
        %v3529 = vadd.f32 %v3405, %v3489
        %v3530 = vadd.f32 %v3406, %v3490
        %v3531 = vadd.f32 %v3407, %v3491
        %v3532 = vadd.f32 %v3408, %v3492
        %v3533 = vadd.f32 %v3409, %v3493
        %v3534 = vadd.f32 %v3410, %v3494
        %v3535 = vadd.f32 %v3411, %v3495
        %v3536 = vadd.f32 %v3412, %v3496
        %v3537 = vadd.f32 %v3413, %v3497
        %v3538 = vadd.f32 %v3414, %v3498
        %v3539 = vadd.f32 %v3415, %v3499
        %v3540 = vadd.f32 %v3416, %v3500
        %v3541 = vadd.f32 %v3417, %v3501
        %v3542 = vadd.f32 %v3418, %v3502
        %v3543 = vadd.f32 %v3419, %v3503
        %v3544 = vadd.f32 %v3420, %v3504
        %v3545 = vld [vmem:[%s1098 + $0x5c] sm:$0xff]
        %v3546 = vld [vmem:[%s1098 + $0xcc] sm:$0xff]
        %v3547 = vld [vmem:[%s1098 + $0x13c] sm:$0xff]
        %v3548 = vld [vmem:[%s1098 + $0x1ac] sm:$0xff]
        %v3549 = vlaneseq
        %v3550 = vshrl.u32 %v3549, 7
        %v3551 = vsub.s32 4, %v3550
        %v3552 = vrot.slane %v1131, %v3551
        %v3553 = vmul.f32 %v2838, %v3552
        %v3554 = vmul.f32 %v2839, %v3552
        %v3555 = vmul.f32 %v2840, %v3552
        %v3556 = vmul.f32 %v2841, %v3552
        %v3557 = vmul.f32 %v2842, %v3552
        %v3558 = vmul.f32 %v2843, %v3552
        %v3559 = vmul.f32 %v2844, %v3552
        %v3560 = vmul.f32 %v2845, %v3552
        %v3561 = vmul.f32 %v2846, %v3552
        %v3562 = vmul.f32 %v3545, %v3552
        %v3563 = vmul.f32 %v2848, %v3552
        %v3564 = vmul.f32 %v2849, %v3552
        %v3565 = vmul.f32 %v2850, %v3552
        %v3566 = vmul.f32 %v2851, %v3552
        %v3567 = vmul.f32 %v2852, %v3552
        %v3568 = vmul.f32 %v2853, %v3552
        %v3569 = vmul.f32 %v2854, %v3552
        %v3570 = vmul.f32 %v2855, %v3552
        %v3571 = vmul.f32 %v2856, %v3552
        %v3572 = vmul.f32 %v3546, %v3552
        %v3573 = vmul.f32 %v2858, %v3552
        %v3574 = vmul.f32 %v2859, %v3552
        %v3575 = vmul.f32 %v2860, %v3552
        %v3576 = vmul.f32 %v2861, %v3552
        %v3577 = vmul.f32 %v2862, %v3552
        %v3578 = vmul.f32 %v2863, %v3552
        %v3579 = vmul.f32 %v2864, %v3552
        %v3580 = vmul.f32 %v2865, %v3552
        %v3581 = vmul.f32 %v2866, %v3552
        %v3582 = vmul.f32 %v3547, %v3552
        %v3583 = vmul.f32 %v2868, %v3552
        %v3584 = vmul.f32 %v2869, %v3552
        %v3585 = vmul.f32 %v2870, %v3552
        %v3586 = vmul.f32 %v2871, %v3552
        %v3587 = vmul.f32 %v2872, %v3552
        %v3588 = vmul.f32 %v2873, %v3552
        %v3589 = vmul.f32 %v2874, %v3552
        %v3590 = vmul.f32 %v2875, %v3552
        %v3591 = vmul.f32 %v2876, %v3552
        %v3592 = vmul.f32 %v3548, %v3552
        %v3593 = vadd.f32 %v3505, %v3553
        %v3594 = vadd.f32 %v3506, %v3554
        %v3595 = vadd.f32 %v3507, %v3555
        %v3596 = vadd.f32 %v3508, %v3556
        %v3597 = vadd.f32 %v3509, %v3557
        %v3598 = vadd.f32 %v3510, %v3558
        %v3599 = vadd.f32 %v3511, %v3559
        %v3600 = vadd.f32 %v3512, %v3560
        %v3601 = vadd.f32 %v3513, %v3561
        %v3602 = vadd.f32 %v3514, %v3562
        %v3603 = vadd.f32 %v3515, %v3563
        %v3604 = vadd.f32 %v3516, %v3564
        %v3605 = vadd.f32 %v3517, %v3565
        %v3606 = vadd.f32 %v3518, %v3566
        %v3607 = vadd.f32 %v3519, %v3567
        %v3608 = vadd.f32 %v3520, %v3568
        %v3609 = vadd.f32 %v3521, %v3569
        %v3610 = vadd.f32 %v3522, %v3570
        %v3611 = vadd.f32 %v3523, %v3571
        %v3612 = vadd.f32 %v3524, %v3572
        %v3613 = vadd.f32 %v3525, %v3573
        %v3614 = vadd.f32 %v3526, %v3574
        %v3615 = vadd.f32 %v3527, %v3575
        %v3616 = vadd.f32 %v3528, %v3576
        %v3617 = vadd.f32 %v3529, %v3577
        %v3618 = vadd.f32 %v3530, %v3578
        %v3619 = vadd.f32 %v3531, %v3579
        %v3620 = vadd.f32 %v3532, %v3580
        %v3621 = vadd.f32 %v3533, %v3581
        %v3622 = vadd.f32 %v3534, %v3582
        %v3623 = vadd.f32 %v3535, %v3583
        %v3624 = vadd.f32 %v3536, %v3584
        %v3625 = vadd.f32 %v3537, %v3585
        %v3626 = vadd.f32 %v3538, %v3586
        %v3627 = vadd.f32 %v3539, %v3587
        %v3628 = vadd.f32 %v3540, %v3588
        %v3629 = vadd.f32 %v3541, %v3589
        %v3630 = vadd.f32 %v3542, %v3590
        %v3631 = vadd.f32 %v3543, %v3591
        %v3632 = vadd.f32 %v3544, %v3592
        %v3633 = vld [vmem:[%s1258 + $0x14] sm:$0xff]
        %v3634 = vld [vmem:[%s1258 + $0x1c] sm:$0xff]
        %v3635 = vld [vmem:[%s1258 + $0x24] sm:$0xff]
        %v3636 = vld [vmem:[%s1258 + $0x2c] sm:$0xff]
        %v3637 = vld [vmem:[%s1258 + $0x34] sm:$0xff]
        %v3638 = vld [vmem:[%s1258 + $0x3c] sm:$0xff]
        %v3639 = vld [vmem:[%s1258 + $0x44] sm:$0xff]
        %v3640 = vld [vmem:[%s1258 + $0x4c] sm:$0xff]
        %v3641 = vld [vmem:[%s1258 + $0x54] sm:$0xff]
        %v3642 = vld [vmem:[%s1258 + $0x5c] sm:$0xff]
        %v3643 = vld [vmem:[%s1258 + $0x84] sm:$0xff]
        %v3644 = vld [vmem:[%s1258 + $0x8c] sm:$0xff]
        %v3645 = vld [vmem:[%s1258 + $0x94] sm:$0xff]
        %v3646 = vld [vmem:[%s1258 + $0x9c] sm:$0xff]
        %v3647 = vld [vmem:[%s1258 + $0xa4] sm:$0xff]
        %v3648 = vld [vmem:[%s1258 + $0xac] sm:$0xff]
        %v3649 = vld [vmem:[%s1258 + $0xb4] sm:$0xff]
        %v3650 = vld [vmem:[%s1258 + $0xbc] sm:$0xff]
        %v3651 = vld [vmem:[%s1258 + $0xc4] sm:$0xff]
        %v3652 = vld [vmem:[%s1258 + $0xcc] sm:$0xff]
        %v3653 = vld [vmem:[%s1258 + $0xf4] sm:$0xff]
        %v3654 = vld [vmem:[%s1258 + $0xfc] sm:$0xff]
        %v3655 = vld [vmem:[%s1258 + $0x104] sm:$0xff]
        %v3656 = vld [vmem:[%s1258 + $0x10c] sm:$0xff]
        %v3657 = vld [vmem:[%s1258 + $0x114] sm:$0xff]
        %v3658 = vld [vmem:[%s1258 + $0x11c] sm:$0xff]
        %v3659 = vld [vmem:[%s1258 + $0x124] sm:$0xff]
        %v3660 = vld [vmem:[%s1258 + $0x12c] sm:$0xff]
        %v3661 = vld [vmem:[%s1258 + $0x134] sm:$0xff]
        %v3662 = vld [vmem:[%s1258 + $0x13c] sm:$0xff]
        %v3663 = vld [vmem:[%s1258 + $0x164] sm:$0xff]
        %v3664 = vld [vmem:[%s1258 + $0x16c] sm:$0xff]
        %v3665 = vld [vmem:[%s1258 + $0x174] sm:$0xff]
        %v3666 = vld [vmem:[%s1258 + $0x17c] sm:$0xff]
        %v3667 = vld [vmem:[%s1258 + $0x184] sm:$0xff]
        %v3668 = vld [vmem:[%s1258 + $0x18c] sm:$0xff]
        %v3669 = vld [vmem:[%s1258 + $0x194] sm:$0xff]
        %v3670 = vld [vmem:[%s1258 + $0x19c] sm:$0xff]
        %v3671 = vld [vmem:[%s1258 + $0x1a4] sm:$0xff]
        %v3672 = vld [vmem:[%s1258 + $0x1ac] sm:$0xff]
        %v3673 = vlaneseq
        %v3674 = vshrl.u32 %v3673, 7
        %v3675 = vsub.s32 5, %v3674
        %v3676 = vrot.slane %v1131, %v3675
        %v3677 = vmul.f32 %v3633, %v3676
        %v3678 = vmul.f32 %v3634, %v3676
        %v3679 = vmul.f32 %v3635, %v3676
        %v3680 = vmul.f32 %v3636, %v3676
        %v3681 = vmul.f32 %v3637, %v3676
        %v3682 = vmul.f32 %v3638, %v3676
        %v3683 = vmul.f32 %v3639, %v3676
        %v3684 = vmul.f32 %v3640, %v3676
        %v3685 = vmul.f32 %v3641, %v3676
        %v3686 = vmul.f32 %v3642, %v3676
        %v3687 = vmul.f32 %v3643, %v3676
        %v3688 = vmul.f32 %v3644, %v3676
        %v3689 = vmul.f32 %v3645, %v3676
        %v3690 = vmul.f32 %v3646, %v3676
        %v3691 = vmul.f32 %v3647, %v3676
        %v3692 = vmul.f32 %v3648, %v3676
        %v3693 = vmul.f32 %v3649, %v3676
        %v3694 = vmul.f32 %v3650, %v3676
        %v3695 = vmul.f32 %v3651, %v3676
        %v3696 = vmul.f32 %v3652, %v3676
        %v3697 = vmul.f32 %v3653, %v3676
        %v3698 = vmul.f32 %v3654, %v3676
        %v3699 = vmul.f32 %v3655, %v3676
        %v3700 = vmul.f32 %v3656, %v3676
        %v3701 = vmul.f32 %v3657, %v3676
        %v3702 = vmul.f32 %v3658, %v3676
        %v3703 = vmul.f32 %v3659, %v3676
        %v3704 = vmul.f32 %v3660, %v3676
        %v3705 = vmul.f32 %v3661, %v3676
        %v3706 = vmul.f32 %v3662, %v3676
        %v3707 = vmul.f32 %v3663, %v3676
        %v3708 = vmul.f32 %v3664, %v3676
        %v3709 = vmul.f32 %v3665, %v3676
        %v3710 = vmul.f32 %v3666, %v3676
        %v3711 = vmul.f32 %v3667, %v3676
        %v3712 = vmul.f32 %v3668, %v3676
        %v3713 = vmul.f32 %v3669, %v3676
        %v3714 = vmul.f32 %v3670, %v3676
        %v3715 = vmul.f32 %v3671, %v3676
        %v3716 = vmul.f32 %v3672, %v3676
        %v3717 = vadd.f32 %v3593, %v3677
        %v3718 = vadd.f32 %v3594, %v3678
        %v3719 = vadd.f32 %v3595, %v3679
        %v3720 = vadd.f32 %v3596, %v3680
        %v3721 = vadd.f32 %v3597, %v3681
        %v3722 = vadd.f32 %v3598, %v3682
        %v3723 = vadd.f32 %v3599, %v3683
        %v3724 = vadd.f32 %v3600, %v3684
        %v3725 = vadd.f32 %v3601, %v3685
        %v3726 = vadd.f32 %v3602, %v3686
        %v3727 = vadd.f32 %v3603, %v3687
        %v3728 = vadd.f32 %v3604, %v3688
        %v3729 = vadd.f32 %v3605, %v3689
        %v3730 = vadd.f32 %v3606, %v3690
        %v3731 = vadd.f32 %v3607, %v3691
        %v3732 = vadd.f32 %v3608, %v3692
        %v3733 = vadd.f32 %v3609, %v3693
        %v3734 = vadd.f32 %v3610, %v3694
        %v3735 = vadd.f32 %v3611, %v3695
        %v3736 = vadd.f32 %v3612, %v3696
        %v3737 = vadd.f32 %v3613, %v3697
        %v3738 = vadd.f32 %v3614, %v3698
        %v3739 = vadd.f32 %v3615, %v3699
        %v3740 = vadd.f32 %v3616, %v3700
        %v3741 = vadd.f32 %v3617, %v3701
        %v3742 = vadd.f32 %v3618, %v3702
        %v3743 = vadd.f32 %v3619, %v3703
        %v3744 = vadd.f32 %v3620, %v3704
        %v3745 = vadd.f32 %v3621, %v3705
        %v3746 = vadd.f32 %v3622, %v3706
        %v3747 = vadd.f32 %v3623, %v3707
        %v3748 = vadd.f32 %v3624, %v3708
        %v3749 = vadd.f32 %v3625, %v3709
        %v3750 = vadd.f32 %v3626, %v3710
        %v3751 = vadd.f32 %v3627, %v3711
        %v3752 = vadd.f32 %v3628, %v3712
        %v3753 = vadd.f32 %v3629, %v3713
        %v3754 = vadd.f32 %v3630, %v3714
        %v3755 = vadd.f32 %v3631, %v3715
        %v3756 = vadd.f32 %v3632, %v3716
        %v3757 = vld [vmem:[%s1098 + $0x15] sm:$0xff]
        %v3758 = vld [vmem:[%s1098 + $0x1d] sm:$0xff]
        %v3759 = vld [vmem:[%s1098 + $0x25] sm:$0xff]
        %v3760 = vld [vmem:[%s1098 + $0x2d] sm:$0xff]
        %v3761 = vld [vmem:[%s1098 + $0x35] sm:$0xff]
        %v3762 = vld [vmem:[%s1098 + $0x3d] sm:$0xff]
        %v3763 = vld [vmem:[%s1098 + $0x45] sm:$0xff]
        %v3764 = vld [vmem:[%s1098 + $0x4d] sm:$0xff]
        %v3765 = vld [vmem:[%s1098 + $0x55] sm:$0xff]
        %v3766 = vld [vmem:[%s1098 + $0x5d] sm:$0xff]
        %v3767 = vld [vmem:[%s1098 + $0x85] sm:$0xff]
        %v3768 = vld [vmem:[%s1098 + $0x8d] sm:$0xff]
        %v3769 = vld [vmem:[%s1098 + $0x95] sm:$0xff]
        %v3770 = vld [vmem:[%s1098 + $0x9d] sm:$0xff]
        %v3771 = vld [vmem:[%s1098 + $0xa5] sm:$0xff]
        %v3772 = vld [vmem:[%s1098 + $0xad] sm:$0xff]
        %v3773 = vld [vmem:[%s1098 + $0xb5] sm:$0xff]
        %v3774 = vld [vmem:[%s1098 + $0xbd] sm:$0xff]
        %v3775 = vld [vmem:[%s1098 + $0xc5] sm:$0xff]
        %v3776 = vld [vmem:[%s1098 + $0xcd] sm:$0xff]
        %v3777 = vld [vmem:[%s1098 + $0xf5] sm:$0xff]
        %v3778 = vld [vmem:[%s1098 + $0xfd] sm:$0xff]
        %v3779 = vld [vmem:[%s1098 + $0x105] sm:$0xff]
        %v3780 = vld [vmem:[%s1098 + $0x10d] sm:$0xff]
        %v3781 = vld [vmem:[%s1098 + $0x115] sm:$0xff]
        %v3782 = vld [vmem:[%s1098 + $0x11d] sm:$0xff]
        %v3783 = vld [vmem:[%s1098 + $0x125] sm:$0xff]
        %v3784 = vld [vmem:[%s1098 + $0x12d] sm:$0xff]
        %v3785 = vld [vmem:[%s1098 + $0x135] sm:$0xff]
        %v3786 = vld [vmem:[%s1098 + $0x13d] sm:$0xff]
        %v3787 = vld [vmem:[%s1098 + $0x165] sm:$0xff]
        %v3788 = vld [vmem:[%s1098 + $0x16d] sm:$0xff]
        %v3789 = vld [vmem:[%s1098 + $0x175] sm:$0xff]
        %v3790 = vld [vmem:[%s1098 + $0x17d] sm:$0xff]
        %v3791 = vld [vmem:[%s1098 + $0x185] sm:$0xff]
        %v3792 = vld [vmem:[%s1098 + $0x18d] sm:$0xff]
        %v3793 = vld [vmem:[%s1098 + $0x195] sm:$0xff]
        %v3794 = vld [vmem:[%s1098 + $0x19d] sm:$0xff]
        %v3795 = vld [vmem:[%s1098 + $0x1a5] sm:$0xff]
        %v3796 = vld [vmem:[%s1098 + $0x1ad] sm:$0xff]
        %v3797 = vlaneseq
        %v3798 = vshrl.u32 %v3797, 7
        %v3799 = vsub.s32 6, %v3798
        %v3800 = vrot.slane %v1131, %v3799
        %v3801 = vmul.f32 %v3757, %v3800
        %v3802 = vmul.f32 %v3758, %v3800
        %v3803 = vmul.f32 %v3759, %v3800
        %v3804 = vmul.f32 %v3760, %v3800
        %v3805 = vmul.f32 %v3761, %v3800
        %v3806 = vmul.f32 %v3762, %v3800
        %v3807 = vmul.f32 %v3763, %v3800
        %v3808 = vmul.f32 %v3764, %v3800
        %v3809 = vmul.f32 %v3765, %v3800
        %v3810 = vmul.f32 %v3766, %v3800
        %v3811 = vmul.f32 %v3767, %v3800
        %v3812 = vmul.f32 %v3768, %v3800
        %v3813 = vmul.f32 %v3769, %v3800
        %v3814 = vmul.f32 %v3770, %v3800
        %v3815 = vmul.f32 %v3771, %v3800
        %v3816 = vmul.f32 %v3772, %v3800
        %v3817 = vmul.f32 %v3773, %v3800
        %v3818 = vmul.f32 %v3774, %v3800
        %v3819 = vmul.f32 %v3775, %v3800
        %v3820 = vmul.f32 %v3776, %v3800
        %v3821 = vmul.f32 %v3777, %v3800
        %v3822 = vmul.f32 %v3778, %v3800
        %v3823 = vmul.f32 %v3779, %v3800
        %v3824 = vmul.f32 %v3780, %v3800
        %v3825 = vmul.f32 %v3781, %v3800
        %v3826 = vmul.f32 %v3782, %v3800
        %v3827 = vmul.f32 %v3783, %v3800
        %v3828 = vmul.f32 %v3784, %v3800
        %v3829 = vmul.f32 %v3785, %v3800
        %v3830 = vmul.f32 %v3786, %v3800
        %v3831 = vmul.f32 %v3787, %v3800
        %v3832 = vmul.f32 %v3788, %v3800
        %v3833 = vmul.f32 %v3789, %v3800
        %v3834 = vmul.f32 %v3790, %v3800
        %v3835 = vmul.f32 %v3791, %v3800
        %v3836 = vmul.f32 %v3792, %v3800
        %v3837 = vmul.f32 %v3793, %v3800
        %v3838 = vmul.f32 %v3794, %v3800
        %v3839 = vmul.f32 %v3795, %v3800
        %v3840 = vmul.f32 %v3796, %v3800
        %v3841 = vadd.f32 %v3717, %v3801
        %v3842 = vadd.f32 %v3718, %v3802
        %v3843 = vadd.f32 %v3719, %v3803
        %v3844 = vadd.f32 %v3720, %v3804
        %v3845 = vadd.f32 %v3721, %v3805
        %v3846 = vadd.f32 %v3722, %v3806
        %v3847 = vadd.f32 %v3723, %v3807
        %v3848 = vadd.f32 %v3724, %v3808
        %v3849 = vadd.f32 %v3725, %v3809
        %v3850 = vadd.f32 %v3726, %v3810
        %v3851 = vadd.f32 %v3727, %v3811
        %v3852 = vadd.f32 %v3728, %v3812
        %v3853 = vadd.f32 %v3729, %v3813
        %v3854 = vadd.f32 %v3730, %v3814
        %v3855 = vadd.f32 %v3731, %v3815
        %v3856 = vadd.f32 %v3732, %v3816
        %v3857 = vadd.f32 %v3733, %v3817
        %v3858 = vadd.f32 %v3734, %v3818
        %v3859 = vadd.f32 %v3735, %v3819
        %v3860 = vadd.f32 %v3736, %v3820
        %v3861 = vadd.f32 %v3737, %v3821
        %v3862 = vadd.f32 %v3738, %v3822
        %v3863 = vadd.f32 %v3739, %v3823
        %v3864 = vadd.f32 %v3740, %v3824
        %v3865 = vadd.f32 %v3741, %v3825
        %v3866 = vadd.f32 %v3742, %v3826
        %v3867 = vadd.f32 %v3743, %v3827
        %v3868 = vadd.f32 %v3744, %v3828
        %v3869 = vadd.f32 %v3745, %v3829
        %v3870 = vadd.f32 %v3746, %v3830
        %v3871 = vadd.f32 %v3747, %v3831
        %v3872 = vadd.f32 %v3748, %v3832
        %v3873 = vadd.f32 %v3749, %v3833
        %v3874 = vadd.f32 %v3750, %v3834
        %v3875 = vadd.f32 %v3751, %v3835
        %v3876 = vadd.f32 %v3752, %v3836
        %v3877 = vadd.f32 %v3753, %v3837
        %v3878 = vadd.f32 %v3754, %v3838
        %v3879 = vadd.f32 %v3755, %v3839
        %v3880 = vadd.f32 %v3756, %v3840
        %v3881 = vld [vmem:[%s1258 + $0x15] sm:$0xff]
        %v3882 = vld [vmem:[%s1258 + $0x1d] sm:$0xff]
        %v3883 = vld [vmem:[%s1258 + $0x25] sm:$0xff]
        %v3884 = vld [vmem:[%s1258 + $0x2d] sm:$0xff]
        %v3885 = vld [vmem:[%s1258 + $0x35] sm:$0xff]
        %v3886 = vld [vmem:[%s1258 + $0x3d] sm:$0xff]
        %v3887 = vld [vmem:[%s1258 + $0x45] sm:$0xff]
        %v3888 = vld [vmem:[%s1258 + $0x4d] sm:$0xff]
        %v3889 = vld [vmem:[%s1258 + $0x55] sm:$0xff]
        %v3890 = vld [vmem:[%s1258 + $0x5d] sm:$0xff]
        %v3891 = vld [vmem:[%s1258 + $0x85] sm:$0xff]
        %v3892 = vld [vmem:[%s1258 + $0x8d] sm:$0xff]
        %v3893 = vld [vmem:[%s1258 + $0x95] sm:$0xff]
        %v3894 = vld [vmem:[%s1258 + $0x9d] sm:$0xff]
        %v3895 = vld [vmem:[%s1258 + $0xa5] sm:$0xff]
        %v3896 = vld [vmem:[%s1258 + $0xad] sm:$0xff]
        %v3897 = vld [vmem:[%s1258 + $0xb5] sm:$0xff]
        %v3898 = vld [vmem:[%s1258 + $0xbd] sm:$0xff]
        %v3899 = vld [vmem:[%s1258 + $0xc5] sm:$0xff]
        %v3900 = vld [vmem:[%s1258 + $0xcd] sm:$0xff]
        %v3901 = vld [vmem:[%s1258 + $0xf5] sm:$0xff]
        %v3902 = vld [vmem:[%s1258 + $0xfd] sm:$0xff]
        %v3903 = vld [vmem:[%s1258 + $0x105] sm:$0xff]
        %v3904 = vld [vmem:[%s1258 + $0x10d] sm:$0xff]
        %v3905 = vld [vmem:[%s1258 + $0x115] sm:$0xff]
        %v3906 = vld [vmem:[%s1258 + $0x11d] sm:$0xff]
        %v3907 = vld [vmem:[%s1258 + $0x125] sm:$0xff]
        %v3908 = vld [vmem:[%s1258 + $0x12d] sm:$0xff]
        %v3909 = vld [vmem:[%s1258 + $0x135] sm:$0xff]
        %v3910 = vld [vmem:[%s1258 + $0x13d] sm:$0xff]
        %v3911 = vld [vmem:[%s1258 + $0x165] sm:$0xff]
        %v3912 = vld [vmem:[%s1258 + $0x16d] sm:$0xff]
        %v3913 = vld [vmem:[%s1258 + $0x175] sm:$0xff]
        %v3914 = vld [vmem:[%s1258 + $0x17d] sm:$0xff]
        %v3915 = vld [vmem:[%s1258 + $0x185] sm:$0xff]
        %v3916 = vld [vmem:[%s1258 + $0x18d] sm:$0xff]
        %v3917 = vld [vmem:[%s1258 + $0x195] sm:$0xff]
        %v3918 = vld [vmem:[%s1258 + $0x19d] sm:$0xff]
        %v3919 = vld [vmem:[%s1258 + $0x1a5] sm:$0xff]
        %v3920 = vld [vmem:[%s1258 + $0x1ad] sm:$0xff]
        %v3921 = vlaneseq
        %v3922 = vshrl.u32 %v3921, 7
        %v3923 = vsub.s32 7, %v3922
        %v3924 = vrot.slane %v1131, %v3923
        %v3925 = vmul.f32 %v3881, %v3924
        %v3926 = vmul.f32 %v3882, %v3924
        %v3927 = vmul.f32 %v3883, %v3924
        %v3928 = vmul.f32 %v3884, %v3924
        %v3929 = vmul.f32 %v3885, %v3924
        %v3930 = vmul.f32 %v3886, %v3924
        %v3931 = vmul.f32 %v3887, %v3924
        %v3932 = vmul.f32 %v3888, %v3924
        %v3933 = vmul.f32 %v3889, %v3924
        %v3934 = vmul.f32 %v3890, %v3924
        %v3935 = vmul.f32 %v3891, %v3924
        %v3936 = vmul.f32 %v3892, %v3924
        %v3937 = vmul.f32 %v3893, %v3924
        %v3938 = vmul.f32 %v3894, %v3924
        %v3939 = vmul.f32 %v3895, %v3924
        %v3940 = vmul.f32 %v3896, %v3924
        %v3941 = vmul.f32 %v3897, %v3924
        %v3942 = vmul.f32 %v3898, %v3924
        %v3943 = vmul.f32 %v3899, %v3924
        %v3944 = vmul.f32 %v3900, %v3924
        %v3945 = vmul.f32 %v3901, %v3924
        %v3946 = vmul.f32 %v3902, %v3924
        %v3947 = vmul.f32 %v3903, %v3924
        %v3948 = vmul.f32 %v3904, %v3924
        %v3949 = vmul.f32 %v3905, %v3924
        %v3950 = vmul.f32 %v3906, %v3924
        %v3951 = vmul.f32 %v3907, %v3924
        %v3952 = vmul.f32 %v3908, %v3924
        %v3953 = vmul.f32 %v3909, %v3924
        %v3954 = vmul.f32 %v3910, %v3924
        %v3955 = vmul.f32 %v3911, %v3924
        %v3956 = vmul.f32 %v3912, %v3924
        %v3957 = vmul.f32 %v3913, %v3924
        %v3958 = vmul.f32 %v3914, %v3924
        %v3959 = vmul.f32 %v3915, %v3924
        %v3960 = vmul.f32 %v3916, %v3924
        %v3961 = vmul.f32 %v3917, %v3924
        %v3962 = vmul.f32 %v3918, %v3924
        %v3963 = vmul.f32 %v3919, %v3924
        %v3964 = vmul.f32 %v3920, %v3924
        %v3965 = vadd.f32 %v3841, %v3925
        %v3966 = vadd.f32 %v3842, %v3926
        %v3967 = vadd.f32 %v3843, %v3927
        %v3968 = vadd.f32 %v3844, %v3928
        %v3969 = vadd.f32 %v3845, %v3929
        %v3970 = vadd.f32 %v3846, %v3930
        %v3971 = vadd.f32 %v3847, %v3931
        %v3972 = vadd.f32 %v3848, %v3932
        %v3973 = vadd.f32 %v3849, %v3933
        %v3974 = vadd.f32 %v3850, %v3934
        %v3975 = vadd.f32 %v3851, %v3935
        %v3976 = vadd.f32 %v3852, %v3936
        %v3977 = vadd.f32 %v3853, %v3937
        %v3978 = vadd.f32 %v3854, %v3938
        %v3979 = vadd.f32 %v3855, %v3939
        %v3980 = vadd.f32 %v3856, %v3940
        %v3981 = vadd.f32 %v3857, %v3941
        %v3982 = vadd.f32 %v3858, %v3942
        %v3983 = vadd.f32 %v3859, %v3943
        %v3984 = vadd.f32 %v3860, %v3944
        %v3985 = vadd.f32 %v3861, %v3945
        %v3986 = vadd.f32 %v3862, %v3946
        %v3987 = vadd.f32 %v3863, %v3947
        %v3988 = vadd.f32 %v3864, %v3948
        %v3989 = vadd.f32 %v3865, %v3949
        %v3990 = vadd.f32 %v3866, %v3950
        %v3991 = vadd.f32 %v3867, %v3951
        %v3992 = vadd.f32 %v3868, %v3952
        %v3993 = vadd.f32 %v3869, %v3953
        %v3994 = vadd.f32 %v3870, %v3954
        %v3995 = vadd.f32 %v3871, %v3955
        %v3996 = vadd.f32 %v3872, %v3956
        %v3997 = vadd.f32 %v3873, %v3957
        %v3998 = vadd.f32 %v3874, %v3958
        %v3999 = vadd.f32 %v3875, %v3959
        %v4000 = vadd.f32 %v3876, %v3960
        %v4001 = vadd.f32 %v3877, %v3961
        %v4002 = vadd.f32 %v3878, %v3962
        %v4003 = vadd.f32 %v3879, %v3963
        %v4004 = vadd.f32 %v3880, %v3964
        %v4005 = vld [vmem:[%s1098 + $0x16] sm:$0xff]
        %v4006 = vld [vmem:[%s1098 + $0x1e] sm:$0xff]
        %v4007 = vld [vmem:[%s1098 + $0x26] sm:$0xff]
        %v4008 = vld [vmem:[%s1098 + $0x2e] sm:$0xff]
        %v4009 = vld [vmem:[%s1098 + $0x36] sm:$0xff]
        %v4010 = vld [vmem:[%s1098 + $0x3e] sm:$0xff]
        %v4011 = vld [vmem:[%s1098 + $0x46] sm:$0xff]
        %v4012 = vld [vmem:[%s1098 + $0x4e] sm:$0xff]
        %v4013 = vld [vmem:[%s1098 + $0x56] sm:$0xff]
        %v4014 = vld [vmem:[%s1098 + $0x5e] sm:$0xff]
        %v4015 = vld [vmem:[%s1098 + $0x86] sm:$0xff]
        %v4016 = vld [vmem:[%s1098 + $0x8e] sm:$0xff]
        %v4017 = vld [vmem:[%s1098 + $0x96] sm:$0xff]
        %v4018 = vld [vmem:[%s1098 + $0x9e] sm:$0xff]
        %v4019 = vld [vmem:[%s1098 + $0xa6] sm:$0xff]
        %v4020 = vld [vmem:[%s1098 + $0xae] sm:$0xff]
        %v4021 = vld [vmem:[%s1098 + $0xb6] sm:$0xff]
        %v4022 = vld [vmem:[%s1098 + $0xbe] sm:$0xff]
        %v4023 = vld [vmem:[%s1098 + $0xc6] sm:$0xff]
        %v4024 = vld [vmem:[%s1098 + $0xce] sm:$0xff]
        %v4025 = vld [vmem:[%s1098 + $0xf6] sm:$0xff]
        %v4026 = vld [vmem:[%s1098 + $0xfe] sm:$0xff]
        %v4027 = vld [vmem:[%s1098 + $0x106] sm:$0xff]
        %v4028 = vld [vmem:[%s1098 + $0x10e] sm:$0xff]
        %v4029 = vld [vmem:[%s1098 + $0x116] sm:$0xff]
        %v4030 = vld [vmem:[%s1098 + $0x11e] sm:$0xff]
        %v4031 = vld [vmem:[%s1098 + $0x126] sm:$0xff]
        %v4032 = vld [vmem:[%s1098 + $0x12e] sm:$0xff]
        %v4033 = vld [vmem:[%s1098 + $0x136] sm:$0xff]
        %v4034 = vld [vmem:[%s1098 + $0x13e] sm:$0xff]
        %v4035 = vld [vmem:[%s1098 + $0x166] sm:$0xff]
        %v4036 = vld [vmem:[%s1098 + $0x16e] sm:$0xff]
        %v4037 = vld [vmem:[%s1098 + $0x176] sm:$0xff]
        %v4038 = vld [vmem:[%s1098 + $0x17e] sm:$0xff]
        %v4039 = vld [vmem:[%s1098 + $0x186] sm:$0xff]
        %v4040 = vld [vmem:[%s1098 + $0x18e] sm:$0xff]
        %v4041 = vld [vmem:[%s1098 + $0x196] sm:$0xff]
        %v4042 = vld [vmem:[%s1098 + $0x19e] sm:$0xff]
        %v4043 = vld [vmem:[%s1098 + $0x1a6] sm:$0xff]
        %v4044 = vld [vmem:[%s1098 + $0x1ae] sm:$0xff]
        %v4045 = vlaneseq
        %v4046 = vshrl.u32 %v4045, 7
        %v4047 = vsub.s32 0, %v4046
        %v4048 = vrot.slane %v1132, %v4047
        %v4049 = vmul.f32 %v4005, %v4048
        %v4050 = vmul.f32 %v4006, %v4048
        %v4051 = vmul.f32 %v4007, %v4048
        %v4052 = vmul.f32 %v4008, %v4048
        %v4053 = vmul.f32 %v4009, %v4048
        %v4054 = vmul.f32 %v4010, %v4048
        %v4055 = vmul.f32 %v4011, %v4048
        %v4056 = vmul.f32 %v4012, %v4048
        %v4057 = vmul.f32 %v4013, %v4048
        %v4058 = vmul.f32 %v4014, %v4048
        %v4059 = vmul.f32 %v4015, %v4048
        %v4060 = vmul.f32 %v4016, %v4048
        %v4061 = vmul.f32 %v4017, %v4048
        %v4062 = vmul.f32 %v4018, %v4048
        %v4063 = vmul.f32 %v4019, %v4048
        %v4064 = vmul.f32 %v4020, %v4048
        %v4065 = vmul.f32 %v4021, %v4048
        %v4066 = vmul.f32 %v4022, %v4048
        %v4067 = vmul.f32 %v4023, %v4048
        %v4068 = vmul.f32 %v4024, %v4048
        %v4069 = vmul.f32 %v4025, %v4048
        %v4070 = vmul.f32 %v4026, %v4048
        %v4071 = vmul.f32 %v4027, %v4048
        %v4072 = vmul.f32 %v4028, %v4048
        %v4073 = vmul.f32 %v4029, %v4048
        %v4074 = vmul.f32 %v4030, %v4048
        %v4075 = vmul.f32 %v4031, %v4048
        %v4076 = vmul.f32 %v4032, %v4048
        %v4077 = vmul.f32 %v4033, %v4048
        %v4078 = vmul.f32 %v4034, %v4048
        %v4079 = vmul.f32 %v4035, %v4048
        %v4080 = vmul.f32 %v4036, %v4048
        %v4081 = vmul.f32 %v4037, %v4048
        %v4082 = vmul.f32 %v4038, %v4048
        %v4083 = vmul.f32 %v4039, %v4048
        %v4084 = vmul.f32 %v4040, %v4048
        %v4085 = vmul.f32 %v4041, %v4048
        %v4086 = vmul.f32 %v4042, %v4048
        %v4087 = vmul.f32 %v4043, %v4048
        %v4088 = vmul.f32 %v4044, %v4048
        %v4089 = vadd.f32 %v3965, %v4049
        %v4090 = vadd.f32 %v3966, %v4050
        %v4091 = vadd.f32 %v3967, %v4051
        %v4092 = vadd.f32 %v3968, %v4052
        %v4093 = vadd.f32 %v3969, %v4053
        %v4094 = vadd.f32 %v3970, %v4054
        %v4095 = vadd.f32 %v3971, %v4055
        %v4096 = vadd.f32 %v3972, %v4056
        %v4097 = vadd.f32 %v3973, %v4057
        %v4098 = vadd.f32 %v3974, %v4058
        %v4099 = vadd.f32 %v3975, %v4059
        %v4100 = vadd.f32 %v3976, %v4060
        %v4101 = vadd.f32 %v3977, %v4061
        %v4102 = vadd.f32 %v3978, %v4062
        %v4103 = vadd.f32 %v3979, %v4063
        %v4104 = vadd.f32 %v3980, %v4064
        %v4105 = vadd.f32 %v3981, %v4065
        %v4106 = vadd.f32 %v3982, %v4066
        %v4107 = vadd.f32 %v3983, %v4067
        %v4108 = vadd.f32 %v3984, %v4068
        %v4109 = vadd.f32 %v3985, %v4069
        %v4110 = vadd.f32 %v3986, %v4070
        %v4111 = vadd.f32 %v3987, %v4071
        %v4112 = vadd.f32 %v3988, %v4072
        %v4113 = vadd.f32 %v3989, %v4073
        %v4114 = vadd.f32 %v3990, %v4074
        %v4115 = vadd.f32 %v3991, %v4075
        %v4116 = vadd.f32 %v3992, %v4076
        %v4117 = vadd.f32 %v3993, %v4077
        %v4118 = vadd.f32 %v3994, %v4078
        %v4119 = vadd.f32 %v3995, %v4079
        %v4120 = vadd.f32 %v3996, %v4080
        %v4121 = vadd.f32 %v3997, %v4081
        %v4122 = vadd.f32 %v3998, %v4082
        %v4123 = vadd.f32 %v3999, %v4083
        %v4124 = vadd.f32 %v4000, %v4084
        %v4125 = vadd.f32 %v4001, %v4085
        %v4126 = vadd.f32 %v4002, %v4086
        %v4127 = vadd.f32 %v4003, %v4087
        %v4128 = vadd.f32 %v4004, %v4088
        %v4130 = vlaneseq
        %v4131 = vshrl.u32 %v4130, 7
        %v4132 = vsub.s32 0, %v4131
        %v4133 = vrot.slane %v1133, %v4132
        %v4135 = vadd.f32 %v4089, %v4133
        %v4136 = vadd.f32 %v4090, %v4133
        %v4137 = vadd.f32 %v4091, %v4133
        %v4138 = vadd.f32 %v4092, %v4133
        %v4139 = vadd.f32 %v4093, %v4133
        %v4140 = vadd.f32 %v4094, %v4133
        %v4141 = vadd.f32 %v4095, %v4133
        %v4142 = vadd.f32 %v4096, %v4133
        %v4143 = vadd.f32 %v4097, %v4133
        %v4144 = vadd.f32 %v4098, %v4133
        %v4145 = vadd.f32 %v4099, %v4133
        %v4146 = vadd.f32 %v4100, %v4133
        %v4147 = vadd.f32 %v4101, %v4133
        %v4148 = vadd.f32 %v4102, %v4133
        %v4149 = vadd.f32 %v4103, %v4133
        %v4150 = vadd.f32 %v4104, %v4133
        %v4151 = vadd.f32 %v4105, %v4133
        %v4152 = vadd.f32 %v4106, %v4133
        %v4153 = vadd.f32 %v4107, %v4133
        %v4154 = vadd.f32 %v4108, %v4133
        %v4155 = vadd.f32 %v4109, %v4133
        %v4156 = vadd.f32 %v4110, %v4133
        %v4157 = vadd.f32 %v4111, %v4133
        %v4158 = vadd.f32 %v4112, %v4133
        %v4159 = vadd.f32 %v4113, %v4133
        %v4160 = vadd.f32 %v4114, %v4133
        %v4161 = vadd.f32 %v4115, %v4133
        %v4162 = vadd.f32 %v4116, %v4133
        %v4163 = vadd.f32 %v4117, %v4133
        %v4164 = vadd.f32 %v4118, %v4133
        %v4165 = vadd.f32 %v4119, %v4133
        %v4166 = vadd.f32 %v4120, %v4133
        %v4167 = vadd.f32 %v4121, %v4133
        %v4168 = vadd.f32 %v4122, %v4133
        %v4169 = vadd.f32 %v4123, %v4133
        %v4170 = vadd.f32 %v4124, %v4133
        %v4171 = vadd.f32 %v4125, %v4133
        %v4172 = vadd.f32 %v4126, %v4133
        %v4173 = vadd.f32 %v4127, %v4133
        %v4174 = vadd.f32 %v4128, %v4133
        %v4175 = vmax.f32 %v4135, 0.0
        %v4176 = vmax.f32 %v4136, 0.0
        %v4177 = vmax.f32 %v4137, 0.0
        %v4178 = vmax.f32 %v4138, 0.0
        %v4179 = vmax.f32 %v4139, 0.0
        %v4180 = vmax.f32 %v4140, 0.0
        %v4181 = vmax.f32 %v4141, 0.0
        %v4182 = vmax.f32 %v4142, 0.0
        %v4183 = vmax.f32 %v4143, 0.0
        %v4184 = vmax.f32 %v4144, 0.0
        %v4185 = vmax.f32 %v4145, 0.0
        %v4186 = vmax.f32 %v4146, 0.0
        %v4187 = vmax.f32 %v4147, 0.0
        %v4188 = vmax.f32 %v4148, 0.0
        %v4189 = vmax.f32 %v4149, 0.0
        %v4190 = vmax.f32 %v4150, 0.0
        %v4191 = vmax.f32 %v4151, 0.0
        %v4192 = vmax.f32 %v4152, 0.0
        %v4193 = vmax.f32 %v4153, 0.0
        %v4194 = vmax.f32 %v4154, 0.0
        %v4195 = vmax.f32 %v4155, 0.0
        %v4196 = vmax.f32 %v4156, 0.0
        %v4197 = vmax.f32 %v4157, 0.0
        %v4198 = vmax.f32 %v4158, 0.0
        %v4199 = vmax.f32 %v4159, 0.0
        %v4200 = vmax.f32 %v4160, 0.0
        %v4201 = vmax.f32 %v4161, 0.0
        %v4202 = vmax.f32 %v4162, 0.0
        %v4203 = vmax.f32 %v4163, 0.0
        %v4204 = vmax.f32 %v4164, 0.0
        %v4205 = vmax.f32 %v4165, 0.0
        %v4206 = vmax.f32 %v4166, 0.0
        %v4207 = vmax.f32 %v4167, 0.0
        %v4208 = vmax.f32 %v4168, 0.0
        %v4209 = vmax.f32 %v4169, 0.0
        %v4210 = vmax.f32 %v4170, 0.0
        %v4211 = vmax.f32 %v4171, 0.0
        %v4212 = vmax.f32 %v4172, 0.0
        %v4213 = vmax.f32 %v4173, 0.0
        %v4214 = vmax.f32 %v4174, 0.0
        %v4215 = vpack.c.bf16 %v4176, %v4175
        %v4216 = vpack.c.bf16 %v4178, %v4177
        %v4217 = vpack.c.bf16 %v4180, %v4179
        %v4218 = vpack.c.bf16 %v4182, %v4181
        %v4219 = vpack.c.bf16 %v4184, %v4183
        %v4220 = vpack.c.bf16 %v4186, %v4185
        %v4221 = vpack.c.bf16 %v4188, %v4187
        %v4222 = vpack.c.bf16 %v4190, %v4189
        %v4223 = vpack.c.bf16 %v4192, %v4191
        %v4224 = vpack.c.bf16 %v4194, %v4193
        %v4225 = vpack.c.bf16 %v4196, %v4195
        %v4226 = vpack.c.bf16 %v4198, %v4197
        %v4227 = vpack.c.bf16 %v4200, %v4199
        %v4228 = vpack.c.bf16 %v4202, %v4201
        %v4229 = vpack.c.bf16 %v4204, %v4203
        %v4230 = vpack.c.bf16 %v4206, %v4205
        %v4231 = vpack.c.bf16 %v4208, %v4207
        %v4232 = vpack.c.bf16 %v4210, %v4209
        %v4233 = vpack.c.bf16 %v4212, %v4211
        %v4234 = vpack.c.bf16 %v4214, %v4213
        %v4235 = vld [vmem:[%s3] sm:$0xf]
        %v4236 = vld [vmem:[%s3 + $0x4] sm:$0xf]
        %v4237 = vld [vmem:[%s3 + $0x8] sm:$0xf]
        %v4238 = vld [vmem:[%s3 + $0xc] sm:$0xf]
        %v4239 = vld [vmem:[%s3 + $0x10] sm:$0xf]
        %v4240 = vld [vmem:[%s3 + $0x14] sm:$0xf]
        %v4241 = vld [vmem:[%s3 + $0x18] sm:$0xf]
        %v4242 = vld [vmem:[%s3 + $0x1c] sm:$0xf]
        %v4243 = vld [vmem:[%s3 + $0x20] sm:$0xf]
        %v4244 = vld [vmem:[%s3 + $0x24] sm:$0xf]
        %v4245 = vld [vmem:[%s3 + $0x28] sm:$0xf]
        %v4246 = vld [vmem:[%s3 + $0x2c] sm:$0xf]
        %v4259 = vunpack.c.l.b16 %v4235
        %v4260 = vunpack.c.l.b16 %v4236
        %v4261 = vunpack.c.l.b16 %v4237
        %v4262 = vunpack.c.l.b16 %v4238
        %v4263 = vunpack.c.l.b16 %v4239
        %v4264 = vunpack.c.l.b16 %v4240
        %v4265 = vunpack.c.l.b16 %v4241
        %v4266 = vunpack.c.l.b16 %v4242
        %v4267 = vunpack.c.l.b16 %v4243
        %v4268 = vunpack.c.l.b16 %v4244
        %v4269 = vunpack.c.l.b16 %v4245
        %v4270 = vunpack.c.l.b16 %v4246
        %v4271 = vpack.c.b16 %v4260, %v4259
        %v4272 = vpack.c.b16 %v4262, %v4261
        %v4273 = vpack.c.b16 %v4264, %v4263
        %v4274 = vpack.c.b16 %v4266, %v4265
        %v4275 = vpack.c.b16 %v4268, %v4267
        %v4276 = vpack.c.b16 %v4270, %v4269
        %vm4283 = vcmask 785408
        %v4285 = vsel %vm4283, %v4215, 0
        %v4288 = vsel %vm4283, %v4216, 0
        %v4291 = vsel %vm4283, %v4217, 0
        %v4294 = vsel %vm4283, %v4218, 0
        %v4297 = vsel %vm4283, %v4219, 0
        %v4300 = vsel %vm4283, %v4220, 0
        %v4303 = vsel %vm4283, %v4221, 0
        %v4306 = vsel %vm4283, %v4222, 0
        %v4309 = vsel %vm4283, %v4223, 0
        %v4312 = vsel %vm4283, %v4224, 0
        %v4315 = vsel %vm4283, %v4225, 0
        %v4318 = vsel %vm4283, %v4226, 0
        %v4321 = vsel %vm4283, %v4227, 0
        %v4324 = vsel %vm4283, %v4228, 0
        %v4327 = vsel %vm4283, %v4229, 0
        %v4330 = vsel %vm4283, %v4230, 0
        %v4333 = vsel %vm4283, %v4231, 0
        %v4336 = vsel %vm4283, %v4232, 0
        %v4339 = vsel %vm4283, %v4233, 0
        %v4342 = vsel %vm4283, %v4234, 0
        %4344 = vmatprep.subr.bf16.mxu0 0
        %4345 = vmatpush1.bf16.msra.mxu0 %v4271
        %4346 = vmatprep.subr.bf16.mxu0 0
        %4347 = vmatpush1.bf16.msra.mxu0 %v4272
        %4348 = vmatprep.subr.bf16.mxu0 0
        %4349 = vmatpush1.bf16.msra.mxu0 %v4273
        %4350 = vmatprep.subr.bf16.mxu0 0
        %4351 = vmatpush1.bf16.msra.mxu0 %v4274
        %4352 = vmatprep.subr.bf16.mxu0 0
        %4353 = vmatpush1.bf16.msra.mxu0 %v4275
        %4354 = vmatprep.subr.bf16.mxu0 0
        %4355 = vmatpush1.bf16.msra.mxu0 %v4276
        %4356 = vmatprep.subr.bf16.mxu0 0
        %4357 = vmatpush1.bf16.msra.mxu0 0
        %4358 = vmatprep.subr.bf16.mxu0 0
        %4359 = vmatpush1.bf16.msra.mxu0 0
        %4360 = vmatprep.subr.bf16.mxu0 0
        %4361 = vmatpush1.bf16.msra.mxu0 0
        %4362 = vmatprep.subr.bf16.mxu0 0
        %4363 = vmatpush1.bf16.msra.mxu0 0
        %4364 = vmatprep.subr.bf16.mxu0 0
        %4365 = vmatpush1.bf16.msra.mxu0 0
        %4366 = vmatprep.subr.bf16.mxu0 0
        %4367 = vmatpush1.bf16.msra.mxu0 0
        %4368 = vmatprep.subr.bf16.mxu0 0
        %4369 = vmatpush1.bf16.msra.mxu0 0
        %4370 = vmatprep.subr.bf16.mxu0 0
        %4371 = vmatpush1.bf16.msra.mxu0 0
        %4372 = vmatprep.subr.bf16.mxu0 0
        %4373 = vmatpush1.bf16.msra.mxu0 0
        %4374 = vmatprep.subr.bf16.mxu0 0
        %4375 = vmatpush1.bf16.msra.mxu0 0
        %4376 = vmatprep.mubr.bf16.mxu0 0
        %4377 = vmatmul.mubr.bf16.gmra.mrb[0].mxu0 %v4285
        %v4378 = vpop.f32.mrb[0].mxu0
        %v4379 = vadd.f32 0.0, %v4378
        %v4380 = vpop.f32.mrb[0].mxu0
        %v4381 = vpop.f32.mrb[0].mxu0
        %v4382 = vadd.f32 0.0, %v4381
        %v4383 = vpop.f32.mrb[0].mxu0
        %4384 = vmatprep.mubr.bf16.mxu0 0
        %4385 = vmatmul.mubr.bf16.gmra.mrb[0].mxu0 %v4288
        %v4386 = vpop.f32.mrb[0].mxu0
        %v4387 = vadd.f32 0.0, %v4386
        %v4388 = vpop.f32.mrb[0].mxu0
        %v4389 = vpop.f32.mrb[0].mxu0
        %v4390 = vadd.f32 0.0, %v4389
        %v4391 = vpop.f32.mrb[0].mxu0
        %4392 = vmatprep.mubr.bf16.mxu0 0
        %4393 = vmatmul.mubr.bf16.gmra.mrb[0].mxu0 %v4291
        %v4394 = vpop.f32.mrb[0].mxu0
        %v4395 = vadd.f32 0.0, %v4394
        %v4396 = vpop.f32.mrb[0].mxu0
        %v4397 = vpop.f32.mrb[0].mxu0
        %v4398 = vadd.f32 0.0, %v4397
        %v4399 = vpop.f32.mrb[0].mxu0
        %4400 = vmatprep.mubr.bf16.mxu0 0
        %4401 = vmatmul.mubr.bf16.gmra.mrb[0].mxu0 %v4294
        %v4402 = vpop.f32.mrb[0].mxu0
        %v4403 = vadd.f32 0.0, %v4402
        %v4404 = vpop.f32.mrb[0].mxu0
        %v4405 = vpop.f32.mrb[0].mxu0
        %v4406 = vadd.f32 0.0, %v4405
        %v4407 = vpop.f32.mrb[0].mxu0
        %4408 = vmatprep.mubr.bf16.mxu0 0
        %4409 = vmatmul.mubr.bf16.gmra.mrb[0].mxu0 %v4297
        %v4410 = vpop.f32.mrb[0].mxu0
        %v4411 = vadd.f32 0.0, %v4410
        %v4412 = vpop.f32.mrb[0].mxu0
        %v4413 = vpop.f32.mrb[0].mxu0
        %v4414 = vadd.f32 0.0, %v4413
        %v4415 = vpop.f32.mrb[0].mxu0
        %4416 = vmatprep.mubr.bf16.mxu0 0
        %4417 = vmatmul.mubr.bf16.gmra.mrb[0].mxu0 %v4300
        %v4418 = vpop.f32.mrb[0].mxu0
        %v4419 = vadd.f32 0.0, %v4418
        %v4420 = vpop.f32.mrb[0].mxu0
        %v4421 = vpop.f32.mrb[0].mxu0
        %v4422 = vadd.f32 0.0, %v4421
        %v4423 = vpop.f32.mrb[0].mxu0
        %4424 = vmatprep.mubr.bf16.mxu0 0
        %4425 = vmatmul.mubr.bf16.gmra.mrb[0].mxu0 %v4303
        %v4426 = vpop.f32.mrb[0].mxu0
        %v4427 = vadd.f32 0.0, %v4426
        %v4428 = vpop.f32.mrb[0].mxu0
        %v4429 = vpop.f32.mrb[0].mxu0
        %v4430 = vadd.f32 0.0, %v4429
        %v4431 = vpop.f32.mrb[0].mxu0
        %4432 = vmatprep.mubr.bf16.mxu0 0
        %4433 = vmatmul.mubr.bf16.gmra.mrb[0].mxu0 %v4306
        %v4434 = vpop.f32.mrb[0].mxu0
        %v4435 = vadd.f32 0.0, %v4434
        %v4436 = vpop.f32.mrb[0].mxu0
        %v4437 = vpop.f32.mrb[0].mxu0
        %v4438 = vadd.f32 0.0, %v4437
        %v4439 = vpop.f32.mrb[0].mxu0
        %4440 = vmatprep.mubr.bf16.mxu0 0
        %4441 = vmatmul.mubr.bf16.gmra.mrb[0].mxu0 %v4309
        %v4442 = vpop.f32.mrb[0].mxu0
        %v4443 = vadd.f32 0.0, %v4442
        %v4444 = vpop.f32.mrb[0].mxu0
        %v4445 = vpop.f32.mrb[0].mxu0
        %v4446 = vadd.f32 0.0, %v4445
        %v4447 = vpop.f32.mrb[0].mxu0
        %4448 = vmatprep.mubr.bf16.mxu0 0
        %4449 = vmatmul.mubr.bf16.gmra.mrb[0].mxu0 %v4312
        %v4450 = vpop.f32.mrb[0].mxu0
        %v4451 = vadd.f32 0.0, %v4450
        %v4452 = vpop.f32.mrb[0].mxu0
        %v4453 = vpop.f32.mrb[0].mxu0
        %v4454 = vadd.f32 0.0, %v4453
        %v4455 = vpop.f32.mrb[0].mxu0
        %4456 = vmatprep.mubr.bf16.mxu0 0
        %4457 = vmatmul.mubr.bf16.gmra.mrb[0].mxu0 %v4315
        %v4458 = vpop.f32.mrb[0].mxu0
        %v4459 = vadd.f32 0.0, %v4458
        %v4460 = vpop.f32.mrb[0].mxu0
        %v4461 = vpop.f32.mrb[0].mxu0
        %v4462 = vadd.f32 0.0, %v4461
        %v4463 = vpop.f32.mrb[0].mxu0
        %4464 = vmatprep.mubr.bf16.mxu0 0
        %4465 = vmatmul.mubr.bf16.gmra.mrb[0].mxu0 %v4318
        %v4466 = vpop.f32.mrb[0].mxu0
        %v4467 = vadd.f32 0.0, %v4466
        %v4468 = vpop.f32.mrb[0].mxu0
        %v4469 = vpop.f32.mrb[0].mxu0
        %v4470 = vadd.f32 0.0, %v4469
        %v4471 = vpop.f32.mrb[0].mxu0
        %4472 = vmatprep.mubr.bf16.mxu0 0
        %4473 = vmatmul.mubr.bf16.gmra.mrb[0].mxu0 %v4321
        %v4474 = vpop.f32.mrb[0].mxu0
        %v4475 = vadd.f32 0.0, %v4474
        %v4476 = vpop.f32.mrb[0].mxu0
        %v4477 = vpop.f32.mrb[0].mxu0
        %v4478 = vadd.f32 0.0, %v4477
        %v4479 = vpop.f32.mrb[0].mxu0
        %4480 = vmatprep.mubr.bf16.mxu0 0
        %4481 = vmatmul.mubr.bf16.gmra.mrb[0].mxu0 %v4324
        %v4482 = vpop.f32.mrb[0].mxu0
        %v4483 = vadd.f32 0.0, %v4482
        %v4484 = vpop.f32.mrb[0].mxu0
        %v4485 = vpop.f32.mrb[0].mxu0
        %v4486 = vadd.f32 0.0, %v4485
        %v4487 = vpop.f32.mrb[0].mxu0
        %4488 = vmatprep.mubr.bf16.mxu0 0
        %4489 = vmatmul.mubr.bf16.gmra.mrb[0].mxu0 %v4327
        %v4490 = vpop.f32.mrb[0].mxu0
        %v4491 = vadd.f32 0.0, %v4490
        %v4492 = vpop.f32.mrb[0].mxu0
        %v4493 = vpop.f32.mrb[0].mxu0
        %v4494 = vadd.f32 0.0, %v4493
        %v4495 = vpop.f32.mrb[0].mxu0
        %4496 = vmatprep.mubr.bf16.mxu0 0
        %4497 = vmatmul.mubr.bf16.gmra.mrb[0].mxu0 %v4330
        %v4498 = vpop.f32.mrb[0].mxu0
        %v4499 = vadd.f32 0.0, %v4498
        %v4500 = vpop.f32.mrb[0].mxu0
        %v4501 = vpop.f32.mrb[0].mxu0
        %v4502 = vadd.f32 0.0, %v4501
        %v4503 = vpop.f32.mrb[0].mxu0
        %4504 = vmatprep.mubr.bf16.mxu0 0
        %4505 = vmatmul.mubr.bf16.gmra.mrb[0].mxu0 %v4333
        %v4506 = vpop.f32.mrb[0].mxu0
        %v4507 = vadd.f32 0.0, %v4506
        %v4508 = vpop.f32.mrb[0].mxu0
        %v4509 = vpop.f32.mrb[0].mxu0
        %v4510 = vadd.f32 0.0, %v4509
        %v4511 = vpop.f32.mrb[0].mxu0
        %4512 = vmatprep.mubr.bf16.mxu0 0
        %4513 = vmatmul.mubr.bf16.gmra.mrb[0].mxu0 %v4336
        %v4514 = vpop.f32.mrb[0].mxu0
        %v4515 = vadd.f32 0.0, %v4514
        %v4516 = vpop.f32.mrb[0].mxu0
        %v4517 = vpop.f32.mrb[0].mxu0
        %v4518 = vadd.f32 0.0, %v4517
        %v4519 = vpop.f32.mrb[0].mxu0
        %4520 = vmatprep.mubr.bf16.mxu0 0
        %4521 = vmatmul.mubr.bf16.gmra.mrb[0].mxu0 %v4339
        %v4522 = vpop.f32.mrb[0].mxu0
        %v4523 = vadd.f32 0.0, %v4522
        %v4524 = vpop.f32.mrb[0].mxu0
        %v4525 = vpop.f32.mrb[0].mxu0
        %v4526 = vadd.f32 0.0, %v4525
        %v4527 = vpop.f32.mrb[0].mxu0
        %4528 = vmatprep.mubr.bf16.mxu0 0
        %4529 = vmatmul.mubr.bf16.gmra.mrb[0].mxu0 %v4342
        %v4530 = vpop.f32.mrb[0].mxu0
        %v4531 = vadd.f32 0.0, %v4530
        %v4532 = vpop.f32.mrb[0].mxu0
        %v4533 = vpop.f32.mrb[0].mxu0
        %v4534 = vadd.f32 0.0, %v4533
        %v4535 = vpop.f32.mrb[0].mxu0
        %4536 = vdwg.mxu0
        %vm4537 = vcmask 457728
        %4538 = vst.msk [vmem:[%s1126] sm:$0xff] %vm4537, %v4379
        %4539 = vst.msk [vmem:[%s1126 + $0x8] sm:$0xff] %vm4537, %v4382
        %4540 = vst.msk [vmem:[%s1126 + $0x10] sm:$0xff] %vm4537, %v4387
        %4541 = vst.msk [vmem:[%s1126 + $0x18] sm:$0xff] %vm4537, %v4390
        %4542 = vst.msk [vmem:[%s1126 + $0x20] sm:$0xff] %vm4537, %v4395
        %4543 = vst.msk [vmem:[%s1126 + $0x28] sm:$0xff] %vm4537, %v4398
        %4544 = vst.msk [vmem:[%s1126 + $0x30] sm:$0xff] %vm4537, %v4403
        %4545 = vst.msk [vmem:[%s1126 + $0x38] sm:$0xff] %vm4537, %v4406
        %4546 = vst.msk [vmem:[%s1126 + $0x40] sm:$0xff] %vm4537, %v4411
        %4547 = vst.msk [vmem:[%s1126 + $0x48] sm:$0xff] %vm4537, %v4414
        %4548 = vst.msk [vmem:[%s1126 + $0x50] sm:$0xff] %vm4537, %v4419
        %4549 = vst.msk [vmem:[%s1126 + $0x58] sm:$0xff] %vm4537, %v4422
        %4550 = vst.msk [vmem:[%s1126 + $0x60] sm:$0xff] %vm4537, %v4427
        %4551 = vst.msk [vmem:[%s1126 + $0x68] sm:$0xff] %vm4537, %v4430
        %4552 = vst.msk [vmem:[%s1126 + $0x70] sm:$0xff] %vm4537, %v4435
        %4553 = vst.msk [vmem:[%s1126 + $0x78] sm:$0xff] %vm4537, %v4438
        %4554 = vst.msk [vmem:[%s1126 + $0x80] sm:$0xff] %vm4537, %v4443
        %4555 = vst.msk [vmem:[%s1126 + $0x88] sm:$0xff] %vm4537, %v4446
        %4556 = vst.msk [vmem:[%s1126 + $0x90] sm:$0xff] %vm4537, %v4451
        %4557 = vst.msk [vmem:[%s1126 + $0x98] sm:$0xff] %vm4537, %v4454
        %4558 = vst.msk [vmem:[%s1126 + $0xa0] sm:$0xff] %vm4537, %v4459
        %4559 = vst.msk [vmem:[%s1126 + $0xa8] sm:$0xff] %vm4537, %v4462
        %4560 = vst.msk [vmem:[%s1126 + $0xb0] sm:$0xff] %vm4537, %v4467
        %4561 = vst.msk [vmem:[%s1126 + $0xb8] sm:$0xff] %vm4537, %v4470
        %4562 = vst.msk [vmem:[%s1126 + $0xc0] sm:$0xff] %vm4537, %v4475
        %4563 = vst.msk [vmem:[%s1126 + $0xc8] sm:$0xff] %vm4537, %v4478
        %4564 = vst.msk [vmem:[%s1126 + $0xd0] sm:$0xff] %vm4537, %v4483
        %4565 = vst.msk [vmem:[%s1126 + $0xd8] sm:$0xff] %vm4537, %v4486
        %4566 = vst.msk [vmem:[%s1126 + $0xe0] sm:$0xff] %vm4537, %v4491
        %4567 = vst.msk [vmem:[%s1126 + $0xe8] sm:$0xff] %vm4537, %v4494
        %4568 = vst.msk [vmem:[%s1126 + $0xf0] sm:$0xff] %vm4537, %v4499
        %4569 = vst.msk [vmem:[%s1126 + $0xf8] sm:$0xff] %vm4537, %v4502
        %4570 = vst.msk [vmem:[%s1126 + $0x100] sm:$0xff] %vm4537, %v4507
        %4571 = vst.msk [vmem:[%s1126 + $0x108] sm:$0xff] %vm4537, %v4510
        %4572 = vst.msk [vmem:[%s1126 + $0x110] sm:$0xff] %vm4537, %v4515
        %4573 = vst.msk [vmem:[%s1126 + $0x118] sm:$0xff] %vm4537, %v4518
        %4574 = vst.msk [vmem:[%s1126 + $0x120] sm:$0xff] %vm4537, %v4523
        %4575 = vst.msk [vmem:[%s1126 + $0x128] sm:$0xff] %vm4537, %v4526
        %4576 = vst.msk [vmem:[%s1126 + $0x130] sm:$0xff] %vm4537, %v4531
        %4577 = vst.msk [vmem:[%s1126 + $0x138] sm:$0xff] %vm4537, %v4534
        %s4578 = smul.u32 40, %s15
        %p4579 = scmp.lt.s32.totalorder %s4578, 79
        %s4580 = scalar_select %p4579, %s4578, 79
        %s4581 = smul.addr %s4580, 8
        %s4582 = scalar_lea.vmem %s4, %s4581
        // Predicated region
        $region75: #{fused_forward.1} parent=69 // pred_check
          %p4583 = pneg %p122
        $region76: #{fused_forward.1} parent=69 // pred_check_branch
          %4585 = sbr.rel (%p4583) target = $region78
        $region77: #{fused_forward.1} parent=69 // pred_region
          %s4586 = smul.u32 40, %s15
        $region78: #{fused_forward.1} parent=69 // pred_fallthru
          _
      $region70: #{fused_forward.1} parent=5 // pred_fallthru
        _
      %p4587 = scmp.le.s32.totalorder 2, %s10
      // Predicated region
      $region79: #{fused_forward.1} parent=5 // pred_check
        %p4588 = pneg %p4587
      $region80: #{fused_forward.1} parent=5 // pred_check_branch
        %4590 = sbr.rel (%p4588) target = $region82
      $region81: #{fused_forward.1} parent=5 // pred_region
        %s4591 = ssub.s32 %s10, 2
        // Predicated region
        $region83: #{fused_forward.1} parent=81 // pred_check
          %p4592 = pneg %p128
        $region84: #{fused_forward.1} parent=81 // pred_check_branch
          %4594 = sbr.rel (%p4592) target = $region86
        $region85: #{fused_forward.1} parent=81 // pred_region
          %s4595 = smul.u32 40, %s16
          %p4596 = scmp.lt.s32.totalorder %s4595, 79
          %s4597 = scalar_select %p4596, %s4595, 79
          %s4598 = smul.addr %s4597, 8
          %s4599 = scalar_lea.vmem %s4, %s4598
        $region86: #{fused_forward.1} parent=81 // pred_fallthru
          _
      $region82: #{fused_forward.1} parent=5 // pred_fallthru
        _
    $region6: #{fused_forward.1} parent=1 // loop_footer
      %s14 = sadd.s32 1, %s10
    $region7: #{fused_forward.1} parent=1 // loop_footer_branch
      %9 = sbr.rel target = $region3
    $region8: #{fused_forward.1} parent=1 // loop_exit
      _

</llo_original>
